<compile_context>
chip_gen: v7x
topology: tpu7x:2x2x1
jax: 0.10.0
libtpu: 0.0.40
codegen_flags: <defaults>
</compile_context>

<pallas_src>
import functools

import jax
import jax.numpy as jnp
from jax import lax
from jax.experimental import pallas as pl
from jax.experimental.pallas import tpu as pltpu

EPS = 1e-5
BF16 = jnp.bfloat16


# --------------------------------------------------------------------------------------
# in-kernel helpers
# --------------------------------------------------------------------------------------
def _store_padded(pad_ref, pre16):
    """Write a (H, W, C) bf16 pre-activation into the interior of a (H+2, W+2, C) VMEM
    scratch and zero its 1-wide halo strips (plain vst; no concat halo, no lax.pad)."""
    hh, ww, cc = pre16.shape
    zrow = jnp.zeros((1, ww + 2, cc), pad_ref.dtype)
    zcol = jnp.zeros((hh + 2, 1, cc), pad_ref.dtype)
    pad_ref[0:1, :, :] = zrow
    pad_ref[hh + 1:hh + 2, :, :] = zrow
    pad_ref[:, 0:1, :] = zcol
    pad_ref[:, ww + 1:ww + 2, :] = zcol
    pad_ref[1:hh + 1, 1:ww + 1, :] = pre16


def _conv3x3_s1_padded(pad_ref, w_ref, hh, ww, cin, cout):
    """3x3 / stride 1 / pad 1 conv read from the zero-haloed scratch.

    Per-kh accumulation: 3 matmuls with K = 3*Cin (instead of a single 9*Cin lane-concat
    slab) -> ~3x lower peak VMEM and far less cross-lane relayout.  bf16 operands,
    f32 accumulation on the MXU.
    """
    acc = jnp.zeros((hh * ww, cout), jnp.float32)
    for kh in range(3):
        taps = [pad_ref[kh:kh + hh, kw:kw + ww, :] for kw in range(3)]
        slab = jnp.concatenate(taps, axis=-1).reshape(hh * ww, 3 * cin)
        acc = acc + jnp.dot(slab, w_ref[kh], preferred_element_type=jnp.float32)
    return acc


# --------------------------------------------------------------------------------------
# kernel 1: BN1 batch statistics (grid reduction -> single (2, C) accumulator)
# --------------------------------------------------------------------------------------
def _bn_stats_kernel(x_ref, st_ref):
    @pl.when(pl.program_id(0) == 0)
    def _():
        st_ref[...] = jnp.zeros(st_ref.shape, st_ref.dtype)

    x = x_ref[...].astype(jnp.float32)                            # (H, W, C)
    hh, ww, cc = x.shape
    xf = x.reshape(hh * ww, cc)
    s = jnp.sum(xf, axis=0, keepdims=True)
    sq = jnp.sum(xf * xf, axis=0, keepdims=True)
    st_ref[...] += jnp.concatenate([s, sq], axis=0)               # rows: [sum, sumsq]


def _bn_batch_stats(x):
    n, h, w, c = x.shape
    return pl.pallas_call(
        _bn_stats_kernel,
        out_shape=jax.ShapeDtypeStruct((2, c), jnp.float32),
        grid=(n,),
        in_specs=[pl.BlockSpec((None, h, w, c), lambda i: (i, 0, 0, 0))],
        out_specs=pl.BlockSpec((2, c), lambda i: (0, 0)),
        compiler_params=pltpu.CompilerParams(dimension_semantics=("arbitrary",)),
    )(x)


# --------------------------------------------------------------------------------------
# kernel 2 (stride 1): BN1+ReLU -> conv1 (3x3, s=1) [+ fused 1x1 shortcut] + BN2 stats
# --------------------------------------------------------------------------------------
def _block_a_s1_kernel(x_ref, scale_ref, shift_ref, w_ref, *rest, has_sc):
    if has_sc:
        wsc_ref, h_ref, sc_ref, st_ref, pad_ref = rest
    else:
        h_ref, st_ref, pad_ref = rest
        wsc_ref = sc_ref = None

    hh, ww, cin = x_ref.shape
    cout = w_ref.shape[-1]

    scale = scale_ref[...].reshape(1, 1, cin)
    shift = shift_ref[...].reshape(1, 1, cin)
    pre = jnp.maximum(x_ref[...].astype(jnp.float32) * scale + shift, 0.0)
    pre16 = pre.astype(BF16)

    _store_padded(pad_ref, pre16)
    acc = _conv3x3_s1_padded(pad_ref, w_ref, hh, ww, cin, cout)    # (H*W, Cout) f32
    h_ref[...] = acc.reshape(hh, ww, cout).astype(h_ref.dtype)

    if has_sc:  # 1x1 shortcut conv re-uses the pre-activation already in VMEM
        sc = jnp.dot(pre16.reshape(hh * ww, cin), wsc_ref[...],
                     preferred_element_type=jnp.float32)
        sc_ref[...] = sc.reshape(hh, ww, cout).astype(sc_ref.dtype)

    # fused BN2 statistics of the (f32) conv1 output; combined across N in the wrapper
    st_ref[0:1, :] = jnp.sum(acc, axis=0, keepdims=True)
    st_ref[1:2, :] = jnp.sum(acc * acc, axis=0, keepdims=True)


def _block_a_s1(x, scale1, shift1, w1, wsc):
    n, h, w, cin = x.shape
    cout = w1.shape[-1]
    has_sc = wsc is not None

    img_in = pl.BlockSpec((None, h, w, cin), lambda i: (i, 0, 0, 0))
    vec = pl.BlockSpec((1, cin), lambda i: (0, 0))
    w_spec = pl.BlockSpec(w1.shape, lambda i: (0, 0, 0))
    img_out = pl.BlockSpec((None, h, w, cout), lambda i: (i, 0, 0, 0))
    st_spec = pl.BlockSpec((None, 2, cout), lambda i: (i, 0, 0))

    in_specs = [img_in, vec, vec, w_spec]
    args = [x, scale1.reshape(1, cin), shift1.reshape(1, cin), w1]
    out_shape = [jax.ShapeDtypeStruct((n, h, w, cout), BF16)]
    out_specs = [img_out]
    if has_sc:
        in_specs.append(pl.BlockSpec(wsc.shape, lambda i: (0, 0)))
        args.append(wsc)
        out_shape.append(jax.ShapeDtypeStruct((n, h, w, cout), BF16))
        out_specs.append(img_out)
    out_shape.append(jax.ShapeDtypeStruct((n, 2, cout), jnp.float32))
    out_specs.append(st_spec)

    res = pl.pallas_call(
        functools.partial(_block_a_s1_kernel, has_sc=has_sc),
        out_shape=tuple(out_shape),
        grid=(n,),
        in_specs=in_specs,
        out_specs=tuple(out_specs),
        scratch_shapes=[pltpu.VMEM((h + 2, w + 2, cin), BF16)],
        compiler_params=pltpu.CompilerParams(dimension_semantics=("parallel",)),
    )(*args)
    if has_sc:
        h_out, sc, st = res
        return h_out, sc, st
    h_out, st = res
    return h_out, None, st


# --------------------------------------------------------------------------------------
# kernel 2 (stride 2): BN1+ReLU -> conv1 (3x3, s=2) + fused 1x1/s2 shortcut + BN2 stats
#   Input arrives as the FREE wrapper reshape (N, Ho, 2, Wo, 2*Cin):
#     x_ref[i, a, j, b*Cin + c] == x[2*i + a, 2*j + b, c]
#   so every strided tap becomes a static contiguous slice (no strided loads, no HBM
#   phase split).
# --------------------------------------------------------------------------------------
def _block_a_s2_kernel(x_ref, scale_ref, shift_ref, w_ref, wsc_ref,
                       h_ref, sc_ref, st_ref, even_ref, odd_ref):
    ho, _, wo, c2 = x_ref.shape
    cin = c2 // 2
    cout = w_ref.shape[-1]

    scale = scale_ref[...].reshape(1, 1, 1, c2)     # channel params tiled x2 in wrapper
    shift = shift_ref[...].reshape(1, 1, 1, c2)
    pre = jnp.maximum(x_ref[...].astype(jnp.float32) * scale + shift, 0.0)
    pre16 = pre.astype(BF16)                                        # (Ho, 2, Wo, 2Cin)

    # de-interleave rows into two zero-haloed scratches:
    #   even_ref[p, q, b*Cin+c] = preact[2*(p-1),   2*(q-1)+b, c]
    #   odd_ref [p, q, b*Cin+c] = preact[2*(p-1)+1, 2*(q-1)+b, c]     (p=0 / q=0 -> 0)
    zrow = jnp.zeros((1, wo + 1, c2), BF16)
    zcol = jnp.zeros((ho + 1, 1, c2), BF16)
    for dst, slot in ((even_ref, 0), (odd_ref, 1)):
        dst[0:1, :, :] = zrow
        dst[:, 0:1, :] = zcol
        dst[1:ho + 1, 1:wo + 1, :] = pre16[:, slot, :, :]

    # conv1 tap (kh, kw) needs preact[2i+kh-1, 2j+kw-1]:
    #   kh: 0 -> odd rows  slice [0:Ho],  1 -> even rows slice [1:Ho+1], 2 -> odd [1:Ho+1]
    #   kw: 0 -> pair j   odd  slot (lanes Cin:2Cin)
    #       1 -> pair j+1 even slot (lanes 0:Cin)
    #       2 -> pair j+1 odd  slot (lanes Cin:2Cin)
    row_sel = ((odd_ref, 0), (even_ref, 1), (odd_ref, 1))
    acc = jnp.zeros((ho * wo, cout), jnp.float32)
    for kh in range(3):
        src, p0 = row_sel[kh]
        rows = src[p0:p0 + ho, :, :]                                # (Ho, Wo+1, 2Cin)
        taps = [rows[:, 0:wo, cin:2 * cin],
                rows[:, 1:wo + 1, 0:cin],
                rows[:, 1:wo + 1, cin:2 * cin]]
        slab = jnp.concatenate(taps, axis=-1).reshape(ho * wo, 3 * cin)
        acc = acc + jnp.dot(slab, w_ref[kh], preferred_element_type=jnp.float32)
    h_ref[...] = acc.reshape(ho, wo, cout).astype(h_ref.dtype)

    # 1x1 stride-2 shortcut samples preact[2i, 2j]: even row slot, even column slot.
    sc_in = pre16[:, 0, :, 0:cin].reshape(ho * wo, cin)
    sc = jnp.dot(sc_in, wsc_ref[...], preferred_element_type=jnp.float32)
    sc_ref[...] = sc.reshape(ho, wo, cout).astype(sc_ref.dtype)

    st_ref[0:1, :] = jnp.sum(acc, axis=0, keepdims=True)
    st_ref[1:2, :] = jnp.sum(acc * acc, axis=0, keepdims=True)


def _block_a_s2(xv, scale1, shift1, w1, wsc):
    n, ho, _, wo, c2 = xv.shape
    cout = w1.shape[-1]
    img_in = pl.BlockSpec((None, ho, 2, wo, c2), lambda i: (i, 0, 0, 0, 0))
    vec = pl.BlockSpec((1, c2), lambda i: (0, 0))
    w_spec = pl.BlockSpec(w1.shape, lambda i: (0, 0, 0))
    wsc_spec = pl.BlockSpec(wsc.shape, lambda i: (0, 0))
    img_out = pl.BlockSpec((None, ho, wo, cout), lambda i: (i, 0, 0, 0))
    st_spec = pl.BlockSpec((None, 2, cout), lambda i: (i, 0, 0))
    return pl.pallas_call(
        _block_a_s2_kernel,
        out_shape=(jax.ShapeDtypeStruct((n, ho, wo, cout), BF16),
                   jax.ShapeDtypeStruct((n, ho, wo, cout), BF16),
                   jax.ShapeDtypeStruct((n, 2, cout), jnp.float32)),
        grid=(n,),
        in_specs=[img_in, vec, vec, w_spec, wsc_spec],
        out_specs=(img_out, img_out, st_spec),
        scratch_shapes=[pltpu.VMEM((ho + 1, wo + 1, c2), BF16),
                        pltpu.VMEM((ho + 1, wo + 1, c2), BF16)],
        compiler_params=pltpu.CompilerParams(dimension_semantics=("parallel",)),
    )(xv, scale1.reshape(1, c2), shift1.reshape(1, c2), w1, wsc)


# --------------------------------------------------------------------------------------
# kernel 3: BN2+ReLU -> conv2 (3x3, s=1) + residual add
# --------------------------------------------------------------------------------------
def _block_b_kernel(h_ref, scale_ref, shift_ref, w_ref, res_ref, o_ref, pad_ref):
    hh, ww, cmid = h_ref.shape
    cout = w_ref.shape[-1]
    scale = scale_ref[...].reshape(1, 1, cmid)
    shift = shift_ref[...].reshape(1, 1, cmid)
    pre = jnp.maximum(h_ref[...].astype(jnp.float32) * scale + shift, 0.0)

    _store_padded(pad_ref, pre.astype(BF16))
    acc = _conv3x3_s1_padded(pad_ref, w_ref, hh, ww, cmid, cout)    # (H*W, Cout) f32
    out = acc.reshape(hh, ww, cout) + res_ref[...].astype(jnp.float32)
    o_ref[...] = out.astype(o_ref.dtype)


def _block_b(h_out, scale2, shift2, w2, residual):
    n, ho, wo, cmid = h_out.shape
    cout = w2.shape[-1]
    img_in = pl.BlockSpec((None, ho, wo, cmid), lambda i: (i, 0, 0, 0))
    vec = pl.BlockSpec((1, cmid), lambda i: (0, 0))
    w_spec = pl.BlockSpec(w2.shape, lambda i: (0, 0, 0))
    res_spec = pl.BlockSpec((None, ho, wo, cout), lambda i: (i, 0, 0, 0))
    out_spec = pl.BlockSpec((None, ho, wo, cout), lambda i: (i, 0, 0, 0))
    return pl.pallas_call(
        _block_b_kernel,
        out_shape=jax.ShapeDtypeStruct((n, ho, wo, cout), jnp.float32),
        grid=(n,),
        in_specs=[img_in, vec, vec, w_spec, res_spec],
        out_specs=out_spec,
        scratch_shapes=[pltpu.VMEM((ho + 2, wo + 2, cmid), BF16)],
        compiler_params=pltpu.CompilerParams(dimension_semantics=("parallel",)),
    )(h_out, scale2.reshape(1, cmid), shift2.reshape(1, cmid), w2, residual)


# --------------------------------------------------------------------------------------
# PreActBlock forward (NCHW in / NCHW out)
# --------------------------------------------------------------------------------------
def preact_block_forward(x_nchw, params, stride):
    g1, b1, w1_oihw, g2, b2, w2_oihw, wsc_oihw = params
    x = jnp.transpose(x_nchw, (0, 2, 3, 1)).astype(jnp.float32)     # NCHW -> NHWC
    n, h, w, cin = x.shape
    cout = w1_oihw.shape[0]
    has_sc = wsc_oihw is not None

    # ---- BN1 batch statistics (biased variance, PyTorch training-mode forward) ----
    tot1 = _bn_batch_stats(x)                                       # (2, Cin)
    cnt1 = n * h * w
    mean1 = tot1[0] / cnt1
    var1 = tot1[1] / cnt1 - mean1 * mean1
    scale1 = g1 * lax.rsqrt(var1 + EPS)
    shift1 = b1 - mean1 * scale1

    # ---- weights: OIHW -> per-kh im2col layout (3, 3*Cin, Cout), bf16 MXU operands ----
    w1 = jnp.transpose(w1_oihw, (2, 3, 1, 0)).reshape(3, 3 * cin, cout).astype(BF16)
    w2 = jnp.transpose(w2_oihw, (2, 3, 1, 0)).reshape(3, 3 * cout, cout).astype(BF16)
    wsc = (jnp.transpose(wsc_oihw, (2, 3, 1, 0))[0, 0].astype(BF16)
           if has_sc else None)                                      # (Cin, Cout)

    if stride == 1:
        h_out, sc, hst = _block_a_s1(x, scale1, shift1, w1, wsc)
        residual = sc if has_sc else x                               # identity uses raw x
        ho, wo = h, w
    elif stride == 2:
        assert has_sc, "stride-2 PreActBlock always has a conv shortcut"
        if (h % 2) or (w % 2):
            raise NotImplementedError("stride-2 path assumes even H, W")
        ho, wo = h // 2, w // 2
        # FREE metadata reshape (row-major order preserved): no HBM phase split.
        xv = x.reshape(n, ho, 2, wo, 2 * cin)
        h_out, sc, hst = _block_a_s2(xv, jnp.tile(scale1, 2), jnp.tile(shift1, 2),
                                     w1, wsc)
        residual = sc
    else:
        raise NotImplementedError("only stride 1 or 2 supported")

    # ---- BN2 from the statistics fused into kernel A (no extra HBM pass over h) ----
    tot2 = jnp.sum(hst, axis=0)                                      # (2, Cout)
    cnt2 = n * ho * wo
    mean2 = tot2[0] / cnt2
    var2 = tot2[1] / cnt2 - mean2 * mean2
    scale2 = g2 * lax.rsqrt(var2 + EPS)
    shift2 = b2 - mean2 * scale2

    out = _block_b(h_out, scale2, shift2, w2, residual)
    return jnp.transpose(out, (0, 3, 1, 2))                          # NHWC -> NCHW


# --------------------------------------------------------------------------------------
# pure-JAX reference (NCHW, f32 HIGHEST precision, training-mode BN)
# --------------------------------------------------------------------------------------
def preact_block_reference(x, params, stride):
    g1, b1, w1, g2, b2, w2, wsc = params

    def bnrelu(t, g, b):
        m = jnp.mean(t, axis=(0, 2, 3), keepdims=True)
        v = jnp.mean((t - m) ** 2, axis=(0, 2, 3), keepdims=True)
        y = (t - m) * lax.rsqrt(v + EPS) * g.reshape(1, -1, 1, 1) + b.reshape(1, -1, 1, 1)
        return jnp.maximum(y, 0.0)

    def conv(t, w, s, p):
        return lax.conv_general_dilated(t, w, (s, s), ((p, p), (p, p)),
                                        dimension_numbers=("NCHW", "OIHW", "NCHW"),
                                        precision=lax.Precision.HIGHEST)

    o = bnrelu(x, g1, b1)
    sc = conv(o, wsc, stride, 0) if wsc is not None else x
    h = conv(o, w1, stride, 1)
    h = bnrelu(h, g2, b2)
    h = conv(h, w2, 1, 1)
    return h + sc


if __name__ == "__main__":
    def run_case(key, n, cin, cout, hw, stride):
        kx, k1, k2, k3, k4, k5, k6, k7 = jax.random.split(key, 8)
        x = jax.random.normal(kx, (n, cin, hw, hw), jnp.float32)
        w1 = 0.1 * jax.random.normal(k1, (cout, cin, 3, 3), jnp.float32)   # OIHW
        w2 = 0.1 * jax.random.normal(k2, (cout, cout, 3, 3), jnp.float32)
        needs_sc = (stride != 1) or (cin != cout)
        wsc = (0.1 * jax.random.normal(k3, (cout, cin, 1, 1), jnp.float32)
               if needs_sc else None)
        g1 = 1.0 + 0.1 * jax.random.normal(k4, (cin,), jnp.float32)
        b1 = 0.1 * jax.random.normal(k5, (cin,), jnp.float32)
        g2 = 1.0 + 0.1 * jax.random.normal(k6, (cout,), jnp.float32)
        b2 = 0.1 * jax.random.normal(k7, (cout,), jnp.float32)
        params = (g1, b1, w1, g2, b2, w2, wsc)

        fwd = jax.jit(functools.partial(preact_block_forward, stride=stride))
        out = jax.block_until_ready(fwd(x, params))
        ref = jax.block_until_ready(preact_block_reference(x, params, stride))
        assert out.shape == ref.shape == (n, cout, hw // stride, hw // stride), \
            (out.shape, ref.shape)
        err = float(jnp.max(jnp.abs(out - ref)))
        # 3e-2 tolerance: bf16 MXU operands + bf16 inter-kernel intermediates vs. the
        # Precision.HIGHEST f32 reference land at ~1e-2 absolute for these magnitudes.
        assert err < 3e-2, f"stride={stride} cin={cin} cout={cout}: max abs err {err}"

    key = jax.random.PRNGKey(0)
    k_a, k_b, k_c = jax.random.split(key, 3)
    run_case(k_a, 2, 4, 8, 16, 2)   # stride-2 down-sampling block (conv shortcut)
    run_case(k_b, 2, 8, 8, 16, 1)   # stride-1 identity-shortcut block
    run_case(k_c, 2, 4, 8, 16, 1)   # stride-1 channel-expanding block (conv shortcut)
    print("KERNEL_OK")
</pallas_src>

<mosaic_0001>
module attributes {stable_mosaic.version = 11 : i64} {
  func.func @_bn_stats_kernel(%arg0: i32, %arg1: memref<1x16x16x4xf32, #tpu.memory_space<vmem>>, %arg2: memref<2x4xf32, #tpu.memory_space<vmem>>) attributes {dimension_semantics = [#tpu.dimension_semantics<arbitrary>], iteration_bounds = array<i64: 2>, scalar_prefetch = 0 : i64, scratch_operands = 0 : i64, tpu.core_type = #tpu.core_type<tc>, window_params = [{transform_indices = @transform_0, window_bounds = array<i64: 1, 16, 16, 4>}, {pipeline_mode = #tpu.pipeline_mode<synchronous>, transform_indices = @transform_1, window_bounds = array<i64: 2, 4>}]} {
    %c0_i32 = arith.constant 0 : i32
    %0 = arith.cmpi eq, %arg0, %c0_i32 : i32
    %1 = arith.extui %0 : i1 to i32
    %c0_i32_0 = arith.constant 0 : i32
    %2 = arith.cmpi ne, %1, %c0_i32_0 : i32
    scf.if %2 {
      %cst_9 = arith.constant 0.000000e+00 : f32
      %15 = vector.broadcast %cst_9 : f32 to vector<2x4xf32>
      %c0_10 = arith.constant 0 : index
      %c0_11 = arith.constant 0 : index
      %16 = vector.load %arg2[%c0_10, %c0_11] : memref<2x4xf32, #tpu.memory_space<vmem>>, vector<2x4xf32>
      tpu.vector_store %arg2[%c0_10, %c0_11], %15 {strides = array<i32>} : memref<2x4xf32, #tpu.memory_space<vmem>>, vector<2x4xf32>,
    } else {
    }
    %c0 = arith.constant 0 : index
    %c0_1 = arith.constant 0 : index
    %c0_2 = arith.constant 0 : index
    %c0_3 = arith.constant 0 : index
    %3 = vector.load %arg1[%c0, %c0_1, %c0_2, %c0_3] : memref<1x16x16x4xf32, #tpu.memory_space<vmem>>, vector<1x16x16x4xf32>
    %4 = vector.shape_cast %3 : vector<1x16x16x4xf32> to vector<16x16x4xf32>
    %5 = vector.shape_cast %4 : vector<16x16x4xf32> to vector<256x4xf32>
    %cst = arith.constant dense<0.000000e+00> : vector<4xf32>
    %6 = vector.multi_reduction <add>, %5, %cst [0] : vector<256x4xf32> to vector<4xf32>
    %7 = vector.shape_cast %6 : vector<4xf32> to vector<1x4xf32>
    %8 = arith.mulf %5, %5 : vector<256x4xf32>
    %cst_4 = arith.constant dense<0.000000e+00> : vector<4xf32>
    %9 = vector.multi_reduction <add>, %8, %cst_4 [0] : vector<256x4xf32> to vector<4xf32>
    %10 = vector.shape_cast %9 : vector<4xf32> to vector<1x4xf32>
    %c0_5 = arith.constant 0 : index
    %c0_6 = arith.constant 0 : index
    %11 = vector.load %arg2[%c0_5, %c0_6] : memref<2x4xf32, #tpu.memory_space<vmem>>, vector<2x4xf32>
    %12 = tpu.concatenate %7, %10 in 0 : vector<1x4xf32>, vector<1x4xf32> -> vector<2x4xf32>
    %13 = arith.addf %11, %12 : vector<2x4xf32>
    %c0_7 = arith.constant 0 : index
    %c0_8 = arith.constant 0 : index
    %14 = vector.load %arg2[%c0_7, %c0_8] : memref<2x4xf32, #tpu.memory_space<vmem>>, vector<2x4xf32>
    tpu.vector_store %arg2[%c0_7, %c0_8], %13 {strides = array<i32>} : memref<2x4xf32, #tpu.memory_space<vmem>>, vector<2x4xf32>,
    return
  }
  func.func @transform_0(%arg0: i32) -> (i32, i32, i32, i32) {
    %c0_i32 = arith.constant 0 : i32
    %c0_i32_0 = arith.constant 0 : i32
    %c0_i32_1 = arith.constant 0 : i32
    %c0_i32_2 = arith.constant 0 : i32
    return %arg0, %c0_i32, %c0_i32_0, %c0_i32_1 : i32, i32, i32, i32
  }
  func.func @transform_1(%arg0: i32) -> (i32, i32) {
    %c0_i32 = arith.constant 0 : i32
    %c0_i32_0 = arith.constant 0 : i32
    %c0_i32_1 = arith.constant 0 : i32
    return %c0_i32, %c0_i32_0 : i32, i32
  }
}

module attributes {stable_mosaic.version = 11 : i64} {
  func.func @_block_a_s2_kernel(%arg0: i32, %arg1: memref<1x8x2x8x8xf32, #tpu.memory_space<vmem>>, %arg2: memref<1x8xf32, #tpu.memory_space<vmem>>, %arg3: memref<1x8xf32, #tpu.memory_space<vmem>>, %arg4: memref<3x12x8xbf16, #tpu.memory_space<vmem>>, %arg5: memref<4x8xbf16, #tpu.memory_space<vmem>>, %arg6: memref<1x8x8x8xbf16, #tpu.memory_space<vmem>>, %arg7: memref<1x8x8x8xbf16, #tpu.memory_space<vmem>>, %arg8: memref<1x2x8xf32, #tpu.memory_space<vmem>>, %arg9: memref<9x9x8xbf16, #tpu.memory_space<vmem>>, %arg10: memref<9x9x8xbf16, #tpu.memory_space<vmem>>) attributes {dimension_semantics = [#tpu.dimension_semantics<parallel>], iteration_bounds = array<i64: 2>, scalar_prefetch = 0 : i64, scratch_operands = 2 : i64, tpu.core_type = #tpu.core_type<tc>, window_params = [{transform_indices = @transform_0, window_bounds = array<i64: 1, 8, 2, 8, 8>}, {pipeline_mode = #tpu.pipeline_mode<synchronous>, transform_indices = @transform_1, window_bounds = array<i64: 1, 8>}, {pipeline_mode = #tpu.pipeline_mode<synchronous>, transform_indices = @transform_2, window_bounds = array<i64: 1, 8>}, {pipeline_mode = #tpu.pipeline_mode<synchronous>, transform_indices = @transform_3, window_bounds = array<i64: 3, 12, 8>}, {pipeline_mode = #tpu.pipeline_mode<synchronous>, transform_indices = @transform_4, window_bounds = array<i64: 4, 8>}, {transform_indices = @transform_5, window_bounds = array<i64: 1, 8, 8, 8>}, {transform_indices = @transform_6, window_bounds = array<i64: 1, 8, 8, 8>}, {transform_indices = @transform_7, window_bounds = array<i64: 1, 2, 8>}]} {
    %c0 = arith.constant 0 : index
    %c0_0 = arith.constant 0 : index
    %0 = vector.load %arg2[%c0, %c0_0] : memref<1x8xf32, #tpu.memory_space<vmem>>, vector<1x8xf32>
    %1 = vector.shape_cast %0 : vector<1x8xf32> to vector<1x1x1x8xf32>
    %c0_1 = arith.constant 0 : index
    %c0_2 = arith.constant 0 : index
    %2 = vector.load %arg3[%c0_1, %c0_2] : memref<1x8xf32, #tpu.memory_space<vmem>>, vector<1x8xf32>
    %3 = vector.shape_cast %2 : vector<1x8xf32> to vector<1x1x1x8xf32>
    %c0_3 = arith.constant 0 : index
    %c0_4 = arith.constant 0 : index
    %c0_5 = arith.constant 0 : index
    %c0_6 = arith.constant 0 : index
    %c0_7 = arith.constant 0 : index
    %4 = vector.load %arg1[%c0_3, %c0_4, %c0_5, %c0_6, %c0_7] : memref<1x8x2x8x8xf32, #tpu.memory_space<vmem>>, vector<1x8x2x8x8xf32>
    %5 = vector.shape_cast %4 : vector<1x8x2x8x8xf32> to vector<8x2x8x8xf32>
    %6 = vector.broadcast %1 : vector<1x1x1x8xf32> to vector<8x2x8x8xf32>
    %7 = arith.mulf %5, %6 : vector<8x2x8x8xf32>
    %8 = vector.broadcast %3 : vector<1x1x1x8xf32> to vector<8x2x8x8xf32>
    %9 = arith.addf %7, %8 : vector<8x2x8x8xf32>
    %cst = arith.constant 0.000000e+00 : f32
    %10 = vector.broadcast %cst : f32 to vector<8x2x8x8xf32>
    %11 = arith.maximumf %9, %10 : vector<8x2x8x8xf32>
    %12 = arith.truncf %11 : vector<8x2x8x8xf32> to vector<8x2x8x8xbf16>
    %cst_8 = arith.constant 0.000000e+00 : bf16
    %13 = vector.broadcast %cst_8 : bf16 to vector<1x9x8xbf16>
    %cst_9 = arith.constant 0.000000e+00 : bf16
    %14 = vector.broadcast %cst_9 : bf16 to vector<9x1x8xbf16>
    %c0_10 = arith.constant 0 : index
    %c0_11 = arith.constant 0 : index
    %c0_12 = arith.constant 0 : index
    %15 = vector.load %arg9[%c0_10, %c0_11, %c0_12] : memref<9x9x8xbf16, #tpu.memory_space<vmem>>, vector<1x9x8xbf16>
    tpu.vector_store %arg9[%c0_10, %c0_11, %c0_12], %13 {strides = array<i32>} : memref<9x9x8xbf16, #tpu.memory_space<vmem>>, vector<1x9x8xbf16>,
    %c0_13 = arith.constant 0 : index
    %c0_14 = arith.constant 0 : index
    %c0_15 = arith.constant 0 : index
    %16 = vector.load %arg9[%c0_13, %c0_14, %c0_15] : memref<9x9x8xbf16, #tpu.memory_space<vmem>>, vector<9x1x8xbf16>
    tpu.vector_store %arg9[%c0_13, %c0_14, %c0_15], %14 {strides = array<i32>} : memref<9x9x8xbf16, #tpu.memory_space<vmem>>, vector<9x1x8xbf16>,
    %17 = vector.extract_strided_slice %12 {offsets = [0, 0, 0, 0], sizes = [8, 1, 8, 8], strides = [1, 1, 1, 1]} : vector<8x2x8x8xbf16> to vector<8x1x8x8xbf16>
    %18 = vector.shape_cast %17 : vector<8x1x8x8xbf16> to vector<8x8x8xbf16>
    %c1 = arith.constant 1 : index
    %c1_16 = arith.constant 1 : index
    %c0_17 = arith.constant 0 : index
    %19 = vector.load %arg9[%c1, %c1_16, %c0_17] : memref<9x9x8xbf16, #tpu.memory_space<vmem>>, vector<8x8x8xbf16>
    tpu.vector_store %arg9[%c1, %c1_16, %c0_17], %18 {strides = array<i32>} : memref<9x9x8xbf16, #tpu.memory_space<vmem>>, vector<8x8x8xbf16>,
    %c0_18 = arith.constant 0 : index
    %c0_19 = arith.constant 0 : index
    %c0_20 = arith.constant 0 : index
    %20 = vector.load %arg10[%c0_18, %c0_19, %c0_20] : memref<9x9x8xbf16, #tpu.memory_space<vmem>>, vector<1x9x8xbf16>
    tpu.vector_store %arg10[%c0_18, %c0_19, %c0_20], %13 {strides = array<i32>} : memref<9x9x8xbf16, #tpu.memory_space<vmem>>, vector<1x9x8xbf16>,
    %c0_21 = arith.constant 0 : index
    %c0_22 = arith.constant 0 : index
    %c0_23 = arith.constant 0 : index
    %21 = vector.load %arg10[%c0_21, %c0_22, %c0_23] : memref<9x9x8xbf16, #tpu.memory_space<vmem>>, vector<9x1x8xbf16>
    tpu.vector_store %arg10[%c0_21, %c0_22, %c0_23], %14 {strides = array<i32>} : memref<9x9x8xbf16, #tpu.memory_space<vmem>>, vector<9x1x8xbf16>,
    %22 = vector.extract_strided_slice %12 {offsets = [0, 1, 0, 0], sizes = [8, 1, 8, 8], strides = [1, 1, 1, 1]} : vector<8x2x8x8xbf16> to vector<8x1x8x8xbf16>
    %23 = vector.shape_cast %22 : vector<8x1x8x8xbf16> to vector<8x8x8xbf16>
    %c1_24 = arith.constant 1 : index
    %c1_25 = arith.constant 1 : index
    %c0_26 = arith.constant 0 : index
    %24 = vector.load %arg10[%c1_24, %c1_25, %c0_26] : memref<9x9x8xbf16, #tpu.memory_space<vmem>>, vector<8x8x8xbf16>
    tpu.vector_store %arg10[%c1_24, %c1_25, %c0_26], %23 {strides = array<i32>} : memref<9x9x8xbf16, #tpu.memory_space<vmem>>, vector<8x8x8xbf16>,
    %cst_27 = arith.constant 0.000000e+00 : f32
    %25 = vector.broadcast %cst_27 : f32 to vector<64x8xf32>
    %c0_28 = arith.constant 0 : index
    %c0_29 = arith.constant 0 : index
    %c0_30 = arith.constant 0 : index
    %26 = vector.load %arg10[%c0_28, %c0_29, %c0_30] : memref<9x9x8xbf16, #tpu.memory_space<vmem>>, vector<8x9x8xbf16>
    %27 = vector.extract_strided_slice %26 {offsets = [0, 0, 4], sizes = [8, 8, 4], strides = [1, 1, 1]} : vector<8x9x8xbf16> to vector<8x8x4xbf16>
    %28 = vector.extract_strided_slice %26 {offsets = [0, 1, 0], sizes = [8, 8, 4], strides = [1, 1, 1]} : vector<8x9x8xbf16> to vector<8x8x4xbf16>
    %29 = vector.extract_strided_slice %26 {offsets = [0, 1, 4], sizes = [8, 8, 4], strides = [1, 1, 1]} : vector<8x9x8xbf16> to vector<8x8x4xbf16>
    %30 = tpu.concatenate %27, %28, %29 in 2 : vector<8x8x4xbf16>, vector<8x8x4xbf16>, vector<8x8x4xbf16> -> vector<8x8x12xbf16>
    %31 = vector.shape_cast %30 : vector<8x8x12xbf16> to vector<64x12xbf16>
    %c0_31 = arith.constant 0 : index
    %c0_32 = arith.constant 0 : index
    %c0_33 = arith.constant 0 : index
    %32 = vector.load %arg4[%c0_31, %c0_32, %c0_33] : memref<3x12x8xbf16, #tpu.memory_space<vmem>>, vector<1x12x8xbf16>
    %33 = vector.shape_cast %32 : vector<1x12x8xbf16> to vector<12x8xbf16>
    %cst_34 = arith.constant dense<0.000000e+00> : vector<64x8xf32>
    %34 = tpu.matmul %31, %33, %cst_34 {dimension_numbers = #tpu.dot_dimension_numbers<[1], [0], [0], [1], [0, 0, 1, 1], [], []>} : vector<64x12xbf16>, vector<12x8xbf16>, vector<64x8xf32> -> vector<64x8xf32>
    %35 = arith.addf %25, %34 : vector<64x8xf32>
    %c1_35 = arith.constant 1 : index
    %c0_36 = arith.constant 0 : index
    %c0_37 = arith.constant 0 : index
    %36 = vector.load %arg9[%c1_35, %c0_36, %c0_37] : memref<9x9x8xbf16, #tpu.memory_space<vmem>>, vector<8x9x8xbf16>
    %37 = vector.extract_strided_slice %36 {offsets = [0, 0, 4], sizes = [8, 8, 4], strides = [1, 1, 1]} : vector<8x9x8xbf16> to vector<8x8x4xbf16>
    %38 = vector.extract_strided_slice %36 {offsets = [0, 1, 0], sizes = [8, 8, 4], strides = [1, 1, 1]} : vector<8x9x8xbf16> to vector<8x8x4xbf16>
    %39 = vector.extract_strided_slice %36 {offsets = [0, 1, 4], sizes = [8, 8, 4], strides = [1, 1, 1]} : vector<8x9x8xbf16> to vector<8x8x4xbf16>
    %40 = tpu.concatenate %37, %38, %39 in 2 : vector<8x8x4xbf16>, vector<8x8x4xbf16>, vector<8x8x4xbf16> -> vector<8x8x12xbf16>
    %41 = vector.shape_cast %40 : vector<8x8x12xbf16> to vector<64x12xbf16>
    %c1_38 = arith.constant 1 : index
    %c0_39 = arith.constant 0 : index
    %c0_40 = arith.constant 0 : index
    %42 = vector.load %arg4[%c1_38, %c0_39, %c0_40] : memref<3x12x8xbf16, #tpu.memory_space<vmem>>, vector<1x12x8xbf16>
    %43 = vector.shape_cast %42 : vector<1x12x8xbf16> to vector<12x8xbf16>
    %cst_41 = arith.constant dense<0.000000e+00> : vector<64x8xf32>
    %44 = tpu.matmul %41, %43, %cst_41 {dimension_numbers = #tpu.dot_dimension_numbers<[1], [0], [0], [1], [0, 0, 1, 1], [], []>} : vector<64x12xbf16>, vector<12x8xbf16>, vector<64x8xf32> -> vector<64x8xf32>
    %45 = arith.addf %35, %44 : vector<64x8xf32>
    %c1_42 = arith.constant 1 : index
    %c0_43 = arith.constant 0 : index
    %c0_44 = arith.constant 0 : index
    %46 = vector.load %arg10[%c1_42, %c0_43, %c0_44] : memref<9x9x8xbf16, #tpu.memory_space<vmem>>, vector<8x9x8xbf16>
    %47 = vector.extract_strided_slice %46 {offsets = [0, 0, 4], sizes = [8, 8, 4], strides = [1, 1, 1]} : vector<8x9x8xbf16> to vector<8x8x4xbf16>
    %48 = vector.extract_strided_slice %46 {offsets = [0, 1, 0], sizes = [8, 8, 4], strides = [1, 1, 1]} : vector<8x9x8xbf16> to vector<8x8x4xbf16>
    %49 = vector.extract_strided_slice %46 {offsets = [0, 1, 4], sizes = [8, 8, 4], strides = [1, 1, 1]} : vector<8x9x8xbf16> to vector<8x8x4xbf16>
    %50 = tpu.concatenate %47, %48, %49 in 2 : vector<8x8x4xbf16>, vector<8x8x4xbf16>, vector<8x8x4xbf16> -> vector<8x8x12xbf16>
    %51 = vector.shape_cast %50 : vector<8x8x12xbf16> to vector<64x12xbf16>
    %c2 = arith.constant 2 : index
    %c0_45 = arith.constant 0 : index
    %c0_46 = arith.constant 0 : index
    %52 = vector.load %arg4[%c2, %c0_45, %c0_46] : memref<3x12x8xbf16, #tpu.memory_space<vmem>>, vector<1x12x8xbf16>
    %53 = vector.shape_cast %52 : vector<1x12x8xbf16> to vector<12x8xbf16>
    %cst_47 = arith.constant dense<0.000000e+00> : vector<64x8xf32>
    %54 = tpu.matmul %51, %53, %cst_47 {dimension_numbers = #tpu.dot_dimension_numbers<[1], [0], [0], [1], [0, 0, 1, 1], [], []>} : vector<64x12xbf16>, vector<12x8xbf16>, vector<64x8xf32> -> vector<64x8xf32>
    %55 = arith.addf %45, %54 : vector<64x8xf32>
    %56 = vector.shape_cast %55 : vector<64x8xf32> to vector<8x8x8xf32>
    %57 = arith.truncf %56 : vector<8x8x8xf32> to vector<8x8x8xbf16>
    %c0_48 = arith.constant 0 : index
    %c0_49 = arith.constant 0 : index
    %c0_50 = arith.constant 0 : index
    %c0_51 = arith.constant 0 : index
    %58 = vector.load %arg6[%c0_48, %c0_49, %c0_50, %c0_51] : memref<1x8x8x8xbf16, #tpu.memory_space<vmem>>, vector<1x8x8x8xbf16>
    %59 = vector.shape_cast %58 : vector<1x8x8x8xbf16> to vector<8x8x8xbf16>
    %60 = vector.shape_cast %57 : vector<8x8x8xbf16> to vector<1x8x8x8xbf16>
    tpu.vector_store %arg6[%c0_48, %c0_49, %c0_50, %c0_51], %60 {strides = array<i32>} : memref<1x8x8x8xbf16, #tpu.memory_space<vmem>>, vector<1x8x8x8xbf16>,
    %61 = vector.extract_strided_slice %12 {offsets = [0, 0, 0, 0], sizes = [8, 1, 8, 4], strides = [1, 1, 1, 1]} : vector<8x2x8x8xbf16> to vector<8x1x8x4xbf16>
    %62 = vector.shape_cast %61 : vector<8x1x8x4xbf16> to vector<8x8x4xbf16>
    %63 = vector.shape_cast %62 : vector<8x8x4xbf16> to vector<64x4xbf16>
    %c0_52 = arith.constant 0 : index
    %c0_53 = arith.constant 0 : index
    %64 = vector.load %arg5[%c0_52, %c0_53] : memref<4x8xbf16, #tpu.memory_space<vmem>>, vector<4x8xbf16>
    %cst_54 = arith.constant dense<0.000000e+00> : vector<64x8xf32>
    %65 = tpu.matmul %63, %64, %cst_54 {dimension_numbers = #tpu.dot_dimension_numbers<[1], [0], [0], [1], [0, 0, 1, 1], [], []>} : vector<64x4xbf16>, vector<4x8xbf16>, vector<64x8xf32> -> vector<64x8xf32>
    %66 = vector.shape_cast %65 : vector<64x8xf32> to vector<8x8x8xf32>
    %67 = arith.truncf %66 : vector<8x8x8xf32> to vector<8x8x8xbf16>
    %c0_55 = arith.constant 0 : index
    %c0_56 = arith.constant 0 : index
    %c0_57 = arith.constant 0 : index
    %c0_58 = arith.constant 0 : index
    %68 = vector.load %arg7[%c0_55, %c0_56, %c0_57, %c0_58] : memref<1x8x8x8xbf16, #tpu.memory_space<vmem>>, vector<1x8x8x8xbf16>
    %69 = vector.shape_cast %68 : vector<1x8x8x8xbf16> to vector<8x8x8xbf16>
    %70 = vector.shape_cast %67 : vector<8x8x8xbf16> to vector<1x8x8x8xbf16>
    tpu.vector_store %arg7[%c0_55, %c0_56, %c0_57, %c0_58], %70 {strides = array<i32>} : memref<1x8x8x8xbf16, #tpu.memory_space<vmem>>, vector<1x8x8x8xbf16>,
    %cst_59 = arith.constant dense<0.000000e+00> : vector<8xf32>
    %71 = vector.multi_reduction <add>, %55, %cst_59 [0] : vector<64x8xf32> to vector<8xf32>
    %72 = vector.shape_cast %71 : vector<8xf32> to vector<1x8xf32>
    %c0_60 = arith.constant 0 : index
    %c0_61 = arith.constant 0 : index
    %c0_62 = arith.constant 0 : index
    %73 = vector.load %arg8[%c0_60, %c0_61, %c0_62] : memref<1x2x8xf32, #tpu.memory_space<vmem>>, vector<1x1x8xf32>
    %74 = vector.shape_cast %73 : vector<1x1x8xf32> to vector<1x8xf32>
    %75 = vector.shape_cast %72 : vector<1x8xf32> to vector<1x1x8xf32>
    tpu.vector_store %arg8[%c0_60, %c0_61, %c0_62], %75 {strides = array<i32>} : memref<1x2x8xf32, #tpu.memory_space<vmem>>, vector<1x1x8xf32>,
    %76 = arith.mulf %55, %55 : vector<64x8xf32>
    %cst_63 = arith.constant dense<0.000000e+00> : vector<8xf32>
    %77 = vector.multi_reduction <add>, %76, %cst_63 [0] : vector<64x8xf32> to vector<8xf32>
    %78 = vector.shape_cast %77 : vector<8xf32> to vector<1x8xf32>
    %c0_64 = arith.constant 0 : index
    %c1_65 = arith.constant 1 : index
    %c0_66 = arith.constant 0 : index
    %79 = vector.load %arg8[%c0_64, %c1_65, %c0_66] : memref<1x2x8xf32, #tpu.memory_space<vmem>>, vector<1x1x8xf32>
    %80 = vector.shape_cast %79 : vector<1x1x8xf32> to vector<1x8xf32>
    %81 = vector.shape_cast %78 : vector<1x8xf32> to vector<1x1x8xf32>
    tpu.vector_store %arg8[%c0_64, %c1_65, %c0_66], %81 {strides = array<i32>} : memref<1x2x8xf32, #tpu.memory_space<vmem>>, vector<1x1x8xf32>,
    return
  }
  func.func @transform_0(%arg0: i32) -> (i32, i32, i32, i32, i32) {
    %c0_i32 = arith.constant 0 : i32
    %c0_i32_0 = arith.constant 0 : i32
    %c0_i32_1 = arith.constant 0 : i32
    %c0_i32_2 = arith.constant 0 : i32
    %c0_i32_3 = arith.constant 0 : i32
    return %arg0, %c0_i32, %c0_i32_0, %c0_i32_1, %c0_i32_2 : i32, i32, i32, i32, i32
  }
  func.func @transform_1(%arg0: i32) -> (i32, i32) {
    %c0_i32 = arith.constant 0 : i32
    %c0_i32_0 = arith.constant 0 : i32
    %c0_i32_1 = arith.constant 0 : i32
    return %c0_i32, %c0_i32_0 : i32, i32
  }
  func.func @transform_2(%arg0: i32) -> (i32, i32) {
    %c0_i32 = arith.constant 0 : i32
    %c0_i32_0 = arith.constant 0 : i32
    %c0_i32_1 = arith.constant 0 : i32
    return %c0_i32, %c0_i32_0 : i32, i32
  }
  func.func @transform_3(%arg0: i32) -> (i32, i32, i32) {
    %c0_i32 = arith.constant 0 : i32
    %c0_i32_0 = arith.constant 0 : i32
    %c0_i32_1 = arith.constant 0 : i32
    %c0_i32_2 = arith.constant 0 : i32
    return %c0_i32, %c0_i32_0, %c0_i32_1 : i32, i32, i32
  }
  func.func @transform_4(%arg0: i32) -> (i32, i32) {
    %c0_i32 = arith.constant 0 : i32
    %c0_i32_0 = arith.constant 0 : i32
    %c0_i32_1 = arith.constant 0 : i32
    return %c0_i32, %c0_i32_0 : i32, i32
  }
  func.func @transform_5(%arg0: i32) -> (i32, i32, i32, i32) {
    %c0_i32 = arith.constant 0 : i32
    %c0_i32_0 = arith.constant 0 : i32
    %c0_i32_1 = arith.constant 0 : i32
    %c0_i32_2 = arith.constant 0 : i32
    return %arg0, %c0_i32, %c0_i32_0, %c0_i32_1 : i32, i32, i32, i32
  }
  func.func @transform_6(%arg0: i32) -> (i32, i32, i32, i32) {
    %c0_i32 = arith.constant 0 : i32
    %c0_i32_0 = arith.constant 0 : i32
    %c0_i32_1 = arith.constant 0 : i32
    %c0_i32_2 = arith.constant 0 : i32
    return %arg0, %c0_i32, %c0_i32_0, %c0_i32_1 : i32, i32, i32, i32
  }
  func.func @transform_7(%arg0: i32) -> (i32, i32, i32) {
    %c0_i32 = arith.constant 0 : i32
    %c0_i32_0 = arith.constant 0 : i32
    %c0_i32_1 = arith.constant 0 : i32
    return %arg0, %c0_i32, %c0_i32_0 : i32, i32, i32
  }
}

module attributes {stable_mosaic.version = 11 : i64} {
  func.func @_block_b_kernel(%arg0: i32, %arg1: memref<1x8x8x8xbf16, #tpu.memory_space<vmem>>, %arg2: memref<1x8xf32, #tpu.memory_space<vmem>>, %arg3: memref<1x8xf32, #tpu.memory_space<vmem>>, %arg4: memref<3x24x8xbf16, #tpu.memory_space<vmem>>, %arg5: memref<1x8x8x8xbf16, #tpu.memory_space<vmem>>, %arg6: memref<1x8x8x8xf32, #tpu.memory_space<vmem>>, %arg7: memref<10x10x8xbf16, #tpu.memory_space<vmem>>) attributes {dimension_semantics = [#tpu.dimension_semantics<parallel>], iteration_bounds = array<i64: 2>, scalar_prefetch = 0 : i64, scratch_operands = 1 : i64, tpu.core_type = #tpu.core_type<tc>, window_params = [{transform_indices = @transform_0, window_bounds = array<i64: 1, 8, 8, 8>}, {pipeline_mode = #tpu.pipeline_mode<synchronous>, transform_indices = @transform_1, window_bounds = array<i64: 1, 8>}, {pipeline_mode = #tpu.pipeline_mode<synchronous>, transform_indices = @transform_2, window_bounds = array<i64: 1, 8>}, {pipeline_mode = #tpu.pipeline_mode<synchronous>, transform_indices = @transform_3, window_bounds = array<i64: 3, 24, 8>}, {transform_indices = @transform_4, window_bounds = array<i64: 1, 8, 8, 8>}, {transform_indices = @transform_5, window_bounds = array<i64: 1, 8, 8, 8>}]} {
    %c0 = arith.constant 0 : index
    %c0_0 = arith.constant 0 : index
    %0 = vector.load %arg2[%c0, %c0_0] : memref<1x8xf32, #tpu.memory_space<vmem>>, vector<1x8xf32>
    %1 = vector.shape_cast %0 : vector<1x8xf32> to vector<1x1x8xf32>
    %c0_1 = arith.constant 0 : index
    %c0_2 = arith.constant 0 : index
    %2 = vector.load %arg3[%c0_1, %c0_2] : memref<1x8xf32, #tpu.memory_space<vmem>>, vector<1x8xf32>
    %3 = vector.shape_cast %2 : vector<1x8xf32> to vector<1x1x8xf32>
    %c0_3 = arith.constant 0 : index
    %c0_4 = arith.constant 0 : index
    %c0_5 = arith.constant 0 : index
    %c0_6 = arith.constant 0 : index
    %4 = vector.load %arg1[%c0_3, %c0_4, %c0_5, %c0_6] : memref<1x8x8x8xbf16, #tpu.memory_space<vmem>>, vector<1x8x8x8xbf16>
    %5 = vector.shape_cast %4 : vector<1x8x8x8xbf16> to vector<8x8x8xbf16>
    %6 = arith.extf %5 : vector<8x8x8xbf16> to vector<8x8x8xf32>
    %7 = vector.broadcast %1 : vector<1x1x8xf32> to vector<8x8x8xf32>
    %8 = arith.mulf %6, %7 : vector<8x8x8xf32>
    %9 = vector.broadcast %3 : vector<1x1x8xf32> to vector<8x8x8xf32>
    %10 = arith.addf %8, %9 : vector<8x8x8xf32>
    %cst = arith.constant 0.000000e+00 : f32
    %11 = vector.broadcast %cst : f32 to vector<8x8x8xf32>
    %12 = arith.maximumf %10, %11 : vector<8x8x8xf32>
    %13 = arith.truncf %12 : vector<8x8x8xf32> to vector<8x8x8xbf16>
    %cst_7 = arith.constant 0.000000e+00 : bf16
    %14 = vector.broadcast %cst_7 : bf16 to vector<1x10x8xbf16>
    %cst_8 = arith.constant 0.000000e+00 : bf16
    %15 = vector.broadcast %cst_8 : bf16 to vector<10x1x8xbf16>
    %c0_9 = arith.constant 0 : index
    %c0_10 = arith.constant 0 : index
    %c0_11 = arith.constant 0 : index
    %16 = vector.load %arg7[%c0_9, %c0_10, %c0_11] : memref<10x10x8xbf16, #tpu.memory_space<vmem>>, vector<1x10x8xbf16>
    tpu.vector_store %arg7[%c0_9, %c0_10, %c0_11], %14 {strides = array<i32>} : memref<10x10x8xbf16, #tpu.memory_space<vmem>>, vector<1x10x8xbf16>,
    %c9 = arith.constant 9 : index
    %c0_12 = arith.constant 0 : index
    %c0_13 = arith.constant 0 : index
    %17 = vector.load %arg7[%c9, %c0_12, %c0_13] : memref<10x10x8xbf16, #tpu.memory_space<vmem>>, vector<1x10x8xbf16>
    tpu.vector_store %arg7[%c9, %c0_12, %c0_13], %14 {strides = array<i32>} : memref<10x10x8xbf16, #tpu.memory_space<vmem>>, vector<1x10x8xbf16>,
    %c0_14 = arith.constant 0 : index
    %c0_15 = arith.constant 0 : index
    %c0_16 = arith.constant 0 : index
    %18 = vector.load %arg7[%c0_14, %c0_15, %c0_16] : memref<10x10x8xbf16, #tpu.memory_space<vmem>>, vector<10x1x8xbf16>
    tpu.vector_store %arg7[%c0_14, %c0_15, %c0_16], %15 {strides = array<i32>} : memref<10x10x8xbf16, #tpu.memory_space<vmem>>, vector<10x1x8xbf16>,
    %c0_17 = arith.constant 0 : index
    %c9_18 = arith.constant 9 : index
    %c0_19 = arith.constant 0 : index
    %19 = vector.load %arg7[%c0_17, %c9_18, %c0_19] : memref<10x10x8xbf16, #tpu.memory_space<vmem>>, vector<10x1x8xbf16>
    tpu.vector_store %arg7[%c0_17, %c9_18, %c0_19], %15 {strides = array<i32>} : memref<10x10x8xbf16, #tpu.memory_space<vmem>>, vector<10x1x8xbf16>,
    %c1 = arith.constant 1 : index
    %c1_20 = arith.constant 1 : index
    %c0_21 = arith.constant 0 : index
    %20 = vector.load %arg7[%c1, %c1_20, %c0_21] : memref<10x10x8xbf16, #tpu.memory_space<vmem>>, vector<8x8x8xbf16>
    tpu.vector_store %arg7[%c1, %c1_20, %c0_21], %13 {strides = array<i32>} : memref<10x10x8xbf16, #tpu.memory_space<vmem>>, vector<8x8x8xbf16>,
    %cst_22 = arith.constant 0.000000e+00 : f32
    %21 = vector.broadcast %cst_22 : f32 to vector<64x8xf32>
    %c0_23 = arith.constant 0 : index
    %c0_24 = arith.constant 0 : index
    %c0_25 = arith.constant 0 : index
    %22 = vector.load %arg7[%c0_23, %c0_24, %c0_25] : memref<10x10x8xbf16, #tpu.memory_space<vmem>>, vector<8x8x8xbf16>
    %c0_26 = arith.constant 0 : index
    %c1_27 = arith.constant 1 : index
    %c0_28 = arith.constant 0 : index
    %23 = vector.load %arg7[%c0_26, %c1_27, %c0_28] : memref<10x10x8xbf16, #tpu.memory_space<vmem>>, vector<8x8x8xbf16>
    %c0_29 = arith.constant 0 : index
    %c2 = arith.constant 2 : index
    %c0_30 = arith.constant 0 : index
    %24 = vector.load %arg7[%c0_29, %c2, %c0_30] : memref<10x10x8xbf16, #tpu.memory_space<vmem>>, vector<8x8x8xbf16>
    %25 = tpu.concatenate %22, %23, %24 in 2 : vector<8x8x8xbf16>, vector<8x8x8xbf16>, vector<8x8x8xbf16> -> vector<8x8x24xbf16>
    %26 = vector.shape_cast %25 : vector<8x8x24xbf16> to vector<64x24xbf16>
    %c0_31 = arith.constant 0 : index
    %c0_32 = arith.constant 0 : index
    %c0_33 = arith.constant 0 : index
    %27 = vector.load %arg4[%c0_31, %c0_32, %c0_33] : memref<3x24x8xbf16, #tpu.memory_space<vmem>>, vector<1x24x8xbf16>
    %28 = vector.shape_cast %27 : vector<1x24x8xbf16> to vector<24x8xbf16>
    %cst_34 = arith.constant dense<0.000000e+00> : vector<64x8xf32>
    %29 = tpu.matmul %26, %28, %cst_34 {dimension_numbers = #tpu.dot_dimension_numbers<[1], [0], [0], [1], [0, 0, 1, 1], [], []>} : vector<64x24xbf16>, vector<24x8xbf16>, vector<64x8xf32> -> vector<64x8xf32>
    %30 = arith.addf %21, %29 : vector<64x8xf32>
    %c1_35 = arith.constant 1 : index
    %c0_36 = arith.constant 0 : index
    %c0_37 = arith.constant 0 : index
    %31 = vector.load %arg7[%c1_35, %c0_36, %c0_37] : memref<10x10x8xbf16, #tpu.memory_space<vmem>>, vector<8x8x8xbf16>
    %c1_38 = arith.constant 1 : index
    %c1_39 = arith.constant 1 : index
    %c0_40 = arith.constant 0 : index
    %32 = vector.load %arg7[%c1_38, %c1_39, %c0_40] : memref<10x10x8xbf16, #tpu.memory_space<vmem>>, vector<8x8x8xbf16>
    %c1_41 = arith.constant 1 : index
    %c2_42 = arith.constant 2 : index
    %c0_43 = arith.constant 0 : index
    %33 = vector.load %arg7[%c1_41, %c2_42, %c0_43] : memref<10x10x8xbf16, #tpu.memory_space<vmem>>, vector<8x8x8xbf16>
    %34 = tpu.concatenate %31, %32, %33 in 2 : vector<8x8x8xbf16>, vector<8x8x8xbf16>, vector<8x8x8xbf16> -> vector<8x8x24xbf16>
    %35 = vector.shape_cast %34 : vector<8x8x24xbf16> to vector<64x24xbf16>
    %c1_44 = arith.constant 1 : index
    %c0_45 = arith.constant 0 : index
    %c0_46 = arith.constant 0 : index
    %36 = vector.load %arg4[%c1_44, %c0_45, %c0_46] : memref<3x24x8xbf16, #tpu.memory_space<vmem>>, vector<1x24x8xbf16>
    %37 = vector.shape_cast %36 : vector<1x24x8xbf16> to vector<24x8xbf16>
    %cst_47 = arith.constant dense<0.000000e+00> : vector<64x8xf32>
    %38 = tpu.matmul %35, %37, %cst_47 {dimension_numbers = #tpu.dot_dimension_numbers<[1], [0], [0], [1], [0, 0, 1, 1], [], []>} : vector<64x24xbf16>, vector<24x8xbf16>, vector<64x8xf32> -> vector<64x8xf32>
    %39 = arith.addf %30, %38 : vector<64x8xf32>
    %c2_48 = arith.constant 2 : index
    %c0_49 = arith.constant 0 : index
    %c0_50 = arith.constant 0 : index
    %40 = vector.load %arg7[%c2_48, %c0_49, %c0_50] : memref<10x10x8xbf16, #tpu.memory_space<vmem>>, vector<8x8x8xbf16>
    %c2_51 = arith.constant 2 : index
    %c1_52 = arith.constant 1 : index
    %c0_53 = arith.constant 0 : index
    %41 = vector.load %arg7[%c2_51, %c1_52, %c0_53] : memref<10x10x8xbf16, #tpu.memory_space<vmem>>, vector<8x8x8xbf16>
    %c2_54 = arith.constant 2 : index
    %c2_55 = arith.constant 2 : index
    %c0_56 = arith.constant 0 : index
    %42 = vector.load %arg7[%c2_54, %c2_55, %c0_56] : memref<10x10x8xbf16, #tpu.memory_space<vmem>>, vector<8x8x8xbf16>
    %43 = tpu.concatenate %40, %41, %42 in 2 : vector<8x8x8xbf16>, vector<8x8x8xbf16>, vector<8x8x8xbf16> -> vector<8x8x24xbf16>
    %44 = vector.shape_cast %43 : vector<8x8x24xbf16> to vector<64x24xbf16>
    %c2_57 = arith.constant 2 : index
    %c0_58 = arith.constant 0 : index
    %c0_59 = arith.constant 0 : index
    %45 = vector.load %arg4[%c2_57, %c0_58, %c0_59] : memref<3x24x8xbf16, #tpu.memory_space<vmem>>, vector<1x24x8xbf16>
    %46 = vector.shape_cast %45 : vector<1x24x8xbf16> to vector<24x8xbf16>
    %cst_60 = arith.constant dense<0.000000e+00> : vector<64x8xf32>
    %47 = tpu.matmul %44, %46, %cst_60 {dimension_numbers = #tpu.dot_dimension_numbers<[1], [0], [0], [1], [0, 0, 1, 1], [], []>} : vector<64x24xbf16>, vector<24x8xbf16>, vector<64x8xf32> -> vector<64x8xf32>
    %48 = arith.addf %39, %47 : vector<64x8xf32>
    %49 = vector.shape_cast %48 : vector<64x8xf32> to vector<8x8x8xf32>
    %c0_61 = arith.constant 0 : index
    %c0_62 = arith.constant 0 : index
    %c0_63 = arith.constant 0 : index
    %c0_64 = arith.constant 0 : index
    %50 = vector.load %arg5[%c0_61, %c0_62, %c0_63, %c0_64] : memref<1x8x8x8xbf16, #tpu.memory_space<vmem>>, vector<1x8x8x8xbf16>
    %51 = vector.shape_cast %50 : vector<1x8x8x8xbf16> to vector<8x8x8xbf16>
    %52 = arith.extf %51 : vector<8x8x8xbf16> to vector<8x8x8xf32>
    %53 = arith.addf %49, %52 : vector<8x8x8xf32>
    %c0_65 = arith.constant 0 : index
    %c0_66 = arith.constant 0 : index
    %c0_67 = arith.constant 0 : index
    %c0_68 = arith.constant 0 : index
    %54 = vector.load %arg6[%c0_65, %c0_66, %c0_67, %c0_68] : memref<1x8x8x8xf32, #tpu.memory_space<vmem>>, vector<1x8x8x8xf32>
    %55 = vector.shape_cast %54 : vector<1x8x8x8xf32> to vector<8x8x8xf32>
    %56 = vector.shape_cast %53 : vector<8x8x8xf32> to vector<1x8x8x8xf32>
    tpu.vector_store %arg6[%c0_65, %c0_66, %c0_67, %c0_68], %56 {strides = array<i32>} : memref<1x8x8x8xf32, #tpu.memory_space<vmem>>, vector<1x8x8x8xf32>,
    return
  }
  func.func @transform_0(%arg0: i32) -> (i32, i32, i32, i32) {
    %c0_i32 = arith.constant 0 : i32
    %c0_i32_0 = arith.constant 0 : i32
    %c0_i32_1 = arith.constant 0 : i32
    %c0_i32_2 = arith.constant 0 : i32
    return %arg0, %c0_i32, %c0_i32_0, %c0_i32_1 : i32, i32, i32, i32
  }
  func.func @transform_1(%arg0: i32) -> (i32, i32) {
    %c0_i32 = arith.constant 0 : i32
    %c0_i32_0 = arith.constant 0 : i32
    %c0_i32_1 = arith.constant 0 : i32
    return %c0_i32, %c0_i32_0 : i32, i32
  }
  func.func @transform_2(%arg0: i32) -> (i32, i32) {
    %c0_i32 = arith.constant 0 : i32
    %c0_i32_0 = arith.constant 0 : i32
    %c0_i32_1 = arith.constant 0 : i32
    return %c0_i32, %c0_i32_0 : i32, i32
  }
  func.func @transform_3(%arg0: i32) -> (i32, i32, i32) {
    %c0_i32 = arith.constant 0 : i32
    %c0_i32_0 = arith.constant 0 : i32
    %c0_i32_1 = arith.constant 0 : i32
    %c0_i32_2 = arith.constant 0 : i32
    return %c0_i32, %c0_i32_0, %c0_i32_1 : i32, i32, i32
  }
  func.func @transform_4(%arg0: i32) -> (i32, i32, i32, i32) {
    %c0_i32 = arith.constant 0 : i32
    %c0_i32_0 = arith.constant 0 : i32
    %c0_i32_1 = arith.constant 0 : i32
    %c0_i32_2 = arith.constant 0 : i32
    return %arg0, %c0_i32, %c0_i32_0, %c0_i32_1 : i32, i32, i32, i32
  }
  func.func @transform_5(%arg0: i32) -> (i32, i32, i32, i32) {
    %c0_i32 = arith.constant 0 : i32
    %c0_i32_0 = arith.constant 0 : i32
    %c0_i32_1 = arith.constant 0 : i32
    %c0_i32_2 = arith.constant 0 : i32
    return %arg0, %c0_i32, %c0_i32_0, %c0_i32_1 : i32, i32, i32, i32
  }
}

</mosaic_0001>

<llo_original>
// kernel: tile.13
$region0: #{tile.13}
  #allocation0 [shape = 's32[1]{0}', space=sflag, size = 0x4, scoped, tag = 'scoped memory for tile.13']
  %s0 = inlined_call_operand.vmem [shape: f32[4], index: 0, kind: input, shape index: {}]
  %s1 = inlined_call_operand.vmem [shape: f32[2,4], index: 1, kind: output, shape index: {}]
  // Predicated region
  $region2: #{tile.13} parent=0 // pred_check
    _
  $region3: #{tile.13} parent=0 // pred_check_branch
    %3 = sbr.rel (0) target = $region5
  $region4: #{tile.13} parent=0 // pred_region
    _
  $region5: #{tile.13} parent=0 // pred_fallthru
    _
  %v4 = vld [vmem:[%s0] ss:$0 sm:$0xff]
  %5 = vst [vmem:[%s1] sm:$0x3] %v4

// kernel: tile.18
$region0: #{tile.18}
  %s0 = inlined_call_operand.vmem [shape: f32[2,4], index: 0, kind: input, shape index: {}]
  %s1 = inlined_call_operand.vmem [shape: f32[1,8], index: 1, kind: output, shape index: {}]
  $region1: #{tile.18} parent=0
    #allocation0 [shape = 'u8[4096]{0}', space=vmem, size = 0x1000, scoped, tag = 'scoped mem for output reshape']
    #allocation1 [shape = 'u8[4096]{0}', space=vmem, size = 0x1000, scoped, tag = 'scoped mem for input reshape']
    %s3 = sshllo.u32 0, 2
    %v4 = vld [vmem:[%s0] sm:%s3]
    %5 = vst [vmem:[#allocation1] sm:%s3] %v4
    %v6 = vld [vmem:[#allocation1] sm:$0x1]
    %vm7 = vcmask 31744
    %8 = vst.msk [vmem:[#allocation0] sm:$0x1] %vm7, %v6
    %s9 = scalar_lea.vmem [#allocation1], 1
    %v10 = vld [vmem:[%s9] sm:$0x1]
    %11 = vrot.lane.b32.xlu0 %v10, 4
    %v12 = vpop.permute.xlu0 %11
    %vm13 = vcmask 64544
    %14 = vst.msk [vmem:[#allocation0] sm:$0x1] %vm13, %v12
    %s16 = sshllo.u32 0, 1
    %v18 = vld [vmem:[#allocation0] sm:%s16]
    %s19 = sshllo.u32 0, 1
    %20 = vst [vmem:[%s1] sm:%s19] %v18

// kernel: preact_block_forward.3
$region0: #{preact_block_forward.3}
  #allocation0 [shape = 'u32[]', space=smem, size = 0x4, offset = 0x4, fixed_abs, tag = 'smem constant byte address 0x4 - core index']
  #allocation1 [shape = 'u32[144,128]{1,0:T(1,128)}', space=vmem, size = 0x12000, scoped, tag = 'internal scratch']
  %s0 = inlined_call_operand.vmem [shape: f32[2,16,16,4], index: 0, kind: input, shape index: {}]
  %s1 = inlined_call_operand.vmem [shape: f32[2,4], index: 1, kind: output, shape index: {}]
  %s2 = sld [smem:[#allocation0]]
  $region41: #{preact_block_forward.3} parent=0
    _
  %s4 = ssub.s32 1, %s2
  %s5 = scalar_select 0, %s4, %s2
  loop: start=0, step=1, limit=4
  $region2: #{preact_block_forward.3} parent=0 // loop_pre_header
    _
  $region3: #{preact_block_forward.3} parent=0 // loop_header
    %s7 = sphi 0, %s11
    %p8 = scmp.ge.s32.totalorder %s7, 4
    %s17 = sphi 0, %s19
    %s20 = sphi 0, %s17
    %s21 = sphi 0, %s20
    %s37 = sphi 0, %s21
    %s41 = sphi 0, %s41
    %s43 = sphi 0, %s41
    %s44 = sphi 0, %s43
    %s58 = sphi 0, %s44
  $region4: #{preact_block_forward.3} parent=0 // loop_header_branch
    %10 = sbr.rel (%p8) target = $region8
  $region5: #{preact_block_forward.3} parent=0 // loop_body
    %s12 = ssub.s32 %s7, 1
    %s13 = ssub.s32 %s7, 2
    %s14 = sadd.s32 %s7, 1
    %s15 = ssub.s32 %s7, %s14
    %p16 = scmp.eq.s32.totalorder %s15, 0
    %s18 = sadd.s32 %s17, 1
    %s19 = scalar_select %p16, %s17, %s18
    %p22 = pneg %p16
    %p23 = scmp.eq.s32.totalorder %s7, 1
    %p24 = por %p22, %p23
    %p25 = scmp.ne.s32.totalorder %s17, %s20
    %p26 = scmp.eq.s32.totalorder %s7, 0
    %p27 = por %p25, %p26
    %p28 = scmp.ne.s32.totalorder %s17, %s20
    %p29 = scmp.eq.s32.totalorder %s12, 1
    %p30 = por %p28, %p29
    %p31 = scmp.ne.s32.totalorder %s20, %s21
    %p32 = scmp.eq.s32.totalorder %s12, 0
    %p33 = por %p31, %p32
    %p34 = scmp.ne.s32.totalorder %s20, %s21
    %p35 = scmp.eq.s32.totalorder %s13, 1
    %p36 = por %p34, %p35
    %p38 = scmp.ne.s32.totalorder %s21, %s37
    %p39 = scmp.eq.s32.totalorder %s13, 0
    %p40 = por %p38, %p39
    %s42 = sadd.s32 %s41, 1
    %p45 = scmp.eq.s32.totalorder %s7, 1
    %p46 = scmp.ne.s32.totalorder %s41, %s43
    %p47 = scmp.eq.s32.totalorder %s7, 0
    %p48 = por %p46, %p47
    %p49 = scmp.ne.s32.totalorder %s41, %s43
    %p50 = scmp.eq.s32.totalorder %s12, 1
    %p51 = por %p49, %p50
    %p52 = scmp.ne.s32.totalorder %s43, %s44
    %p53 = scmp.eq.s32.totalorder %s12, 0
    %p54 = por %p52, %p53
    %p55 = scmp.ne.s32.totalorder %s43, %s44
    %p56 = scmp.eq.s32.totalorder %s13, 1
    %p57 = por %p55, %p56
    %p59 = scmp.ne.s32.totalorder %s44, %s58
    %p60 = scmp.eq.s32.totalorder %s13, 0
    %p61 = por %p59, %p60
    %p62 = scmp.le.s32.totalorder 1, %s7
    %p63 = scmp.lt.s32.totalorder %s7, 3
    %p64 = pnand %p62, %p63
    %p65 = pneg %p64
    // Predicated region
    $region9: #{preact_block_forward.3} parent=5 // pred_check
      _
    $region10: #{preact_block_forward.3} parent=5 // pred_check_branch
      %67 = sbr.rel (%p64) target = $region12
    $region11: #{preact_block_forward.3} parent=5 // pred_region
      %s68 = ssub.s32 %s7, 1
    $region12: #{preact_block_forward.3} parent=5 // pred_fallthru
      _
    %p69 = scmp.lt.s32.totalorder %s7, 2
    // Predicated region
    $region13: #{preact_block_forward.3} parent=5 // pred_check
      %p70 = pneg %p69
    $region14: #{preact_block_forward.3} parent=5 // pred_check_branch
      %72 = sbr.rel (%p70) target = $region16
    $region15: #{preact_block_forward.3} parent=5 // pred_region
      // Predicated region
      $region17: #{preact_block_forward.3} parent=15 // pred_check
        %p73 = pneg %p27
      $region18: #{preact_block_forward.3} parent=15 // pred_check_branch
        %75 = sbr.rel (%p73) target = $region20
      $region19: #{preact_block_forward.3} parent=15 // pred_region
        %p76 = scmp.lt.s32.totalorder %s7, 1
        %s77 = scalar_select %p76, %s7, 1
        %s78 = smul.addr %s77, 32
        %s79 = smul.addr %s78, 8
        %s80 = scalar_lea.vmem %s0, %s79
      $region20: #{preact_block_forward.3} parent=15 // pred_fallthru
        _
    $region16: #{preact_block_forward.3} parent=5 // pred_fallthru
      _
    %p81 = scmp.le.s32.totalorder 1, %s7
    %p82 = scmp.lt.s32.totalorder %s7, 3
    %p83 = pnand %p81, %p82
    %p84 = pneg %p83
    // Predicated region
    $region21: #{preact_block_forward.3} parent=5 // pred_check
      _
    $region22: #{preact_block_forward.3} parent=5 // pred_check_branch
      %86 = sbr.rel (%p83) target = $region24
    $region23: #{preact_block_forward.3} parent=5 // pred_region
      %s87 = ssub.s32 %s7, 1
      %p88 = scmp.lt.s32.totalorder %s12, 1
      %s89 = scalar_select %p88, %s12, 1
      %s90 = smul.addr %s89, 32
      %s91 = smul.addr %s90, 8
      %s92 = scalar_lea.vmem %s0, %s91
      %p93 = pneg %p33
      %p94 = pneg %p30
      %p95 = pneg %p54
      %p96 = pneg %p51
      %p97 = scmp.lt.s32.totalorder %s12, 1
      %s98 = scalar_select %p97, %s12, 1
      %s99 = smul.addr %s98, 32
      %s100 = smul.addr %s99, 8
      %s101 = scalar_lea.vmem %s0, %s100
      %p102 = scmp.eq.s32.totalorder %s12, 0
      // Predicated region
      $region25: #{preact_block_forward.3} parent=23 // pred_check
        %p103 = pneg %p102
      $region26: #{preact_block_forward.3} parent=23 // pred_check_branch
        %105 = sbr.rel (%p103) target = $region28
      $region27: #{preact_block_forward.3} parent=23 // pred_region
        %vm106 = vcmask 25600
        %107 = vst.msk [vmem:[%s1] sm:$0x3] %vm106, 0.0
      $region28: #{preact_block_forward.3} parent=23 // pred_fallthru
        _
      %v108 = vld [vmem:[%s101] sm:$0xff]
      %v109 = vld [vmem:[%s101 + $0x8] sm:$0xff]
      %v110 = vld [vmem:[%s101 + $0x10] sm:$0xff]
      %v111 = vld [vmem:[%s101 + $0x18] sm:$0xff]
      %v112 = vld [vmem:[%s101 + $0x20] sm:$0xff]
      %v113 = vld [vmem:[%s101 + $0x28] sm:$0xff]
      %v114 = vld [vmem:[%s101 + $0x30] sm:$0xff]
      %v115 = vld [vmem:[%s101 + $0x38] sm:$0xff]
      %v116 = vld [vmem:[%s101 + $0x40] sm:$0xff]
      %v117 = vld [vmem:[%s101 + $0x48] sm:$0xff]
      %v118 = vld [vmem:[%s101 + $0x50] sm:$0xff]
      %v119 = vld [vmem:[%s101 + $0x58] sm:$0xff]
      %v120 = vld [vmem:[%s101 + $0x60] sm:$0xff]
      %v121 = vld [vmem:[%s101 + $0x68] sm:$0xff]
      %v122 = vld [vmem:[%s101 + $0x70] sm:$0xff]
      %v123 = vld [vmem:[%s101 + $0x78] sm:$0xff]
      %v124 = vld [vmem:[%s101 + $0x80] sm:$0xff]
      %v125 = vld [vmem:[%s101 + $0x88] sm:$0xff]
      %v126 = vld [vmem:[%s101 + $0x90] sm:$0xff]
      %v127 = vld [vmem:[%s101 + $0x98] sm:$0xff]
      %v128 = vld [vmem:[%s101 + $0xa0] sm:$0xff]
      %v129 = vld [vmem:[%s101 + $0xa8] sm:$0xff]
      %v130 = vld [vmem:[%s101 + $0xb0] sm:$0xff]
      %v131 = vld [vmem:[%s101 + $0xb8] sm:$0xff]
      %v132 = vld [vmem:[%s101 + $0xc0] sm:$0xff]
      %v133 = vld [vmem:[%s101 + $0xc8] sm:$0xff]
      %v134 = vld [vmem:[%s101 + $0xd0] sm:$0xff]
      %v135 = vld [vmem:[%s101 + $0xd8] sm:$0xff]
      %v136 = vld [vmem:[%s101 + $0xe0] sm:$0xff]
      %v137 = vld [vmem:[%s101 + $0xe8] sm:$0xff]
      %v138 = vld [vmem:[%s101 + $0xf0] sm:$0xff]
      %v139 = vld [vmem:[%s101 + $0xf8] sm:$0xff]
      %vm140 = vcmask 31744
      %v141 = vsel %vm140, %v108, 0.0
      %v142 = vsel %vm140, %v109, 0.0
      %v143 = vadd.f32 %v141, %v142
      %v144 = vsel %vm140, %v110, 0.0
      %v145 = vadd.f32 %v143, %v144
      %v146 = vsel %vm140, %v111, 0.0
      %v147 = vadd.f32 %v145, %v146
      %v148 = vsel %vm140, %v112, 0.0
      %v149 = vadd.f32 %v147, %v148
      %v150 = vsel %vm140, %v113, 0.0
      %v151 = vadd.f32 %v149, %v150
      %v152 = vsel %vm140, %v114, 0.0
      %v153 = vadd.f32 %v151, %v152
      %v154 = vsel %vm140, %v115, 0.0
      %v155 = vadd.f32 %v153, %v154
      %v156 = vsel %vm140, %v116, 0.0
      %v157 = vadd.f32 %v155, %v156
      %v158 = vsel %vm140, %v117, 0.0
      %v159 = vadd.f32 %v157, %v158
      %v160 = vsel %vm140, %v118, 0.0
      %v161 = vadd.f32 %v159, %v160
      %v162 = vsel %vm140, %v119, 0.0
      %v163 = vadd.f32 %v161, %v162
      %v164 = vsel %vm140, %v120, 0.0
      %v165 = vadd.f32 %v163, %v164
      %v166 = vsel %vm140, %v121, 0.0
      %v167 = vadd.f32 %v165, %v166
      %v168 = vsel %vm140, %v122, 0.0
      %v169 = vadd.f32 %v167, %v168
      %v170 = vsel %vm140, %v123, 0.0
      %v171 = vadd.f32 %v169, %v170
      %v172 = vsel %vm140, %v124, 0.0
      %v173 = vadd.f32 %v171, %v172
      %v174 = vsel %vm140, %v125, 0.0
      %v175 = vadd.f32 %v173, %v174
      %v176 = vsel %vm140, %v126, 0.0
      %v177 = vadd.f32 %v175, %v176
      %v178 = vsel %vm140, %v127, 0.0
      %v179 = vadd.f32 %v177, %v178
      %v180 = vsel %vm140, %v128, 0.0
      %v181 = vadd.f32 %v179, %v180
      %v182 = vsel %vm140, %v129, 0.0
      %v183 = vadd.f32 %v181, %v182
      %v184 = vsel %vm140, %v130, 0.0
      %v185 = vadd.f32 %v183, %v184
      %v186 = vsel %vm140, %v131, 0.0
      %v187 = vadd.f32 %v185, %v186
      %v188 = vsel %vm140, %v132, 0.0
      %v189 = vadd.f32 %v187, %v188
      %v190 = vsel %vm140, %v133, 0.0
      %v191 = vadd.f32 %v189, %v190
      %v192 = vsel %vm140, %v134, 0.0
      %v193 = vadd.f32 %v191, %v192
      %v194 = vsel %vm140, %v135, 0.0
      %v195 = vadd.f32 %v193, %v194
      %v196 = vsel %vm140, %v136, 0.0
      %v197 = vadd.f32 %v195, %v196
      %v198 = vsel %vm140, %v137, 0.0
      %v199 = vadd.f32 %v197, %v198
      %v200 = vsel %vm140, %v138, 0.0
      %v201 = vadd.f32 %v199, %v200
      %v202 = vsel %vm140, %v139, 0.0
      %v203 = vadd.f32 %v201, %v202
      %v204 = vrot.slane %v203, 4
      %v205 = vadd.f32 %v203, %v204
      %v206 = vrot.slane %v205, 2
      %v207 = vadd.f32 %v205, %v206
      %v208 = vrot.slane %v207, 1
      %v209 = vadd.f32 %v207, %v208
      %v210 = vmul.f32 %v108, %v108
      %v211 = vmul.f32 %v109, %v109
      %v212 = vmul.f32 %v110, %v110
      %v213 = vmul.f32 %v111, %v111
      %v214 = vmul.f32 %v112, %v112
      %v215 = vmul.f32 %v113, %v113
      %v216 = vmul.f32 %v114, %v114
      %v217 = vmul.f32 %v115, %v115
      %v218 = vmul.f32 %v116, %v116
      %v219 = vmul.f32 %v117, %v117
      %v220 = vmul.f32 %v118, %v118
      %v221 = vmul.f32 %v119, %v119
      %v222 = vmul.f32 %v120, %v120
      %v223 = vmul.f32 %v121, %v121
      %v224 = vmul.f32 %v122, %v122
      %v225 = vmul.f32 %v123, %v123
      %v226 = vmul.f32 %v124, %v124
      %v227 = vmul.f32 %v125, %v125
      %v228 = vmul.f32 %v126, %v126
      %v229 = vmul.f32 %v127, %v127
      %v230 = vmul.f32 %v128, %v128
      %v231 = vmul.f32 %v129, %v129
      %v232 = vmul.f32 %v130, %v130
      %v233 = vmul.f32 %v131, %v131
      %v234 = vmul.f32 %v132, %v132
      %v235 = vmul.f32 %v133, %v133
      %v236 = vmul.f32 %v134, %v134
      %v237 = vmul.f32 %v135, %v135
      %v238 = vmul.f32 %v136, %v136
      %v239 = vmul.f32 %v137, %v137
      %v240 = vmul.f32 %v138, %v138
      %v241 = vmul.f32 %v139, %v139
      %v242 = vsel %vm140, %v210, 0.0
      %v243 = vsel %vm140, %v211, 0.0
      %v244 = vadd.f32 %v242, %v243
      %v245 = vsel %vm140, %v212, 0.0
      %v246 = vadd.f32 %v244, %v245
      %v247 = vsel %vm140, %v213, 0.0
      %v248 = vadd.f32 %v246, %v247
      %v249 = vsel %vm140, %v214, 0.0
      %v250 = vadd.f32 %v248, %v249
      %v251 = vsel %vm140, %v215, 0.0
      %v252 = vadd.f32 %v250, %v251
      %v253 = vsel %vm140, %v216, 0.0
      %v254 = vadd.f32 %v252, %v253
      %v255 = vsel %vm140, %v217, 0.0
      %v256 = vadd.f32 %v254, %v255
      %v257 = vsel %vm140, %v218, 0.0
      %v258 = vadd.f32 %v256, %v257
      %v259 = vsel %vm140, %v219, 0.0
      %v260 = vadd.f32 %v258, %v259
      %v261 = vsel %vm140, %v220, 0.0
      %v262 = vadd.f32 %v260, %v261
      %v263 = vsel %vm140, %v221, 0.0
      %v264 = vadd.f32 %v262, %v263
      %v265 = vsel %vm140, %v222, 0.0
      %v266 = vadd.f32 %v264, %v265
      %v267 = vsel %vm140, %v223, 0.0
      %v268 = vadd.f32 %v266, %v267
      %v269 = vsel %vm140, %v224, 0.0
      %v270 = vadd.f32 %v268, %v269
      %v271 = vsel %vm140, %v225, 0.0
      %v272 = vadd.f32 %v270, %v271
      %v273 = vsel %vm140, %v226, 0.0
      %v274 = vadd.f32 %v272, %v273
      %v275 = vsel %vm140, %v227, 0.0
      %v276 = vadd.f32 %v274, %v275
      %v277 = vsel %vm140, %v228, 0.0
      %v278 = vadd.f32 %v276, %v277
      %v279 = vsel %vm140, %v229, 0.0
      %v280 = vadd.f32 %v278, %v279
      %v281 = vsel %vm140, %v230, 0.0
      %v282 = vadd.f32 %v280, %v281
      %v283 = vsel %vm140, %v231, 0.0
      %v284 = vadd.f32 %v282, %v283
      %v285 = vsel %vm140, %v232, 0.0
      %v286 = vadd.f32 %v284, %v285
      %v287 = vsel %vm140, %v233, 0.0
      %v288 = vadd.f32 %v286, %v287
      %v289 = vsel %vm140, %v234, 0.0
      %v290 = vadd.f32 %v288, %v289
      %v291 = vsel %vm140, %v235, 0.0
      %v292 = vadd.f32 %v290, %v291
      %v293 = vsel %vm140, %v236, 0.0
      %v294 = vadd.f32 %v292, %v293
      %v295 = vsel %vm140, %v237, 0.0
      %v296 = vadd.f32 %v294, %v295
      %v297 = vsel %vm140, %v238, 0.0
      %v298 = vadd.f32 %v296, %v297
      %v299 = vsel %vm140, %v239, 0.0
      %v300 = vadd.f32 %v298, %v299
      %v301 = vsel %vm140, %v240, 0.0
      %v302 = vadd.f32 %v300, %v301
      %v303 = vsel %vm140, %v241, 0.0
      %v304 = vadd.f32 %v302, %v303
      %v305 = vrot.slane %v304, 4
      %v306 = vadd.f32 %v304, %v305
      %v307 = vrot.slane %v306, 2
      %v308 = vadd.f32 %v306, %v307
      %v309 = vrot.slane %v308, 1
      %v310 = vadd.f32 %v308, %v309
      %v311 = vld [vmem:[%s1] sm:$0x3]
      %vm312 = vcmask 1040384
      %v313 = vsel %vm312, %v209, %v310
      %v314 = vadd.f32 %v311, %v313
      %vm315 = vcmask 25600
      %316 = vst.msk [vmem:[%s1] sm:$0x3] %vm315, %v314
      // Predicated region
      $region29: #{preact_block_forward.3} parent=23 // pred_check
        %p317 = pneg %p51
      $region30: #{preact_block_forward.3} parent=23 // pred_check_branch
        %319 = sbr.rel (%p317) target = $region32
      $region31: #{preact_block_forward.3} parent=23 // pred_region
        _
      $region32: #{preact_block_forward.3} parent=23 // pred_fallthru
        _
      // Predicated region
      $region33: #{preact_block_forward.3} parent=23 // pred_check
        %p320 = pneg %p51
      $region34: #{preact_block_forward.3} parent=23 // pred_check_branch
        %322 = sbr.rel (%p320) target = $region36
      $region35: #{preact_block_forward.3} parent=23 // pred_region
        _
      $region36: #{preact_block_forward.3} parent=23 // pred_fallthru
        _
    $region24: #{preact_block_forward.3} parent=5 // pred_fallthru
      _
    %p323 = scmp.le.s32.totalorder 2, %s7
    // Predicated region
    $region37: #{preact_block_forward.3} parent=5 // pred_check
      %p324 = pneg %p323
    $region38: #{preact_block_forward.3} parent=5 // pred_check_branch
      %326 = sbr.rel (%p324) target = $region40
    $region39: #{preact_block_forward.3} parent=5 // pred_region
      %s327 = ssub.s32 %s7, 2
    $region40: #{preact_block_forward.3} parent=5 // pred_fallthru
      _
  $region6: #{preact_block_forward.3} parent=0 // loop_footer
    %s11 = sadd.s32 1, %s7
  $region7: #{preact_block_forward.3} parent=0 // loop_footer_branch
    %6 = sbr.rel target = $region3
  $region8: #{preact_block_forward.3} parent=0 // loop_exit
    _

// kernel: preact_block_forward.4
$region0: #{preact_block_forward.4}
  #allocation0 [shape = 'u32[]', space=smem, size = 0x4, offset = 0x4, fixed_abs, tag = 'smem constant byte address 0x4 - core index']
  #allocation1 [shape = 'u32[144,128]{1,0:T(1,128)}', space=vmem, size = 0x12000, scoped, tag = 'internal scratch']
  #allocation2 [shape = 'bf16[9,9,8]{2,1,0:T(8,128)(2,1)}', space=vmem, size = 0x9000, scoped, tag = 'scratch operand']
  #allocation3 [shape = 'bf16[9,9,8]{2,1,0:T(8,128)(2,1)}', space=vmem, size = 0x9000, scoped, tag = 'scratch operand']
  %s0 = inlined_call_operand.vmem [shape: f32[2,8,2,8,8], index: 0, kind: input, shape index: {}]
  %s1 = inlined_call_operand.vmem [shape: f32[1,8], index: 1, kind: input, shape index: {}]
  %s2 = inlined_call_operand.vmem [shape: f32[1,8], index: 2, kind: input, shape index: {}]
  %s3 = inlined_call_operand.vmem [shape: bf16[3,12,8], index: 3, kind: input, shape index: {}]
  %s4 = inlined_call_operand.vmem [shape: bf16[4,8], index: 4, kind: input, shape index: {}]
  %s5 = inlined_call_operand.vmem [shape: bf16[2,8,8,8], index: 5, kind: output, shape index: {0}]
  %s6 = inlined_call_operand.vmem [shape: bf16[2,8,8,8], index: 6, kind: output, shape index: {1}]
  %s7 = inlined_call_operand.vmem [shape: f32[2,2,8], index: 7, kind: output, shape index: {2}]
  %8 = xla_tuple %s5, %s6, %s7
  %s9 = sld [smem:[#allocation0]]
  $region69: #{preact_block_forward.4} parent=0
    _
  %s11 = ssub.s32 1, %s9
  %s12 = scalar_select 0, %s11, %s9
  loop: start=0, step=1, limit=4
  $region2: #{preact_block_forward.4} parent=0 // loop_pre_header
    _
  $region3: #{preact_block_forward.4} parent=0 // loop_header
    %s14 = sphi 0, %s18
    %p15 = scmp.ge.s32.totalorder %s14, 4
    %s24 = sphi 0, %s26
    %s27 = sphi 0, %s24
    %s28 = sphi 0, %s27
    %s44 = sphi 0, %s28
    %s48 = sphi 0, %s48
    %s50 = sphi 0, %s48
    %s51 = sphi 0, %s50
    %s65 = sphi 0, %s51
    %s69 = sphi 0, %s69
    %s71 = sphi 0, %s69
    %s72 = sphi 0, %s71
    %s86 = sphi 0, %s72
    %s90 = sphi 0, %s90
    %s92 = sphi 0, %s90
    %s93 = sphi 0, %s92
    %s107 = sphi 0, %s93
    %s111 = sphi 0, %s111
    %s113 = sphi 0, %s111
    %s114 = sphi 0, %s113
    %s128 = sphi 0, %s114
    %s134 = sphi 0, %s136
    %s137 = sphi 0, %s134
    %s138 = sphi 0, %s137
    %s154 = sphi 0, %s138
    %s160 = sphi 0, %s162
    %s163 = sphi 0, %s160
    %s164 = sphi 0, %s163
    %s180 = sphi 0, %s164
    %s186 = sphi 0, %s188
    %s189 = sphi 0, %s186
    %s190 = sphi 0, %s189
    %s206 = sphi 0, %s190
  $region4: #{preact_block_forward.4} parent=0 // loop_header_branch
    %17 = sbr.rel (%p15) target = $region8
  $region5: #{preact_block_forward.4} parent=0 // loop_body
    %s19 = ssub.s32 %s14, 1
    %s20 = ssub.s32 %s14, 2
    %s21 = sadd.s32 %s14, 1
    %s22 = ssub.s32 %s14, %s21
    %p23 = scmp.eq.s32.totalorder %s22, 0
    %s25 = sadd.s32 %s24, 1
    %s26 = scalar_select %p23, %s24, %s25
    %p29 = pneg %p23
    %p30 = scmp.eq.s32.totalorder %s14, 1
    %p31 = por %p29, %p30
    %p32 = scmp.ne.s32.totalorder %s24, %s27
    %p33 = scmp.eq.s32.totalorder %s14, 0
    %p34 = por %p32, %p33
    %p35 = scmp.ne.s32.totalorder %s24, %s27
    %p36 = scmp.eq.s32.totalorder %s19, 1
    %p37 = por %p35, %p36
    %p38 = scmp.ne.s32.totalorder %s27, %s28
    %p39 = scmp.eq.s32.totalorder %s19, 0
    %p40 = por %p38, %p39
    %p41 = scmp.ne.s32.totalorder %s27, %s28
    %p42 = scmp.eq.s32.totalorder %s20, 1
    %p43 = por %p41, %p42
    %p45 = scmp.ne.s32.totalorder %s28, %s44
    %p46 = scmp.eq.s32.totalorder %s20, 0
    %p47 = por %p45, %p46
    %s49 = sadd.s32 %s48, 1
    %p52 = scmp.eq.s32.totalorder %s14, 1
    %p53 = scmp.ne.s32.totalorder %s48, %s50
    %p54 = scmp.eq.s32.totalorder %s14, 0
    %p55 = por %p53, %p54
    %p56 = scmp.ne.s32.totalorder %s48, %s50
    %p57 = scmp.eq.s32.totalorder %s19, 1
    %p58 = por %p56, %p57
    %p59 = scmp.ne.s32.totalorder %s50, %s51
    %p60 = scmp.eq.s32.totalorder %s19, 0
    %p61 = por %p59, %p60
    %p62 = scmp.ne.s32.totalorder %s50, %s51
    %p63 = scmp.eq.s32.totalorder %s20, 1
    %p64 = por %p62, %p63
    %p66 = scmp.ne.s32.totalorder %s51, %s65
    %p67 = scmp.eq.s32.totalorder %s20, 0
    %p68 = por %p66, %p67
    %s70 = sadd.s32 %s69, 1
    %p73 = scmp.eq.s32.totalorder %s14, 1
    %p74 = scmp.ne.s32.totalorder %s69, %s71
    %p75 = scmp.eq.s32.totalorder %s14, 0
    %p76 = por %p74, %p75
    %p77 = scmp.ne.s32.totalorder %s69, %s71
    %p78 = scmp.eq.s32.totalorder %s19, 1
    %p79 = por %p77, %p78
    %p80 = scmp.ne.s32.totalorder %s71, %s72
    %p81 = scmp.eq.s32.totalorder %s19, 0
    %p82 = por %p80, %p81
    %p83 = scmp.ne.s32.totalorder %s71, %s72
    %p84 = scmp.eq.s32.totalorder %s20, 1
    %p85 = por %p83, %p84
    %p87 = scmp.ne.s32.totalorder %s72, %s86
    %p88 = scmp.eq.s32.totalorder %s20, 0
    %p89 = por %p87, %p88
    %s91 = sadd.s32 %s90, 1
    %p94 = scmp.eq.s32.totalorder %s14, 1
    %p95 = scmp.ne.s32.totalorder %s90, %s92
    %p96 = scmp.eq.s32.totalorder %s14, 0
    %p97 = por %p95, %p96
    %p98 = scmp.ne.s32.totalorder %s90, %s92
    %p99 = scmp.eq.s32.totalorder %s19, 1
    %p100 = por %p98, %p99
    %p101 = scmp.ne.s32.totalorder %s92, %s93
    %p102 = scmp.eq.s32.totalorder %s19, 0
    %p103 = por %p101, %p102
    %p104 = scmp.ne.s32.totalorder %s92, %s93
    %p105 = scmp.eq.s32.totalorder %s20, 1
    %p106 = por %p104, %p105
    %p108 = scmp.ne.s32.totalorder %s93, %s107
    %p109 = scmp.eq.s32.totalorder %s20, 0
    %p110 = por %p108, %p109
    %s112 = sadd.s32 %s111, 1
    %p115 = scmp.eq.s32.totalorder %s14, 1
    %p116 = scmp.ne.s32.totalorder %s111, %s113
    %p117 = scmp.eq.s32.totalorder %s14, 0
    %p118 = por %p116, %p117
    %p119 = scmp.ne.s32.totalorder %s111, %s113
    %p120 = scmp.eq.s32.totalorder %s19, 1
    %p121 = por %p119, %p120
    %p122 = scmp.ne.s32.totalorder %s113, %s114
    %p123 = scmp.eq.s32.totalorder %s19, 0
    %p124 = por %p122, %p123
    %p125 = scmp.ne.s32.totalorder %s113, %s114
    %p126 = scmp.eq.s32.totalorder %s20, 1
    %p127 = por %p125, %p126
    %p129 = scmp.ne.s32.totalorder %s114, %s128
    %p130 = scmp.eq.s32.totalorder %s20, 0
    %p131 = por %p129, %p130
    %s132 = ssub.s32 %s14, %s21
    %p133 = scmp.eq.s32.totalorder %s132, 0
    %s135 = sadd.s32 %s134, 1
    %s136 = scalar_select %p133, %s134, %s135
    %p139 = pneg %p133
    %p140 = scmp.eq.s32.totalorder %s14, 1
    %p141 = por %p139, %p140
    %p142 = scmp.ne.s32.totalorder %s134, %s137
    %p143 = scmp.eq.s32.totalorder %s14, 0
    %p144 = por %p142, %p143
    %p145 = scmp.ne.s32.totalorder %s134, %s137
    %p146 = scmp.eq.s32.totalorder %s19, 1
    %p147 = por %p145, %p146
    %p148 = scmp.ne.s32.totalorder %s137, %s138
    %p149 = scmp.eq.s32.totalorder %s19, 0
    %p150 = por %p148, %p149
    %p151 = scmp.ne.s32.totalorder %s137, %s138
    %p152 = scmp.eq.s32.totalorder %s20, 1
    %p153 = por %p151, %p152
    %p155 = scmp.ne.s32.totalorder %s138, %s154
    %p156 = scmp.eq.s32.totalorder %s20, 0
    %p157 = por %p155, %p156
    %s158 = ssub.s32 %s14, %s21
    %p159 = scmp.eq.s32.totalorder %s158, 0
    %s161 = sadd.s32 %s160, 1
    %s162 = scalar_select %p159, %s160, %s161
    %p165 = pneg %p159
    %p166 = scmp.eq.s32.totalorder %s14, 1
    %p167 = por %p165, %p166
    %p168 = scmp.ne.s32.totalorder %s160, %s163
    %p169 = scmp.eq.s32.totalorder %s14, 0
    %p170 = por %p168, %p169
    %p171 = scmp.ne.s32.totalorder %s160, %s163
    %p172 = scmp.eq.s32.totalorder %s19, 1
    %p173 = por %p171, %p172
    %p174 = scmp.ne.s32.totalorder %s163, %s164
    %p175 = scmp.eq.s32.totalorder %s19, 0
    %p176 = por %p174, %p175
    %p177 = scmp.ne.s32.totalorder %s163, %s164
    %p178 = scmp.eq.s32.totalorder %s20, 1
    %p179 = por %p177, %p178
    %p181 = scmp.ne.s32.totalorder %s164, %s180
    %p182 = scmp.eq.s32.totalorder %s20, 0
    %p183 = por %p181, %p182
    %s184 = ssub.s32 %s14, %s21
    %p185 = scmp.eq.s32.totalorder %s184, 0
    %s187 = sadd.s32 %s186, 1
    %s188 = scalar_select %p185, %s186, %s187
    %p191 = pneg %p185
    %p192 = scmp.eq.s32.totalorder %s14, 1
    %p193 = por %p191, %p192
    %p194 = scmp.ne.s32.totalorder %s186, %s189
    %p195 = scmp.eq.s32.totalorder %s14, 0
    %p196 = por %p194, %p195
    %p197 = scmp.ne.s32.totalorder %s186, %s189
    %p198 = scmp.eq.s32.totalorder %s19, 1
    %p199 = por %p197, %p198
    %p200 = scmp.ne.s32.totalorder %s189, %s190
    %p201 = scmp.eq.s32.totalorder %s19, 0
    %p202 = por %p200, %p201
    %p203 = scmp.ne.s32.totalorder %s189, %s190
    %p204 = scmp.eq.s32.totalorder %s20, 1
    %p205 = por %p203, %p204
    %p207 = scmp.ne.s32.totalorder %s190, %s206
    %p208 = scmp.eq.s32.totalorder %s20, 0
    %p209 = por %p207, %p208
    %p210 = scmp.le.s32.totalorder 1, %s14
    %p211 = scmp.lt.s32.totalorder %s14, 3
    %p212 = pnand %p210, %p211
    %p213 = pneg %p212
    // Predicated region
    $region9: #{preact_block_forward.4} parent=5 // pred_check
      _
    $region10: #{preact_block_forward.4} parent=5 // pred_check_branch
      %215 = sbr.rel (%p212) target = $region12
    $region11: #{preact_block_forward.4} parent=5 // pred_region
      %s216 = ssub.s32 %s14, 1
      // Predicated region
      $region13: #{preact_block_forward.4} parent=11 // pred_check
        %p217 = pneg %p61
      $region14: #{preact_block_forward.4} parent=11 // pred_check_branch
        %219 = sbr.rel (%p217) target = $region16
      $region15: #{preact_block_forward.4} parent=11 // pred_region
        _
      $region16: #{preact_block_forward.4} parent=11 // pred_fallthru
        _
      // Predicated region
      $region17: #{preact_block_forward.4} parent=11 // pred_check
        %p220 = pneg %p82
      $region18: #{preact_block_forward.4} parent=11 // pred_check_branch
        %222 = sbr.rel (%p220) target = $region20
      $region19: #{preact_block_forward.4} parent=11 // pred_region
        _
      $region20: #{preact_block_forward.4} parent=11 // pred_fallthru
        _
      // Predicated region
      $region21: #{preact_block_forward.4} parent=11 // pred_check
        %p223 = pneg %p103
      $region22: #{preact_block_forward.4} parent=11 // pred_check_branch
        %225 = sbr.rel (%p223) target = $region24
      $region23: #{preact_block_forward.4} parent=11 // pred_region
        _
      $region24: #{preact_block_forward.4} parent=11 // pred_fallthru
        _
      // Predicated region
      $region25: #{preact_block_forward.4} parent=11 // pred_check
        %p226 = pneg %p124
      $region26: #{preact_block_forward.4} parent=11 // pred_check_branch
        %228 = sbr.rel (%p226) target = $region28
      $region27: #{preact_block_forward.4} parent=11 // pred_region
        _
      $region28: #{preact_block_forward.4} parent=11 // pred_fallthru
        _
    $region12: #{preact_block_forward.4} parent=5 // pred_fallthru
      _
    %p229 = scmp.lt.s32.totalorder %s14, 2
    // Predicated region
    $region29: #{preact_block_forward.4} parent=5 // pred_check
      %p230 = pneg %p229
    $region30: #{preact_block_forward.4} parent=5 // pred_check_branch
      %232 = sbr.rel (%p230) target = $region32
    $region31: #{preact_block_forward.4} parent=5 // pred_region
      // Predicated region
      $region33: #{preact_block_forward.4} parent=31 // pred_check
        %p233 = pneg %p34
      $region34: #{preact_block_forward.4} parent=31 // pred_check_branch
        %235 = sbr.rel (%p233) target = $region36
      $region35: #{preact_block_forward.4} parent=31 // pred_region
        %p236 = scmp.lt.s32.totalorder %s14, 1
        %s237 = scalar_select %p236, %s14, 1
        %s238 = smul.addr %s237, 16
        %s239 = smul.addr %s238, 8
        %s240 = scalar_lea.vmem %s0, %s239
      $region36: #{preact_block_forward.4} parent=31 // pred_fallthru
        _
    $region32: #{preact_block_forward.4} parent=5 // pred_fallthru
      _
    %p241 = scmp.le.s32.totalorder 1, %s14
    %p242 = scmp.lt.s32.totalorder %s14, 3
    %p243 = pnand %p241, %p242
    %p244 = pneg %p243
    // Predicated region
    $region37: #{preact_block_forward.4} parent=5 // pred_check
      _
    $region38: #{preact_block_forward.4} parent=5 // pred_check_branch
      %246 = sbr.rel (%p243) target = $region40
    $region39: #{preact_block_forward.4} parent=5 // pred_region
      %s247 = ssub.s32 %s14, 1
      %p248 = scmp.lt.s32.totalorder %s19, 1
      %s249 = scalar_select %p248, %s19, 1
      %s250 = smul.addr %s249, 16
      %s251 = smul.addr %s250, 8
      %s252 = scalar_lea.vmem %s0, %s251
      %p253 = pneg %p40
      %p254 = pneg %p37
      %p255 = pneg %p61
      %p256 = pneg %p58
      %p257 = pneg %p82
      %p258 = pneg %p79
      %p259 = pneg %p103
      %p260 = pneg %p100
      %p261 = pneg %p124
      %p262 = pneg %p121
      %p263 = pneg %p150
      %p264 = pneg %p147
      %p265 = scmp.lt.s32.totalorder %s19, 1
      %s266 = scalar_select %p265, %s19, 1
      %s267 = smul.addr %s266, 8
      %s268 = smul.addr %s267, 4
      %s269 = scalar_lea.vmem %s5, %s268
      %p270 = pneg %p176
      %p271 = pneg %p173
      %p272 = scmp.lt.s32.totalorder %s19, 1
      %s273 = scalar_select %p272, %s19, 1
      %s274 = smul.addr %s273, 8
      %s275 = smul.addr %s274, 4
      %s276 = scalar_lea.vmem %s6, %s275
      %p277 = pneg %p202
      %p278 = pneg %p199
      %p279 = scmp.lt.s32.totalorder %s19, 1
      %s280 = scalar_select %p279, %s19, 1
      %s281 = smul.addr %s280, 2
      %s282 = scalar_lea.vmem %s7, %s281
      %p283 = scmp.lt.s32.totalorder %s19, 1
      %s284 = scalar_select %p283, %s19, 1
      %s285 = smul.addr %s284, 16
      %s286 = smul.addr %s285, 8
      %s287 = scalar_lea.vmem %s0, %s286
      %p288 = scmp.lt.s32.totalorder %s19, 1
      %s289 = scalar_select %p288, %s19, 1
      %s290 = smul.addr %s289, 8
      %s291 = smul.addr %s290, 4
      %s292 = scalar_lea.vmem %s5, %s291
      %p293 = scmp.lt.s32.totalorder %s19, 1
      %s294 = scalar_select %p293, %s19, 1
      %s295 = smul.addr %s294, 8
      %s296 = smul.addr %s295, 4
      %s297 = scalar_lea.vmem %s6, %s296
      %p298 = scmp.lt.s32.totalorder %s19, 1
      %s299 = scalar_select %p298, %s19, 1
      %s300 = smul.addr %s299, 2
      %s301 = scalar_lea.vmem %s7, %s300
      %v303 = vld [vmem:[%s1] sm:$0x1]
      %v304 = vld [vmem:[%s2] sm:$0x1]
      %v305 = vld [vmem:[%s287] sm:$0xff]
      %v306 = vld [vmem:[%s287 + $0x8] sm:$0xff]
      %v307 = vld [vmem:[%s287 + $0x10] sm:$0xff]
      %v308 = vld [vmem:[%s287 + $0x18] sm:$0xff]
      %v309 = vld [vmem:[%s287 + $0x20] sm:$0xff]
      %v310 = vld [vmem:[%s287 + $0x28] sm:$0xff]
      %v311 = vld [vmem:[%s287 + $0x30] sm:$0xff]
      %v312 = vld [vmem:[%s287 + $0x38] sm:$0xff]
      %v313 = vld [vmem:[%s287 + $0x40] sm:$0xff]
      %v314 = vld [vmem:[%s287 + $0x48] sm:$0xff]
      %v315 = vld [vmem:[%s287 + $0x50] sm:$0xff]
      %v316 = vld [vmem:[%s287 + $0x58] sm:$0xff]
      %v317 = vld [vmem:[%s287 + $0x60] sm:$0xff]
      %v318 = vld [vmem:[%s287 + $0x68] sm:$0xff]
      %v319 = vld [vmem:[%s287 + $0x70] sm:$0xff]
      %v320 = vld [vmem:[%s287 + $0x78] sm:$0xff]
      %v322 = vlaneseq
      %v323 = vshrl.u32 %v322, 7
      %v324 = vsub.s32 0, %v323
      %v325 = vrot.slane %v303, %v324
      %v327 = vmul.f32 %v305, %v325
      %v328 = vmul.f32 %v306, %v325
      %v329 = vmul.f32 %v307, %v325
      %v330 = vmul.f32 %v308, %v325
      %v331 = vmul.f32 %v309, %v325
      %v332 = vmul.f32 %v310, %v325
      %v333 = vmul.f32 %v311, %v325
      %v334 = vmul.f32 %v312, %v325
      %v335 = vmul.f32 %v313, %v325
      %v336 = vmul.f32 %v314, %v325
      %v337 = vmul.f32 %v315, %v325
      %v338 = vmul.f32 %v316, %v325
      %v339 = vmul.f32 %v317, %v325
      %v340 = vmul.f32 %v318, %v325
      %v341 = vmul.f32 %v319, %v325
      %v342 = vmul.f32 %v320, %v325
      %v344 = vlaneseq
      %v345 = vshrl.u32 %v344, 7
      %v346 = vsub.s32 0, %v345
      %v347 = vrot.slane %v304, %v346
      %v349 = vadd.f32 %v327, %v347
      %v350 = vadd.f32 %v328, %v347
      %v351 = vadd.f32 %v329, %v347
      %v352 = vadd.f32 %v330, %v347
      %v353 = vadd.f32 %v331, %v347
      %v354 = vadd.f32 %v332, %v347
      %v355 = vadd.f32 %v333, %v347
      %v356 = vadd.f32 %v334, %v347
      %v357 = vadd.f32 %v335, %v347
      %v358 = vadd.f32 %v336, %v347
      %v359 = vadd.f32 %v337, %v347
      %v360 = vadd.f32 %v338, %v347
      %v361 = vadd.f32 %v339, %v347
      %v362 = vadd.f32 %v340, %v347
      %v363 = vadd.f32 %v341, %v347
      %v364 = vadd.f32 %v342, %v347
      %v365 = vmax.f32 %v349, 0.0
      %v366 = vmax.f32 %v350, 0.0
      %v367 = vmax.f32 %v351, 0.0
      %v368 = vmax.f32 %v352, 0.0
      %v369 = vmax.f32 %v353, 0.0
      %v370 = vmax.f32 %v354, 0.0
      %v371 = vmax.f32 %v355, 0.0
      %v372 = vmax.f32 %v356, 0.0
      %v373 = vmax.f32 %v357, 0.0
      %v374 = vmax.f32 %v358, 0.0
      %v375 = vmax.f32 %v359, 0.0
      %v376 = vmax.f32 %v360, 0.0
      %v377 = vmax.f32 %v361, 0.0
      %v378 = vmax.f32 %v362, 0.0
      %v379 = vmax.f32 %v363, 0.0
      %v380 = vmax.f32 %v364, 0.0
      %v381 = vpack.c.bf16 %v365, %v365
      %v382 = vpack.c.bf16 %v366, %v366
      %v383 = vpack.c.bf16 %v367, %v367
      %v384 = vpack.c.bf16 %v368, %v368
      %v385 = vpack.c.bf16 %v369, %v369
      %v386 = vpack.c.bf16 %v370, %v370
      %v387 = vpack.c.bf16 %v371, %v371
      %v388 = vpack.c.bf16 %v372, %v372
      %v389 = vpack.c.bf16 %v373, %v373
      %v390 = vpack.c.bf16 %v374, %v374
      %v391 = vpack.c.bf16 %v375, %v375
      %v392 = vpack.c.bf16 %v376, %v376
      %v393 = vpack.c.bf16 %v377, %v377
      %v394 = vpack.c.bf16 %v378, %v378
      %v395 = vpack.c.bf16 %v379, %v379
      %v396 = vpack.c.bf16 %v380, %v380
      %vm397 = vcmask 60416
      %398 = vst.msk [vmem:[#allocation2] sm:$0xf] %vm397, 0
      %vm399 = vcmask 57344
      %vm400 = vsmask.f32 256
      %vm401 = vmand %vm399, %vm400
      %v402 = vld [vmem:[#allocation2 + $0x4] sm:$0x1]
      %v403 = vsel %vm401, 0, %v402
      %404 = vst [vmem:[#allocation2 + $0x4] sm:$0x1] %v403
      %v405 = vld [vmem:[#allocation2] sm:$0x1]
      %v406 = vsel %vm401, 0, %v405
      %407 = vst [vmem:[#allocation2] sm:$0x1] %v406
      %v408 = vld [vmem:[#allocation2 + $0x8] sm:$0x1]
      %v409 = vsel %vm401, 0, %v408
      %410 = vst [vmem:[#allocation2 + $0x8] sm:$0x1] %v409
      %v411 = vld [vmem:[#allocation2 + $0x10] sm:$0x1]
      %v412 = vsel %vm401, 0, %v411
      %413 = vst [vmem:[#allocation2 + $0x10] sm:$0x1] %v412
      %v414 = vld [vmem:[#allocation2 + $0x18] sm:$0x1]
      %v415 = vsel %vm401, 0, %v414
      %416 = vst [vmem:[#allocation2 + $0x18] sm:$0x1] %v415
      %v417 = vld [vmem:[#allocation2 + $0x20] sm:$0x1]
      %v418 = vsel %vm401, 0, %v417
      %419 = vst [vmem:[#allocation2 + $0x20] sm:$0x1] %v418
      %v420 = vld [vmem:[#allocation2 + $0x28] sm:$0x1]
      %v421 = vsel %vm401, 0, %v420
      %422 = vst [vmem:[#allocation2 + $0x28] sm:$0x1] %v421
      %v423 = vld [vmem:[#allocation2 + $0x30] sm:$0x1]
      %v424 = vsel %vm401, 0, %v423
      %425 = vst [vmem:[#allocation2 + $0x30] sm:$0x1] %v424
      %v426 = vld [vmem:[#allocation2 + $0x38] sm:$0x1]
      %v427 = vsel %vm401, 0, %v426
      %428 = vst [vmem:[#allocation2 + $0x38] sm:$0x1] %v427
      %v429 = vld [vmem:[#allocation2 + $0x40] sm:$0x1]
      %v430 = vsel %vm401, 0, %v429
      %431 = vst [vmem:[#allocation2 + $0x40] sm:$0x1] %v430
      %v440 = vunpack.c.l.b16 %v381
      %v441 = vunpack.c.l.b16 %v383
      %v442 = vunpack.c.l.b16 %v385
      %v443 = vunpack.c.l.b16 %v387
      %v444 = vunpack.c.l.b16 %v389
      %v445 = vunpack.c.l.b16 %v391
      %v446 = vunpack.c.l.b16 %v393
      %v447 = vunpack.c.l.b16 %v395
      %v448 = vpack.c.b16 %v440, %v440
      %v449 = vpack.c.b16 %v441, %v441
      %v450 = vpack.c.b16 %v442, %v442
      %v451 = vpack.c.b16 %v443, %v443
      %v452 = vpack.c.b16 %v444, %v444
      %v453 = vpack.c.b16 %v445, %v445
      %v454 = vpack.c.b16 %v446, %v446
      %v455 = vpack.c.b16 %v447, %v447
      %v457 = vshrl.u32 %v448, 16
      %v459 = vrot.slane %v457, 7
      %v460 = vshll.u32 %v448, 16
      %v462 = vor.u32 %v459, %v460
      %v463 = vrot.slane %v459, 4
      %v465 = vshrl.u32 %v449, 16
      %v467 = vrot.slane %v465, 7
      %v468 = vshll.u32 %v449, 16
      %v470 = vor.u32 %v467, %v468
      %v471 = vrot.slane %v467, 4
      %v473 = vshrl.u32 %v450, 16
      %v475 = vrot.slane %v473, 7
      %v476 = vshll.u32 %v450, 16
      %v478 = vor.u32 %v475, %v476
      %v479 = vrot.slane %v475, 4
      %v481 = vshrl.u32 %v451, 16
      %v483 = vrot.slane %v481, 7
      %v484 = vshll.u32 %v451, 16
      %v486 = vor.u32 %v483, %v484
      %v487 = vrot.slane %v483, 4
      %v489 = vshrl.u32 %v452, 16
      %v491 = vrot.slane %v489, 7
      %v492 = vshll.u32 %v452, 16
      %v494 = vor.u32 %v491, %v492
      %v495 = vrot.slane %v491, 4
      %v497 = vshrl.u32 %v453, 16
      %v499 = vrot.slane %v497, 7
      %v500 = vshll.u32 %v453, 16
      %v502 = vor.u32 %v499, %v500
      %v503 = vrot.slane %v499, 4
      %v505 = vshrl.u32 %v454, 16
      %v507 = vrot.slane %v505, 7
      %v508 = vshll.u32 %v454, 16
      %v510 = vor.u32 %v507, %v508
      %v511 = vrot.slane %v507, 4
      %v513 = vshrl.u32 %v455, 16
      %v515 = vrot.slane %v513, 7
      %v516 = vshll.u32 %v455, 16
      %v518 = vor.u32 %v515, %v516
      %v519 = vrot.slane %v515, 4
      %s536 = scalar_lea.vmem [#allocation2], 8
      %vm537 = vcmask 60416
      %vm538 = vsmask.f32 7938
      %vm539 = vmand %vm537, %vm538
      %v540 = vld [vmem:[%s536] sm:$0xf]
      %v541 = vsel %vm539, %v462, %v540
      %542 = vst [vmem:[%s536] sm:$0xf] %v541
      %v543 = vld [vmem:[%s536 + $0x4] sm:$0x1]
      %v544 = vsel %vm401, %v463, %v543
      %545 = vst [vmem:[%s536 + $0x4] sm:$0x1] %v544
      %v546 = vld [vmem:[%s536 + $0x8] sm:$0xf]
      %v547 = vsel %vm539, %v470, %v546
      %548 = vst [vmem:[%s536 + $0x8] sm:$0xf] %v547
      %v549 = vld [vmem:[%s536 + $0xc] sm:$0x1]
      %v550 = vsel %vm401, %v471, %v549
      %551 = vst [vmem:[%s536 + $0xc] sm:$0x1] %v550
      %v552 = vld [vmem:[%s536 + $0x10] sm:$0xf]
      %v553 = vsel %vm539, %v478, %v552
      %554 = vst [vmem:[%s536 + $0x10] sm:$0xf] %v553
      %v555 = vld [vmem:[%s536 + $0x14] sm:$0x1]
      %v556 = vsel %vm401, %v479, %v555
      %557 = vst [vmem:[%s536 + $0x14] sm:$0x1] %v556
      %v558 = vld [vmem:[%s536 + $0x18] sm:$0xf]
      %v559 = vsel %vm539, %v486, %v558
      %560 = vst [vmem:[%s536 + $0x18] sm:$0xf] %v559
      %v561 = vld [vmem:[%s536 + $0x1c] sm:$0x1]
      %v562 = vsel %vm401, %v487, %v561
      %563 = vst [vmem:[%s536 + $0x1c] sm:$0x1] %v562
      %v564 = vld [vmem:[%s536 + $0x20] sm:$0xf]
      %v565 = vsel %vm539, %v494, %v564
      %566 = vst [vmem:[%s536 + $0x20] sm:$0xf] %v565
      %v567 = vld [vmem:[%s536 + $0x24] sm:$0x1]
      %v568 = vsel %vm401, %v495, %v567
      %569 = vst [vmem:[%s536 + $0x24] sm:$0x1] %v568
      %v570 = vld [vmem:[%s536 + $0x28] sm:$0xf]
      %v571 = vsel %vm539, %v502, %v570
      %572 = vst [vmem:[%s536 + $0x28] sm:$0xf] %v571
      %v573 = vld [vmem:[%s536 + $0x2c] sm:$0x1]
      %v574 = vsel %vm401, %v503, %v573
      %575 = vst [vmem:[%s536 + $0x2c] sm:$0x1] %v574
      %v576 = vld [vmem:[%s536 + $0x30] sm:$0xf]
      %v577 = vsel %vm539, %v510, %v576
      %578 = vst [vmem:[%s536 + $0x30] sm:$0xf] %v577
      %v579 = vld [vmem:[%s536 + $0x34] sm:$0x1]
      %v580 = vsel %vm401, %v511, %v579
      %581 = vst [vmem:[%s536 + $0x34] sm:$0x1] %v580
      %v582 = vld [vmem:[%s536 + $0x38] sm:$0xf]
      %v583 = vsel %vm539, %v518, %v582
      %584 = vst [vmem:[%s536 + $0x38] sm:$0xf] %v583
      %v585 = vld [vmem:[%s536 + $0x3c] sm:$0x1]
      %v586 = vsel %vm401, %v519, %v585
      %587 = vst [vmem:[%s536 + $0x3c] sm:$0x1] %v586
      %588 = vst.msk [vmem:[#allocation3] sm:$0xf] %vm397, 0
      %v589 = vld [vmem:[#allocation3 + $0x4] sm:$0x1]
      %v590 = vsel %vm401, 0, %v589
      %591 = vst [vmem:[#allocation3 + $0x4] sm:$0x1] %v590
      %v592 = vld [vmem:[#allocation3] sm:$0x1]
      %v593 = vsel %vm401, 0, %v592
      %594 = vst [vmem:[#allocation3] sm:$0x1] %v593
      %v595 = vld [vmem:[#allocation3 + $0x8] sm:$0x1]
      %v596 = vsel %vm401, 0, %v595
      %597 = vst [vmem:[#allocation3 + $0x8] sm:$0x1] %v596
      %v598 = vld [vmem:[#allocation3 + $0x10] sm:$0x1]
      %v599 = vsel %vm401, 0, %v598
      %600 = vst [vmem:[#allocation3 + $0x10] sm:$0x1] %v599
      %v601 = vld [vmem:[#allocation3 + $0x18] sm:$0x1]
      %v602 = vsel %vm401, 0, %v601
      %603 = vst [vmem:[#allocation3 + $0x18] sm:$0x1] %v602
      %v604 = vld [vmem:[#allocation3 + $0x20] sm:$0x1]
      %v605 = vsel %vm401, 0, %v604
      %606 = vst [vmem:[#allocation3 + $0x20] sm:$0x1] %v605
      %v607 = vld [vmem:[#allocation3 + $0x28] sm:$0x1]
      %v608 = vsel %vm401, 0, %v607
      %609 = vst [vmem:[#allocation3 + $0x28] sm:$0x1] %v608
      %v610 = vld [vmem:[#allocation3 + $0x30] sm:$0x1]
      %v611 = vsel %vm401, 0, %v610
      %612 = vst [vmem:[#allocation3 + $0x30] sm:$0x1] %v611
      %v613 = vld [vmem:[#allocation3 + $0x38] sm:$0x1]
      %v614 = vsel %vm401, 0, %v613
      %615 = vst [vmem:[#allocation3 + $0x38] sm:$0x1] %v614
      %v616 = vld [vmem:[#allocation3 + $0x40] sm:$0x1]
      %v617 = vsel %vm401, 0, %v616
      %618 = vst [vmem:[#allocation3 + $0x40] sm:$0x1] %v617
      %v627 = vunpack.c.l.b16 %v382
      %v628 = vunpack.c.l.b16 %v384
      %v629 = vunpack.c.l.b16 %v386
      %v630 = vunpack.c.l.b16 %v388
      %v631 = vunpack.c.l.b16 %v390
      %v632 = vunpack.c.l.b16 %v392
      %v633 = vunpack.c.l.b16 %v394
      %v634 = vunpack.c.l.b16 %v396
      %v635 = vpack.c.b16 %v627, %v627
      %v636 = vpack.c.b16 %v628, %v628
      %v637 = vpack.c.b16 %v629, %v629
      %v638 = vpack.c.b16 %v630, %v630
      %v639 = vpack.c.b16 %v631, %v631
      %v640 = vpack.c.b16 %v632, %v632
      %v641 = vpack.c.b16 %v633, %v633
      %v642 = vpack.c.b16 %v634, %v634
      %v644 = vshrl.u32 %v635, 16
      %v646 = vrot.slane %v644, 7
      %v647 = vshll.u32 %v635, 16
      %v649 = vor.u32 %v646, %v647
      %v650 = vrot.slane %v646, 4
      %v652 = vshrl.u32 %v636, 16
      %v654 = vrot.slane %v652, 7
      %v655 = vshll.u32 %v636, 16
      %v657 = vor.u32 %v654, %v655
      %v658 = vrot.slane %v654, 4
      %v660 = vshrl.u32 %v637, 16
      %v662 = vrot.slane %v660, 7
      %v663 = vshll.u32 %v637, 16
      %v665 = vor.u32 %v662, %v663
      %v666 = vrot.slane %v662, 4
      %v668 = vshrl.u32 %v638, 16
      %v670 = vrot.slane %v668, 7
      %v671 = vshll.u32 %v638, 16
      %v673 = vor.u32 %v670, %v671
      %v674 = vrot.slane %v670, 4
      %v676 = vshrl.u32 %v639, 16
      %v678 = vrot.slane %v676, 7
      %v679 = vshll.u32 %v639, 16
      %v681 = vor.u32 %v678, %v679
      %v682 = vrot.slane %v678, 4
      %v684 = vshrl.u32 %v640, 16
      %v686 = vrot.slane %v684, 7
      %v687 = vshll.u32 %v640, 16
      %v689 = vor.u32 %v686, %v687
      %v690 = vrot.slane %v686, 4
      %v692 = vshrl.u32 %v641, 16
      %v694 = vrot.slane %v692, 7
      %v695 = vshll.u32 %v641, 16
      %v697 = vor.u32 %v694, %v695
      %v698 = vrot.slane %v694, 4
      %v700 = vshrl.u32 %v642, 16
      %v702 = vrot.slane %v700, 7
      %v703 = vshll.u32 %v642, 16
      %v705 = vor.u32 %v702, %v703
      %v706 = vrot.slane %v702, 4
      %s723 = scalar_lea.vmem [#allocation3], 8
      %v724 = vld [vmem:[%s723] sm:$0xf]
      %v725 = vsel %vm539, %v649, %v724
      %726 = vst [vmem:[%s723] sm:$0xf] %v725
      %v727 = vld [vmem:[%s723 + $0x4] sm:$0x1]
      %v728 = vsel %vm401, %v650, %v727
      %729 = vst [vmem:[%s723 + $0x4] sm:$0x1] %v728
      %v730 = vld [vmem:[%s723 + $0x8] sm:$0xf]
      %v731 = vsel %vm539, %v657, %v730
      %732 = vst [vmem:[%s723 + $0x8] sm:$0xf] %v731
      %v733 = vld [vmem:[%s723 + $0xc] sm:$0x1]
      %v734 = vsel %vm401, %v658, %v733
      %735 = vst [vmem:[%s723 + $0xc] sm:$0x1] %v734
      %v736 = vld [vmem:[%s723 + $0x10] sm:$0xf]
      %v737 = vsel %vm539, %v665, %v736
      %738 = vst [vmem:[%s723 + $0x10] sm:$0xf] %v737
      %v739 = vld [vmem:[%s723 + $0x14] sm:$0x1]
      %v740 = vsel %vm401, %v666, %v739
      %741 = vst [vmem:[%s723 + $0x14] sm:$0x1] %v740
      %v742 = vld [vmem:[%s723 + $0x18] sm:$0xf]
      %v743 = vsel %vm539, %v673, %v742
      %744 = vst [vmem:[%s723 + $0x18] sm:$0xf] %v743
      %v745 = vld [vmem:[%s723 + $0x1c] sm:$0x1]
      %v746 = vsel %vm401, %v674, %v745
      %747 = vst [vmem:[%s723 + $0x1c] sm:$0x1] %v746
      %v748 = vld [vmem:[%s723 + $0x20] sm:$0xf]
      %v749 = vsel %vm539, %v681, %v748
      %750 = vst [vmem:[%s723 + $0x20] sm:$0xf] %v749
      %v751 = vld [vmem:[%s723 + $0x24] sm:$0x1]
      %v752 = vsel %vm401, %v682, %v751
      %753 = vst [vmem:[%s723 + $0x24] sm:$0x1] %v752
      %v754 = vld [vmem:[%s723 + $0x28] sm:$0xf]
      %v755 = vsel %vm539, %v689, %v754
      %756 = vst [vmem:[%s723 + $0x28] sm:$0xf] %v755
      %v757 = vld [vmem:[%s723 + $0x2c] sm:$0x1]
      %v758 = vsel %vm401, %v690, %v757
      %759 = vst [vmem:[%s723 + $0x2c] sm:$0x1] %v758
      %v760 = vld [vmem:[%s723 + $0x30] sm:$0xf]
      %v761 = vsel %vm539, %v697, %v760
      %762 = vst [vmem:[%s723 + $0x30] sm:$0xf] %v761
      %v763 = vld [vmem:[%s723 + $0x34] sm:$0x1]
      %v764 = vsel %vm401, %v698, %v763
      %765 = vst [vmem:[%s723 + $0x34] sm:$0x1] %v764
      %v766 = vld [vmem:[%s723 + $0x38] sm:$0xf]
      %v767 = vsel %vm539, %v705, %v766
      %768 = vst [vmem:[%s723 + $0x38] sm:$0xf] %v767
      %v769 = vld [vmem:[%s723 + $0x3c] sm:$0x1]
      %v770 = vsel %vm401, %v706, %v769
      %771 = vst [vmem:[%s723 + $0x3c] sm:$0x1] %v770
      %v772 = vld [vmem:[#allocation3] sm:$0xf]
      %v773 = vld [vmem:[#allocation3 + $0x4] sm:$0x1]
      %v774 = vld [vmem:[#allocation3 + $0x8] sm:$0xf]
      %v775 = vld [vmem:[#allocation3 + $0xc] sm:$0x1]
      %v776 = vld [vmem:[#allocation3 + $0x10] sm:$0xf]
      %v777 = vld [vmem:[#allocation3 + $0x14] sm:$0x1]
      %v778 = vld [vmem:[#allocation3 + $0x18] sm:$0xf]
      %v779 = vld [vmem:[#allocation3 + $0x1c] sm:$0x1]
      %v780 = vld [vmem:[#allocation3 + $0x20] sm:$0xf]
      %v781 = vld [vmem:[#allocation3 + $0x24] sm:$0x1]
      %v782 = vld [vmem:[#allocation3 + $0x28] sm:$0xf]
      %v783 = vld [vmem:[#allocation3 + $0x2c] sm:$0x1]
      %v784 = vld [vmem:[#allocation3 + $0x30] sm:$0xf]
      %v785 = vld [vmem:[#allocation3 + $0x34] sm:$0x1]
      %v786 = vld [vmem:[#allocation3 + $0x38] sm:$0xf]
      %v787 = vld [vmem:[#allocation3 + $0x3c] sm:$0x1]
      %v796 = vunpack.c.l.b16 %v772
      %v797 = vunpack.c.l.b16 %v774
      %v798 = vunpack.c.l.b16 %v776
      %v799 = vunpack.c.l.b16 %v778
      %v800 = vunpack.c.l.b16 %v780
      %v801 = vunpack.c.l.b16 %v782
      %v802 = vunpack.c.l.b16 %v784
      %v803 = vunpack.c.l.b16 %v786
      %v804 = vpack.c.b16 %v796, %v796
      %v805 = vpack.c.b16 %v797, %v797
      %v806 = vpack.c.b16 %v798, %v798
      %v807 = vpack.c.b16 %v799, %v799
      %v808 = vpack.c.b16 %v800, %v800
      %v809 = vpack.c.b16 %v801, %v801
      %v810 = vpack.c.b16 %v802, %v802
      %v811 = vpack.c.b16 %v803, %v803
      %812 = vrot.lane.b32.xlu0 %v804, 124
      %v813 = vpop.permute.xlu0 %812
      %814 = vrot.lane.b32.xlu0 %v805, 124
      %v815 = vpop.permute.xlu0 %814
      %816 = vrot.lane.b32.xlu0 %v806, 124
      %v817 = vpop.permute.xlu0 %816
      %818 = vrot.lane.b32.xlu0 %v807, 124
      %v819 = vpop.permute.xlu0 %818
      %820 = vrot.lane.b32.xlu0 %v808, 124
      %v821 = vpop.permute.xlu0 %820
      %822 = vrot.lane.b32.xlu0 %v809, 124
      %v823 = vpop.permute.xlu0 %822
      %824 = vrot.lane.b32.xlu0 %v810, 124
      %v825 = vpop.permute.xlu0 %824
      %826 = vrot.lane.b32.xlu0 %v811, 124
      %v827 = vpop.permute.xlu0 %826
      %v836 = vunpack.c.l.b16 %v773
      %v837 = vunpack.c.l.b16 %v775
      %v838 = vunpack.c.l.b16 %v777
      %v839 = vunpack.c.l.b16 %v779
      %v840 = vunpack.c.l.b16 %v781
      %v841 = vunpack.c.l.b16 %v783
      %v842 = vunpack.c.l.b16 %v785
      %v843 = vunpack.c.l.b16 %v787
      %v844 = vpack.c.b16 %v836, %v796
      %v845 = vpack.c.b16 %v837, %v797
      %v846 = vpack.c.b16 %v838, %v798
      %v847 = vpack.c.b16 %v839, %v799
      %v848 = vpack.c.b16 %v840, %v800
      %v849 = vpack.c.b16 %v841, %v801
      %v850 = vpack.c.b16 %v842, %v802
      %v851 = vpack.c.b16 %v843, %v803
      %v853 = vshrl.u32 %v844, 16
      %v855 = vshll.u32 %v844, 16
      %v857 = vrot.slane %v855, 1
      %v858 = vor.u32 %v853, %v857
      %v860 = vshrl.u32 %v845, 16
      %v862 = vshll.u32 %v845, 16
      %v864 = vrot.slane %v862, 1
      %v865 = vor.u32 %v860, %v864
      %v867 = vshrl.u32 %v846, 16
      %v869 = vshll.u32 %v846, 16
      %v871 = vrot.slane %v869, 1
      %v872 = vor.u32 %v867, %v871
      %v874 = vshrl.u32 %v847, 16
      %v876 = vshll.u32 %v847, 16
      %v878 = vrot.slane %v876, 1
      %v879 = vor.u32 %v874, %v878
      %v881 = vshrl.u32 %v848, 16
      %v883 = vshll.u32 %v848, 16
      %v885 = vrot.slane %v883, 1
      %v886 = vor.u32 %v881, %v885
      %v888 = vshrl.u32 %v849, 16
      %v890 = vshll.u32 %v849, 16
      %v892 = vrot.slane %v890, 1
      %v893 = vor.u32 %v888, %v892
      %v895 = vshrl.u32 %v850, 16
      %v897 = vshll.u32 %v850, 16
      %v899 = vrot.slane %v897, 1
      %v900 = vor.u32 %v895, %v899
      %v902 = vshrl.u32 %v851, 16
      %v904 = vshll.u32 %v851, 16
      %v906 = vrot.slane %v904, 1
      %v907 = vor.u32 %v902, %v906
      %908 = vrot.lane.b32.xlu0 %v858, 4
      %v909 = vpop.permute.xlu0 %908
      %910 = vrot.lane.b32.xlu0 %v865, 4
      %v911 = vpop.permute.xlu0 %910
      %912 = vrot.lane.b32.xlu0 %v872, 4
      %v913 = vpop.permute.xlu0 %912
      %914 = vrot.lane.b32.xlu0 %v879, 4
      %v915 = vpop.permute.xlu0 %914
      %916 = vrot.lane.b32.xlu0 %v886, 4
      %v917 = vpop.permute.xlu0 %916
      %918 = vrot.lane.b32.xlu0 %v893, 4
      %v919 = vpop.permute.xlu0 %918
      %920 = vrot.lane.b32.xlu0 %v900, 4
      %v921 = vpop.permute.xlu0 %920
      %922 = vrot.lane.b32.xlu0 %v907, 4
      %v923 = vpop.permute.xlu0 %922
      %vm924 = vcmask 31744
      %v927 = vsel %vm924, %v813, %v909
      %v930 = vsel %vm924, %v815, %v911
      %v933 = vsel %vm924, %v817, %v913
      %v936 = vsel %vm924, %v819, %v915
      %v939 = vsel %vm924, %v821, %v917
      %v942 = vsel %vm924, %v823, %v919
      %v945 = vsel %vm924, %v825, %v921
      %v948 = vsel %vm924, %v827, %v923
      %vm949 = vcmask 64512
      %v950 = vsel %vm949, %v927, %v909
      %v951 = vsel %vm949, %v930, %v911
      %v952 = vsel %vm949, %v933, %v913
      %v953 = vsel %vm949, %v936, %v915
      %v954 = vsel %vm949, %v939, %v917
      %v955 = vsel %vm949, %v942, %v919
      %v956 = vsel %vm949, %v945, %v921
      %v957 = vsel %vm949, %v948, %v923
      %v958 = vld [vmem:[%s3] sm:$0xf]
      %v959 = vld [vmem:[%s3 + $0x4] sm:$0x3]
      %v960 = vld [vmem:[%s536] sm:$0xf]
      %v961 = vld [vmem:[%s536 + $0x4] sm:$0x1]
      %v962 = vld [vmem:[%s536 + $0x8] sm:$0xf]
      %v963 = vld [vmem:[%s536 + $0xc] sm:$0x1]
      %v964 = vld [vmem:[%s536 + $0x10] sm:$0xf]
      %v965 = vld [vmem:[%s536 + $0x14] sm:$0x1]
      %v966 = vld [vmem:[%s536 + $0x18] sm:$0xf]
      %v967 = vld [vmem:[%s536 + $0x1c] sm:$0x1]
      %v968 = vld [vmem:[%s536 + $0x20] sm:$0xf]
      %v969 = vld [vmem:[%s536 + $0x24] sm:$0x1]
      %v970 = vld [vmem:[%s536 + $0x28] sm:$0xf]
      %v971 = vld [vmem:[%s536 + $0x2c] sm:$0x1]
      %v972 = vld [vmem:[%s536 + $0x30] sm:$0xf]
      %v973 = vld [vmem:[%s536 + $0x34] sm:$0x1]
      %v974 = vld [vmem:[%s536 + $0x38] sm:$0xf]
      %v975 = vld [vmem:[%s536 + $0x3c] sm:$0x1]
      %v984 = vunpack.c.l.b16 %v960
      %v985 = vunpack.c.l.b16 %v962
      %v986 = vunpack.c.l.b16 %v964
      %v987 = vunpack.c.l.b16 %v966
      %v988 = vunpack.c.l.b16 %v968
      %v989 = vunpack.c.l.b16 %v970
      %v990 = vunpack.c.l.b16 %v972
      %v991 = vunpack.c.l.b16 %v974
      %v992 = vpack.c.b16 %v984, %v984
      %v993 = vpack.c.b16 %v985, %v985
      %v994 = vpack.c.b16 %v986, %v986
      %v995 = vpack.c.b16 %v987, %v987
      %v996 = vpack.c.b16 %v988, %v988
      %v997 = vpack.c.b16 %v989, %v989
      %v998 = vpack.c.b16 %v990, %v990
      %v999 = vpack.c.b16 %v991, %v991
      %1000 = vrot.lane.b32.xlu0 %v992, 124
      %v1001 = vpop.permute.xlu0 %1000
      %1002 = vrot.lane.b32.xlu0 %v993, 124
      %v1003 = vpop.permute.xlu0 %1002
      %1004 = vrot.lane.b32.xlu0 %v994, 124
      %v1005 = vpop.permute.xlu0 %1004
      %1006 = vrot.lane.b32.xlu0 %v995, 124
      %v1007 = vpop.permute.xlu0 %1006
      %1008 = vrot.lane.b32.xlu0 %v996, 124
      %v1009 = vpop.permute.xlu0 %1008
      %1010 = vrot.lane.b32.xlu0 %v997, 124
      %v1011 = vpop.permute.xlu0 %1010
      %1012 = vrot.lane.b32.xlu0 %v998, 124
      %v1013 = vpop.permute.xlu0 %1012
      %1014 = vrot.lane.b32.xlu0 %v999, 124
      %v1015 = vpop.permute.xlu0 %1014
      %v1024 = vunpack.c.l.b16 %v961
      %v1025 = vunpack.c.l.b16 %v963
      %v1026 = vunpack.c.l.b16 %v965
      %v1027 = vunpack.c.l.b16 %v967
      %v1028 = vunpack.c.l.b16 %v969
      %v1029 = vunpack.c.l.b16 %v971
      %v1030 = vunpack.c.l.b16 %v973
      %v1031 = vunpack.c.l.b16 %v975
      %v1032 = vpack.c.b16 %v1024, %v984
      %v1033 = vpack.c.b16 %v1025, %v985
      %v1034 = vpack.c.b16 %v1026, %v986
      %v1035 = vpack.c.b16 %v1027, %v987
      %v1036 = vpack.c.b16 %v1028, %v988
      %v1037 = vpack.c.b16 %v1029, %v989
      %v1038 = vpack.c.b16 %v1030, %v990
      %v1039 = vpack.c.b16 %v1031, %v991
      %v1041 = vshrl.u32 %v1032, 16
      %v1043 = vshll.u32 %v1032, 16
      %v1045 = vrot.slane %v1043, 1
      %v1046 = vor.u32 %v1041, %v1045
      %v1048 = vshrl.u32 %v1033, 16
      %v1050 = vshll.u32 %v1033, 16
      %v1052 = vrot.slane %v1050, 1
      %v1053 = vor.u32 %v1048, %v1052
      %v1055 = vshrl.u32 %v1034, 16
      %v1057 = vshll.u32 %v1034, 16
      %v1059 = vrot.slane %v1057, 1
      %v1060 = vor.u32 %v1055, %v1059
      %v1062 = vshrl.u32 %v1035, 16
      %v1064 = vshll.u32 %v1035, 16
      %v1066 = vrot.slane %v1064, 1
      %v1067 = vor.u32 %v1062, %v1066
      %v1069 = vshrl.u32 %v1036, 16
      %v1071 = vshll.u32 %v1036, 16
      %v1073 = vrot.slane %v1071, 1
      %v1074 = vor.u32 %v1069, %v1073
      %v1076 = vshrl.u32 %v1037, 16
      %v1078 = vshll.u32 %v1037, 16
      %v1080 = vrot.slane %v1078, 1
      %v1081 = vor.u32 %v1076, %v1080
      %v1083 = vshrl.u32 %v1038, 16
      %v1085 = vshll.u32 %v1038, 16
      %v1087 = vrot.slane %v1085, 1
      %v1088 = vor.u32 %v1083, %v1087
      %v1090 = vshrl.u32 %v1039, 16
      %v1092 = vshll.u32 %v1039, 16
      %v1094 = vrot.slane %v1092, 1
      %v1095 = vor.u32 %v1090, %v1094
      %1096 = vrot.lane.b32.xlu0 %v1046, 4
      %v1097 = vpop.permute.xlu0 %1096
      %1098 = vrot.lane.b32.xlu0 %v1053, 4
      %v1099 = vpop.permute.xlu0 %1098
      %1100 = vrot.lane.b32.xlu0 %v1060, 4
      %v1101 = vpop.permute.xlu0 %1100
      %1102 = vrot.lane.b32.xlu0 %v1067, 4
      %v1103 = vpop.permute.xlu0 %1102
      %1104 = vrot.lane.b32.xlu0 %v1074, 4
      %v1105 = vpop.permute.xlu0 %1104
      %1106 = vrot.lane.b32.xlu0 %v1081, 4
      %v1107 = vpop.permute.xlu0 %1106
      %1108 = vrot.lane.b32.xlu0 %v1088, 4
      %v1109 = vpop.permute.xlu0 %1108
      %1110 = vrot.lane.b32.xlu0 %v1095, 4
      %v1111 = vpop.permute.xlu0 %1110
      %v1114 = vsel %vm924, %v1001, %v1097
      %v1117 = vsel %vm924, %v1003, %v1099
      %v1120 = vsel %vm924, %v1005, %v1101
      %v1123 = vsel %vm924, %v1007, %v1103
      %v1126 = vsel %vm924, %v1009, %v1105
      %v1129 = vsel %vm924, %v1011, %v1107
      %v1132 = vsel %vm924, %v1013, %v1109
      %v1135 = vsel %vm924, %v1015, %v1111
      %v1136 = vsel %vm949, %v1114, %v1097
      %v1137 = vsel %vm949, %v1117, %v1099
      %v1138 = vsel %vm949, %v1120, %v1101
      %v1139 = vsel %vm949, %v1123, %v1103
      %v1140 = vsel %vm949, %v1126, %v1105
      %v1141 = vsel %vm949, %v1129, %v1107
      %v1142 = vsel %vm949, %v1132, %v1109
      %v1143 = vsel %vm949, %v1135, %v1111
      %s1144 = scalar_lea.vmem %s3, 8
      %v1145 = vld [vmem:[%s1144] sm:$0xf]
      %v1146 = vld [vmem:[%s1144 + $0x4] sm:$0x3]
      %v1155 = vunpack.c.l.b16 %v1136
      %v1156 = vunpack.c.l.b16 %v1137
      %v1157 = vunpack.c.l.b16 %v1138
      %v1158 = vunpack.c.l.b16 %v1139
      %v1159 = vunpack.c.l.b16 %v1140
      %v1160 = vunpack.c.l.b16 %v1141
      %v1161 = vunpack.c.l.b16 %v1142
      %v1162 = vunpack.c.l.b16 %v1143
      %v1163 = vpack.c.b16 %v1156, %v1155
      %v1164 = vpack.c.b16 %v1158, %v1157
      %v1165 = vpack.c.b16 %v1160, %v1159
      %v1166 = vpack.c.b16 %v1162, %v1161
      %v1169 = vunpack.c.l.b16 %v1145
      %v1170 = vunpack.c.l.b16 %v1146
      %v1171 = vpack.c.b16 %v1170, %v1169
      %vm1172 = vcmask 97280
      %v1174 = vsel %vm1172, %v1163, 0
      %v1177 = vsel %vm1172, %v1164, 0
      %v1180 = vsel %vm1172, %v1165, 0
      %v1183 = vsel %vm1172, %v1166, 0
      %vm1185 = vcmask 1045504
      %v1187 = vsel %vm1185, %v1171, 0
      %1189 = vmatprep.subr.bf16.mxu0 0
      %1190 = vmatpush1.bf16.msra.mxu0 %v1187
      %1191 = vmatprep.subr.bf16.mxu0 0
      %1192 = vmatpush1.bf16.msra.mxu0 0
      %1193 = vmatprep.subr.bf16.mxu0 0
      %1194 = vmatpush1.bf16.msra.mxu0 0
      %1195 = vmatprep.subr.bf16.mxu0 0
      %1196 = vmatpush1.bf16.msra.mxu0 0
      %1197 = vmatprep.subr.bf16.mxu0 0
      %1198 = vmatpush1.bf16.msra.mxu0 0
      %1199 = vmatprep.subr.bf16.mxu0 0
      %1200 = vmatpush1.bf16.msra.mxu0 0
      %1201 = vmatprep.subr.bf16.mxu0 0
      %1202 = vmatpush1.bf16.msra.mxu0 0
      %1203 = vmatprep.subr.bf16.mxu0 0
      %1204 = vmatpush1.bf16.msra.mxu0 0
      %1205 = vmatprep.subr.bf16.mxu0 0
      %1206 = vmatpush1.bf16.msra.mxu0 0
      %1207 = vmatprep.subr.bf16.mxu0 0
      %1208 = vmatpush1.bf16.msra.mxu0 0
      %1209 = vmatprep.subr.bf16.mxu0 0
      %1210 = vmatpush1.bf16.msra.mxu0 0
      %1211 = vmatprep.subr.bf16.mxu0 0
      %1212 = vmatpush1.bf16.msra.mxu0 0
      %1213 = vmatprep.subr.bf16.mxu0 0
      %1214 = vmatpush1.bf16.msra.mxu0 0
      %1215 = vmatprep.subr.bf16.mxu0 0
      %1216 = vmatpush1.bf16.msra.mxu0 0
      %1217 = vmatprep.subr.bf16.mxu0 0
      %1218 = vmatpush1.bf16.msra.mxu0 0
      %1219 = vmatprep.subr.bf16.mxu0 0
      %1220 = vmatpush1.bf16.msra.mxu0 0
      %1221 = vmatprep.mubr.bf16.mxu0 0
      %1222 = vmatmul.mubr.bf16.gmra.mrb[0].mxu0 %v1174
      %v1223 = vpop.f32.mrb[0].mxu0
      %v1224 = vadd.f32 0.0, %v1223
      %v1225 = vpop.f32.mrb[0].mxu0
      %v1226 = vpop.f32.mrb[0].mxu0
      %v1227 = vadd.f32 0.0, %v1226
      %v1228 = vpop.f32.mrb[0].mxu0
      %1229 = vmatprep.mubr.bf16.mxu0 0
      %1230 = vmatmul.mubr.bf16.gmra.mrb[0].mxu0 %v1177
      %v1231 = vpop.f32.mrb[0].mxu0
      %v1232 = vadd.f32 0.0, %v1231
      %v1233 = vpop.f32.mrb[0].mxu0
      %v1234 = vpop.f32.mrb[0].mxu0
      %v1235 = vadd.f32 0.0, %v1234
      %v1236 = vpop.f32.mrb[0].mxu0
      %1237 = vmatprep.mubr.bf16.mxu0 0
      %1238 = vmatmul.mubr.bf16.gmra.mrb[0].mxu0 %v1180
      %v1239 = vpop.f32.mrb[0].mxu0
      %v1240 = vadd.f32 0.0, %v1239
      %v1241 = vpop.f32.mrb[0].mxu0
      %v1242 = vpop.f32.mrb[0].mxu0
      %v1243 = vadd.f32 0.0, %v1242
      %v1244 = vpop.f32.mrb[0].mxu0
      %1245 = vmatprep.mubr.bf16.mxu0 0
      %1246 = vmatmul.mubr.bf16.gmra.mrb[0].mxu0 %v1183
      %v1247 = vpop.f32.mrb[0].mxu0
      %v1248 = vadd.f32 0.0, %v1247
      %v1249 = vpop.f32.mrb[0].mxu0
      %v1250 = vpop.f32.mrb[0].mxu0
      %v1251 = vadd.f32 0.0, %v1250
      %v1252 = vpop.f32.mrb[0].mxu0
      %1253 = vdwg.mxu0
      %v1262 = vunpack.c.l.b16 %v950
      %v1263 = vunpack.c.l.b16 %v951
      %v1264 = vunpack.c.l.b16 %v952
      %v1265 = vunpack.c.l.b16 %v953
      %v1266 = vunpack.c.l.b16 %v954
      %v1267 = vunpack.c.l.b16 %v955
      %v1268 = vunpack.c.l.b16 %v956
      %v1269 = vunpack.c.l.b16 %v957
      %v1270 = vpack.c.b16 %v1263, %v1262
      %v1271 = vpack.c.b16 %v1265, %v1264
      %v1272 = vpack.c.b16 %v1267, %v1266
      %v1273 = vpack.c.b16 %v1269, %v1268
      %v1276 = vunpack.c.l.b16 %v958
      %v1277 = vunpack.c.l.b16 %v959
      %v1278 = vpack.c.b16 %v1277, %v1276
      %v1280 = vsel %vm1172, %v1270, 0
      %v1283 = vsel %vm1172, %v1271, 0
      %v1286 = vsel %vm1172, %v1272, 0
      %v1289 = vsel %vm1172, %v1273, 0
      %v1292 = vsel %vm1185, %v1278, 0
      %1294 = vmatprep.subr.bf16.mxu0 0
      %1295 = vmatpush1.bf16.msra.mxu0 %v1292
      %1296 = vmatprep.subr.bf16.mxu0 0
      %1297 = vmatpush1.bf16.msra.mxu0 0
      %1298 = vmatprep.subr.bf16.mxu0 0
      %1299 = vmatpush1.bf16.msra.mxu0 0
      %1300 = vmatprep.subr.bf16.mxu0 0
      %1301 = vmatpush1.bf16.msra.mxu0 0
      %1302 = vmatprep.subr.bf16.mxu0 0
      %1303 = vmatpush1.bf16.msra.mxu0 0
      %1304 = vmatprep.subr.bf16.mxu0 0
      %1305 = vmatpush1.bf16.msra.mxu0 0
      %1306 = vmatprep.subr.bf16.mxu0 0
      %1307 = vmatpush1.bf16.msra.mxu0 0
      %1308 = vmatprep.subr.bf16.mxu0 0
      %1309 = vmatpush1.bf16.msra.mxu0 0
      %1310 = vmatprep.subr.bf16.mxu0 0
      %1311 = vmatpush1.bf16.msra.mxu0 0
      %1312 = vmatprep.subr.bf16.mxu0 0
      %1313 = vmatpush1.bf16.msra.mxu0 0
      %1314 = vmatprep.subr.bf16.mxu0 0
      %1315 = vmatpush1.bf16.msra.mxu0 0
      %1316 = vmatprep.subr.bf16.mxu0 0
      %1317 = vmatpush1.bf16.msra.mxu0 0
      %1318 = vmatprep.subr.bf16.mxu0 0
      %1319 = vmatpush1.bf16.msra.mxu0 0
      %1320 = vmatprep.subr.bf16.mxu0 0
      %1321 = vmatpush1.bf16.msra.mxu0 0
      %1322 = vmatprep.subr.bf16.mxu0 0
      %1323 = vmatpush1.bf16.msra.mxu0 0
      %1324 = vmatprep.subr.bf16.mxu0 0
      %1325 = vmatpush1.bf16.msra.mxu0 0
      %1326 = vmatprep.mubr.bf16.mxu0 0
      %1327 = vmatmul.mubr.bf16.gmra.mrb[0].mxu0 %v1280
      %v1328 = vpop.f32.mrb[0].mxu0
      %v1329 = vadd.f32 %v1224, %v1328
      %v1330 = vpop.f32.mrb[0].mxu0
      %v1331 = vpop.f32.mrb[0].mxu0
      %v1332 = vadd.f32 %v1227, %v1331
      %v1333 = vpop.f32.mrb[0].mxu0
      %1334 = vmatprep.mubr.bf16.mxu0 0
      %1335 = vmatmul.mubr.bf16.gmra.mrb[0].mxu0 %v1283
      %v1336 = vpop.f32.mrb[0].mxu0
      %v1337 = vadd.f32 %v1232, %v1336
      %v1338 = vpop.f32.mrb[0].mxu0
      %v1339 = vpop.f32.mrb[0].mxu0
      %v1340 = vadd.f32 %v1235, %v1339
      %v1341 = vpop.f32.mrb[0].mxu0
      %1342 = vmatprep.mubr.bf16.mxu0 0
      %1343 = vmatmul.mubr.bf16.gmra.mrb[0].mxu0 %v1286
      %v1344 = vpop.f32.mrb[0].mxu0
      %v1345 = vadd.f32 %v1240, %v1344
      %v1346 = vpop.f32.mrb[0].mxu0
      %v1347 = vpop.f32.mrb[0].mxu0
      %v1348 = vadd.f32 %v1243, %v1347
      %v1349 = vpop.f32.mrb[0].mxu0
      %1350 = vmatprep.mubr.bf16.mxu0 0
      %1351 = vmatmul.mubr.bf16.gmra.mrb[0].mxu0 %v1289
      %v1352 = vpop.f32.mrb[0].mxu0
      %v1353 = vadd.f32 %v1248, %v1352
      %v1354 = vpop.f32.mrb[0].mxu0
      %v1355 = vpop.f32.mrb[0].mxu0
      %v1356 = vadd.f32 %v1251, %v1355
      %v1357 = vpop.f32.mrb[0].mxu0
      %1358 = vdwg.mxu0
      %v1359 = vld [vmem:[%s723] sm:$0xf]
      %v1360 = vld [vmem:[%s723 + $0x4] sm:$0x1]
      %v1361 = vld [vmem:[%s723 + $0x8] sm:$0xf]
      %v1362 = vld [vmem:[%s723 + $0xc] sm:$0x1]
      %v1363 = vld [vmem:[%s723 + $0x10] sm:$0xf]
      %v1364 = vld [vmem:[%s723 + $0x14] sm:$0x1]
      %v1365 = vld [vmem:[%s723 + $0x18] sm:$0xf]
      %v1366 = vld [vmem:[%s723 + $0x1c] sm:$0x1]
      %v1367 = vld [vmem:[%s723 + $0x20] sm:$0xf]
      %v1368 = vld [vmem:[%s723 + $0x24] sm:$0x1]
      %v1369 = vld [vmem:[%s723 + $0x28] sm:$0xf]
      %v1370 = vld [vmem:[%s723 + $0x2c] sm:$0x1]
      %v1371 = vld [vmem:[%s723 + $0x30] sm:$0xf]
      %v1372 = vld [vmem:[%s723 + $0x34] sm:$0x1]
      %v1373 = vld [vmem:[%s723 + $0x38] sm:$0xf]
      %v1374 = vld [vmem:[%s723 + $0x3c] sm:$0x1]
      %v1383 = vunpack.c.l.b16 %v1359
      %v1384 = vunpack.c.l.b16 %v1361
      %v1385 = vunpack.c.l.b16 %v1363
      %v1386 = vunpack.c.l.b16 %v1365
      %v1387 = vunpack.c.l.b16 %v1367
      %v1388 = vunpack.c.l.b16 %v1369
      %v1389 = vunpack.c.l.b16 %v1371
      %v1390 = vunpack.c.l.b16 %v1373
      %v1391 = vpack.c.b16 %v1383, %v1383
      %v1392 = vpack.c.b16 %v1384, %v1384
      %v1393 = vpack.c.b16 %v1385, %v1385
      %v1394 = vpack.c.b16 %v1386, %v1386
      %v1395 = vpack.c.b16 %v1387, %v1387
      %v1396 = vpack.c.b16 %v1388, %v1388
      %v1397 = vpack.c.b16 %v1389, %v1389
      %v1398 = vpack.c.b16 %v1390, %v1390
      %1399 = vrot.lane.b32.xlu0 %v1391, 124
      %v1400 = vpop.permute.xlu0 %1399
      %1401 = vrot.lane.b32.xlu0 %v1392, 124
      %v1402 = vpop.permute.xlu0 %1401
      %1403 = vrot.lane.b32.xlu0 %v1393, 124
      %v1404 = vpop.permute.xlu0 %1403
      %1405 = vrot.lane.b32.xlu0 %v1394, 124
      %v1406 = vpop.permute.xlu0 %1405
      %1407 = vrot.lane.b32.xlu0 %v1395, 124
      %v1408 = vpop.permute.xlu0 %1407
      %1409 = vrot.lane.b32.xlu0 %v1396, 124
      %v1410 = vpop.permute.xlu0 %1409
      %1411 = vrot.lane.b32.xlu0 %v1397, 124
      %v1412 = vpop.permute.xlu0 %1411
      %1413 = vrot.lane.b32.xlu0 %v1398, 124
      %v1414 = vpop.permute.xlu0 %1413
      %v1423 = vunpack.c.l.b16 %v1360
      %v1424 = vunpack.c.l.b16 %v1362
      %v1425 = vunpack.c.l.b16 %v1364
      %v1426 = vunpack.c.l.b16 %v1366
      %v1427 = vunpack.c.l.b16 %v1368
      %v1428 = vunpack.c.l.b16 %v1370
      %v1429 = vunpack.c.l.b16 %v1372
      %v1430 = vunpack.c.l.b16 %v1374
      %v1431 = vpack.c.b16 %v1423, %v1383
      %v1432 = vpack.c.b16 %v1424, %v1384
      %v1433 = vpack.c.b16 %v1425, %v1385
      %v1434 = vpack.c.b16 %v1426, %v1386
      %v1435 = vpack.c.b16 %v1427, %v1387
      %v1436 = vpack.c.b16 %v1428, %v1388
      %v1437 = vpack.c.b16 %v1429, %v1389
      %v1438 = vpack.c.b16 %v1430, %v1390
      %v1440 = vshrl.u32 %v1431, 16
      %v1442 = vshll.u32 %v1431, 16
      %v1444 = vrot.slane %v1442, 1
      %v1445 = vor.u32 %v1440, %v1444
      %v1447 = vshrl.u32 %v1432, 16
      %v1449 = vshll.u32 %v1432, 16
      %v1451 = vrot.slane %v1449, 1
      %v1452 = vor.u32 %v1447, %v1451
      %v1454 = vshrl.u32 %v1433, 16
      %v1456 = vshll.u32 %v1433, 16
      %v1458 = vrot.slane %v1456, 1
      %v1459 = vor.u32 %v1454, %v1458
      %v1461 = vshrl.u32 %v1434, 16
      %v1463 = vshll.u32 %v1434, 16
      %v1465 = vrot.slane %v1463, 1
      %v1466 = vor.u32 %v1461, %v1465
      %v1468 = vshrl.u32 %v1435, 16
      %v1470 = vshll.u32 %v1435, 16
      %v1472 = vrot.slane %v1470, 1
      %v1473 = vor.u32 %v1468, %v1472
      %v1475 = vshrl.u32 %v1436, 16
      %v1477 = vshll.u32 %v1436, 16
      %v1479 = vrot.slane %v1477, 1
      %v1480 = vor.u32 %v1475, %v1479
      %v1482 = vshrl.u32 %v1437, 16
      %v1484 = vshll.u32 %v1437, 16
      %v1486 = vrot.slane %v1484, 1
      %v1487 = vor.u32 %v1482, %v1486
      %v1489 = vshrl.u32 %v1438, 16
      %v1491 = vshll.u32 %v1438, 16
      %v1493 = vrot.slane %v1491, 1
      %v1494 = vor.u32 %v1489, %v1493
      %1495 = vrot.lane.b32.xlu0 %v1445, 4
      %v1496 = vpop.permute.xlu0 %1495
      %1497 = vrot.lane.b32.xlu0 %v1452, 4
      %v1498 = vpop.permute.xlu0 %1497
      %1499 = vrot.lane.b32.xlu0 %v1459, 4
      %v1500 = vpop.permute.xlu0 %1499
      %1501 = vrot.lane.b32.xlu0 %v1466, 4
      %v1502 = vpop.permute.xlu0 %1501
      %1503 = vrot.lane.b32.xlu0 %v1473, 4
      %v1504 = vpop.permute.xlu0 %1503
      %1505 = vrot.lane.b32.xlu0 %v1480, 4
      %v1506 = vpop.permute.xlu0 %1505
      %1507 = vrot.lane.b32.xlu0 %v1487, 4
      %v1508 = vpop.permute.xlu0 %1507
      %1509 = vrot.lane.b32.xlu0 %v1494, 4
      %v1510 = vpop.permute.xlu0 %1509
      %v1513 = vsel %vm924, %v1400, %v1496
      %v1516 = vsel %vm924, %v1402, %v1498
      %v1519 = vsel %vm924, %v1404, %v1500
      %v1522 = vsel %vm924, %v1406, %v1502
      %v1525 = vsel %vm924, %v1408, %v1504
      %v1528 = vsel %vm924, %v1410, %v1506
      %v1531 = vsel %vm924, %v1412, %v1508
      %v1534 = vsel %vm924, %v1414, %v1510
      %v1535 = vsel %vm949, %v1513, %v1496
      %v1536 = vsel %vm949, %v1516, %v1498
      %v1537 = vsel %vm949, %v1519, %v1500
      %v1538 = vsel %vm949, %v1522, %v1502
      %v1539 = vsel %vm949, %v1525, %v1504
      %v1540 = vsel %vm949, %v1528, %v1506
      %v1541 = vsel %vm949, %v1531, %v1508
      %v1542 = vsel %vm949, %v1534, %v1510
      %s1543 = scalar_lea.vmem %s3, 16
      %v1544 = vld [vmem:[%s1543] sm:$0xf]
      %v1545 = vld [vmem:[%s1543 + $0x4] sm:$0x3]
      %v1554 = vunpack.c.l.b16 %v1535
      %v1555 = vunpack.c.l.b16 %v1536
      %v1556 = vunpack.c.l.b16 %v1537
      %v1557 = vunpack.c.l.b16 %v1538
      %v1558 = vunpack.c.l.b16 %v1539
      %v1559 = vunpack.c.l.b16 %v1540
      %v1560 = vunpack.c.l.b16 %v1541
      %v1561 = vunpack.c.l.b16 %v1542
      %v1562 = vpack.c.b16 %v1555, %v1554
      %v1563 = vpack.c.b16 %v1557, %v1556
      %v1564 = vpack.c.b16 %v1559, %v1558
      %v1565 = vpack.c.b16 %v1561, %v1560
      %v1568 = vunpack.c.l.b16 %v1544
      %v1569 = vunpack.c.l.b16 %v1545
      %v1570 = vpack.c.b16 %v1569, %v1568
      %v1572 = vsel %vm1172, %v1562, 0
      %v1575 = vsel %vm1172, %v1563, 0
      %v1578 = vsel %vm1172, %v1564, 0
      %v1581 = vsel %vm1172, %v1565, 0
      %v1584 = vsel %vm1185, %v1570, 0
      %1586 = vmatprep.subr.bf16.mxu0 0
      %1587 = vmatpush1.bf16.msra.mxu0 %v1584
      %1588 = vmatprep.subr.bf16.mxu0 0
      %1589 = vmatpush1.bf16.msra.mxu0 0
      %1590 = vmatprep.subr.bf16.mxu0 0
      %1591 = vmatpush1.bf16.msra.mxu0 0
      %1592 = vmatprep.subr.bf16.mxu0 0
      %1593 = vmatpush1.bf16.msra.mxu0 0
      %1594 = vmatprep.subr.bf16.mxu0 0
      %1595 = vmatpush1.bf16.msra.mxu0 0
      %1596 = vmatprep.subr.bf16.mxu0 0
      %1597 = vmatpush1.bf16.msra.mxu0 0
      %1598 = vmatprep.subr.bf16.mxu0 0
      %1599 = vmatpush1.bf16.msra.mxu0 0
      %1600 = vmatprep.subr.bf16.mxu0 0
      %1601 = vmatpush1.bf16.msra.mxu0 0
      %1602 = vmatprep.subr.bf16.mxu0 0
      %1603 = vmatpush1.bf16.msra.mxu0 0
      %1604 = vmatprep.subr.bf16.mxu0 0
      %1605 = vmatpush1.bf16.msra.mxu0 0
      %1606 = vmatprep.subr.bf16.mxu0 0
      %1607 = vmatpush1.bf16.msra.mxu0 0
      %1608 = vmatprep.subr.bf16.mxu0 0
      %1609 = vmatpush1.bf16.msra.mxu0 0
      %1610 = vmatprep.subr.bf16.mxu0 0
      %1611 = vmatpush1.bf16.msra.mxu0 0
      %1612 = vmatprep.subr.bf16.mxu0 0
      %1613 = vmatpush1.bf16.msra.mxu0 0
      %1614 = vmatprep.subr.bf16.mxu0 0
      %1615 = vmatpush1.bf16.msra.mxu0 0
      %1616 = vmatprep.subr.bf16.mxu0 0
      %1617 = vmatpush1.bf16.msra.mxu0 0
      %1618 = vmatprep.mubr.bf16.mxu0 0
      %1619 = vmatmul.mubr.bf16.gmra.mrb[0].mxu0 %v1572
      %v1620 = vpop.f32.mrb[0].mxu0
      %v1621 = vadd.f32 0.0, %v1620
      %v1622 = vpop.f32.mrb[0].mxu0
      %v1623 = vpop.f32.mrb[0].mxu0
      %v1624 = vadd.f32 0.0, %v1623
      %v1625 = vpop.f32.mrb[0].mxu0
      %1626 = vmatprep.mubr.bf16.mxu0 0
      %1627 = vmatmul.mubr.bf16.gmra.mrb[0].mxu0 %v1575
      %v1628 = vpop.f32.mrb[0].mxu0
      %v1629 = vadd.f32 0.0, %v1628
      %v1630 = vpop.f32.mrb[0].mxu0
      %v1631 = vpop.f32.mrb[0].mxu0
      %v1632 = vadd.f32 0.0, %v1631
      %v1633 = vpop.f32.mrb[0].mxu0
      %1634 = vmatprep.mubr.bf16.mxu0 0
      %1635 = vmatmul.mubr.bf16.gmra.mrb[0].mxu0 %v1578
      %v1636 = vpop.f32.mrb[0].mxu0
      %v1637 = vadd.f32 0.0, %v1636
      %v1638 = vpop.f32.mrb[0].mxu0
      %v1639 = vpop.f32.mrb[0].mxu0
      %v1640 = vadd.f32 0.0, %v1639
      %v1641 = vpop.f32.mrb[0].mxu0
      %1642 = vmatprep.mubr.bf16.mxu0 0
      %1643 = vmatmul.mubr.bf16.gmra.mrb[0].mxu0 %v1581
      %v1644 = vpop.f32.mrb[0].mxu0
      %v1645 = vadd.f32 0.0, %v1644
      %v1646 = vpop.f32.mrb[0].mxu0
      %v1647 = vpop.f32.mrb[0].mxu0
      %v1648 = vadd.f32 0.0, %v1647
      %v1649 = vpop.f32.mrb[0].mxu0
      %1650 = vdwg.mxu0
      %v1651 = vadd.f32 %v1329, %v1621
      %v1652 = vadd.f32 %v1332, %v1624
      %v1653 = vadd.f32 %v1337, %v1629
      %v1654 = vadd.f32 %v1340, %v1632
      %v1655 = vadd.f32 %v1345, %v1637
      %v1656 = vadd.f32 %v1348, %v1640
      %v1657 = vadd.f32 %v1353, %v1645
      %v1658 = vadd.f32 %v1356, %v1648
      %v1659 = vpack.c.bf16 %v1651, %v1651
      %v1660 = vpack.c.bf16 %v1652, %v1652
      %v1661 = vpack.c.bf16 %v1653, %v1653
      %v1662 = vpack.c.bf16 %v1654, %v1654
      %v1663 = vpack.c.bf16 %v1655, %v1655
      %v1664 = vpack.c.bf16 %v1656, %v1656
      %v1665 = vpack.c.bf16 %v1657, %v1657
      %v1666 = vpack.c.bf16 %v1658, %v1658
      %1667 = vst.msk [vmem:[%s292] sm:$0xf] %vm397, %v1659
      %1668 = vst.msk [vmem:[%s292 + $0x4] sm:$0xf] %vm397, %v1660
      %1669 = vst.msk [vmem:[%s292 + $0x8] sm:$0xf] %vm397, %v1661
      %1670 = vst.msk [vmem:[%s292 + $0xc] sm:$0xf] %vm397, %v1662
      %1671 = vst.msk [vmem:[%s292 + $0x10] sm:$0xf] %vm397, %v1663
      %1672 = vst.msk [vmem:[%s292 + $0x14] sm:$0xf] %vm397, %v1664
      %1673 = vst.msk [vmem:[%s292 + $0x18] sm:$0xf] %vm397, %v1665
      %1674 = vst.msk [vmem:[%s292 + $0x1c] sm:$0xf] %vm397, %v1666
      %v1675 = vld [vmem:[%s4] sm:$0x3]
      %v1676 = vpack.c.b16 %v441, %v440
      %v1677 = vpack.c.b16 %v443, %v442
      %v1678 = vpack.c.b16 %v445, %v444
      %v1679 = vpack.c.b16 %v447, %v446
      %v1681 = vsel %vm924, %v1676, 0
      %v1684 = vsel %vm924, %v1677, 0
      %v1687 = vsel %vm924, %v1678, 0
      %v1690 = vsel %vm924, %v1679, 0
      %vm1692 = vcmask 1041408
      %v1694 = vsel %vm1692, %v1675, 0
      %1696 = vmatprep.subr.bf16.mxu0 0
      %1697 = vmatpush1.bf16.msra.mxu0 %v1694
      %1698 = vmatprep.subr.bf16.mxu0 0
      %1699 = vmatpush1.bf16.msra.mxu0 0
      %1700 = vmatprep.subr.bf16.mxu0 0
      %1701 = vmatpush1.bf16.msra.mxu0 0
      %1702 = vmatprep.subr.bf16.mxu0 0
      %1703 = vmatpush1.bf16.msra.mxu0 0
      %1704 = vmatprep.subr.bf16.mxu0 0
      %1705 = vmatpush1.bf16.msra.mxu0 0
      %1706 = vmatprep.subr.bf16.mxu0 0
      %1707 = vmatpush1.bf16.msra.mxu0 0
      %1708 = vmatprep.subr.bf16.mxu0 0
      %1709 = vmatpush1.bf16.msra.mxu0 0
      %1710 = vmatprep.subr.bf16.mxu0 0
      %1711 = vmatpush1.bf16.msra.mxu0 0
      %1712 = vmatprep.subr.bf16.mxu0 0
      %1713 = vmatpush1.bf16.msra.mxu0 0
      %1714 = vmatprep.subr.bf16.mxu0 0
      %1715 = vmatpush1.bf16.msra.mxu0 0
      %1716 = vmatprep.subr.bf16.mxu0 0
      %1717 = vmatpush1.bf16.msra.mxu0 0
      %1718 = vmatprep.subr.bf16.mxu0 0
      %1719 = vmatpush1.bf16.msra.mxu0 0
      %1720 = vmatprep.subr.bf16.mxu0 0
      %1721 = vmatpush1.bf16.msra.mxu0 0
      %1722 = vmatprep.subr.bf16.mxu0 0
      %1723 = vmatpush1.bf16.msra.mxu0 0
      %1724 = vmatprep.subr.bf16.mxu0 0
      %1725 = vmatpush1.bf16.msra.mxu0 0
      %1726 = vmatprep.subr.bf16.mxu0 0
      %1727 = vmatpush1.bf16.msra.mxu0 0
      %1728 = vmatprep.mubr.bf16.mxu0 0
      %1729 = vmatmul.mubr.bf16.gmra.mrb[0].mxu0 %v1681
      %v1730 = vpop.f32.mrb[0].mxu0
      %v1731 = vadd.f32 0.0, %v1730
      %v1732 = vpop.f32.mrb[0].mxu0
      %v1733 = vpop.f32.mrb[0].mxu0
      %v1734 = vadd.f32 0.0, %v1733
      %v1735 = vpop.f32.mrb[0].mxu0
      %1736 = vmatprep.mubr.bf16.mxu0 0
      %1737 = vmatmul.mubr.bf16.gmra.mrb[0].mxu0 %v1684
      %v1738 = vpop.f32.mrb[0].mxu0
      %v1739 = vadd.f32 0.0, %v1738
      %v1740 = vpop.f32.mrb[0].mxu0
      %v1741 = vpop.f32.mrb[0].mxu0
      %v1742 = vadd.f32 0.0, %v1741
      %v1743 = vpop.f32.mrb[0].mxu0
      %1744 = vmatprep.mubr.bf16.mxu0 0
      %1745 = vmatmul.mubr.bf16.gmra.mrb[0].mxu0 %v1687
      %v1746 = vpop.f32.mrb[0].mxu0
      %v1747 = vadd.f32 0.0, %v1746
      %v1748 = vpop.f32.mrb[0].mxu0
      %v1749 = vpop.f32.mrb[0].mxu0
      %v1750 = vadd.f32 0.0, %v1749
      %v1751 = vpop.f32.mrb[0].mxu0
      %1752 = vmatprep.mubr.bf16.mxu0 0
      %1753 = vmatmul.mubr.bf16.gmra.mrb[0].mxu0 %v1690
      %v1754 = vpop.f32.mrb[0].mxu0
      %v1755 = vadd.f32 0.0, %v1754
      %v1756 = vpop.f32.mrb[0].mxu0
      %v1757 = vpop.f32.mrb[0].mxu0
      %v1758 = vadd.f32 0.0, %v1757
      %v1759 = vpop.f32.mrb[0].mxu0
      %1760 = vdwg.mxu0
      %v1761 = vpack.c.bf16 %v1731, %v1731
      %v1762 = vpack.c.bf16 %v1734, %v1734
      %v1763 = vpack.c.bf16 %v1739, %v1739
      %v1764 = vpack.c.bf16 %v1742, %v1742
      %v1765 = vpack.c.bf16 %v1747, %v1747
      %v1766 = vpack.c.bf16 %v1750, %v1750
      %v1767 = vpack.c.bf16 %v1755, %v1755
      %v1768 = vpack.c.bf16 %v1758, %v1758
      %1769 = vst.msk [vmem:[%s297] sm:$0xf] %vm397, %v1761
      %1770 = vst.msk [vmem:[%s297 + $0x4] sm:$0xf] %vm397, %v1762
      %1771 = vst.msk [vmem:[%s297 + $0x8] sm:$0xf] %vm397, %v1763
      %1772 = vst.msk [vmem:[%s297 + $0xc] sm:$0xf] %vm397, %v1764
      %1773 = vst.msk [vmem:[%s297 + $0x10] sm:$0xf] %vm397, %v1765
      %1774 = vst.msk [vmem:[%s297 + $0x14] sm:$0xf] %vm397, %v1766
      %1775 = vst.msk [vmem:[%s297 + $0x18] sm:$0xf] %vm397, %v1767
      %1776 = vst.msk [vmem:[%s297 + $0x1c] sm:$0xf] %vm397, %v1768
      %v1777 = vsel %vm949, %v1651, 0.0
      %v1778 = vsel %vm949, %v1652, 0.0
      %v1779 = vadd.f32 %v1777, %v1778
      %v1780 = vsel %vm949, %v1653, 0.0
      %v1781 = vadd.f32 %v1779, %v1780
      %v1782 = vsel %vm949, %v1654, 0.0
      %v1783 = vadd.f32 %v1781, %v1782
      %v1784 = vsel %vm949, %v1655, 0.0
      %v1785 = vadd.f32 %v1783, %v1784
      %v1786 = vsel %vm949, %v1656, 0.0
      %v1787 = vadd.f32 %v1785, %v1786
      %v1788 = vsel %vm949, %v1657, 0.0
      %v1789 = vadd.f32 %v1787, %v1788
      %v1790 = vsel %vm949, %v1658, 0.0
      %v1791 = vadd.f32 %v1789, %v1790
      %v1792 = vrot.slane %v1791, 4
      %v1793 = vadd.f32 %v1791, %v1792
      %v1794 = vrot.slane %v1793, 2
      %v1795 = vadd.f32 %v1793, %v1794
      %v1796 = vrot.slane %v1795, 1
      %v1797 = vadd.f32 %v1795, %v1796
      %vm1798 = vcmask 57344
      %1799 = vst.msk [vmem:[%s301] sm:$0x1] %vm1798, %v1797
      %v1800 = vmul.f32 %v1651, %v1651
      %v1801 = vmul.f32 %v1652, %v1652
      %v1802 = vmul.f32 %v1653, %v1653
      %v1803 = vmul.f32 %v1654, %v1654
      %v1804 = vmul.f32 %v1655, %v1655
      %v1805 = vmul.f32 %v1656, %v1656
      %v1806 = vmul.f32 %v1657, %v1657
      %v1807 = vmul.f32 %v1658, %v1658
      %v1808 = vsel %vm949, %v1800, 0.0
      %v1809 = vsel %vm949, %v1801, 0.0
      %v1810 = vadd.f32 %v1808, %v1809
      %v1811 = vsel %vm949, %v1802, 0.0
      %v1812 = vadd.f32 %v1810, %v1811
      %v1813 = vsel %vm949, %v1803, 0.0
      %v1814 = vadd.f32 %v1812, %v1813
      %v1815 = vsel %vm949, %v1804, 0.0
      %v1816 = vadd.f32 %v1814, %v1815
      %v1817 = vsel %vm949, %v1805, 0.0
      %v1818 = vadd.f32 %v1816, %v1817
      %v1819 = vsel %vm949, %v1806, 0.0
      %v1820 = vadd.f32 %v1818, %v1819
      %v1821 = vsel %vm949, %v1807, 0.0
      %v1822 = vadd.f32 %v1820, %v1821
      %v1823 = vrot.slane %v1822, 4
      %v1824 = vadd.f32 %v1822, %v1823
      %v1825 = vrot.slane %v1824, 2
      %v1826 = vadd.f32 %v1824, %v1825
      %v1827 = vrot.slane %v1826, 1
      %v1828 = vadd.f32 %v1826, %v1827
      %1829 = vst.msk [vmem:[%s301 + $0x1] sm:$0x1] %vm1798, %v1828
      %p1830 = scmp.lt.s32.totalorder %s19, 1
      %s1831 = scalar_select %p1830, %s19, 1
      %s1832 = smul.addr %s1831, 8
      %s1833 = smul.addr %s1832, 4
      %s1834 = scalar_lea.vmem %s5, %s1833
      %p1835 = scmp.lt.s32.totalorder %s19, 1
      %s1836 = scalar_select %p1835, %s19, 1
      %s1837 = smul.addr %s1836, 8
      %s1838 = smul.addr %s1837, 4
      %s1839 = scalar_lea.vmem %s6, %s1838
      %p1840 = scmp.lt.s32.totalorder %s19, 1
      %s1841 = scalar_select %p1840, %s19, 1
      %s1842 = smul.addr %s1841, 2
      %s1843 = scalar_lea.vmem %s7, %s1842
      // Predicated region
      $region41: #{preact_block_forward.4} parent=39 // pred_check
        %p1844 = pneg %p147
      $region42: #{preact_block_forward.4} parent=39 // pred_check_branch
        %1846 = sbr.rel (%p1844) target = $region44
      $region43: #{preact_block_forward.4} parent=39 // pred_region
        _
      $region44: #{preact_block_forward.4} parent=39 // pred_fallthru
        _
      // Predicated region
      $region45: #{preact_block_forward.4} parent=39 // pred_check
        %p1847 = pneg %p173
      $region46: #{preact_block_forward.4} parent=39 // pred_check_branch
        %1849 = sbr.rel (%p1847) target = $region48
      $region47: #{preact_block_forward.4} parent=39 // pred_region
        _
      $region48: #{preact_block_forward.4} parent=39 // pred_fallthru
        _
      // Predicated region
      $region49: #{preact_block_forward.4} parent=39 // pred_check
        %p1850 = pneg %p199
      $region50: #{preact_block_forward.4} parent=39 // pred_check_branch
        %1852 = sbr.rel (%p1850) target = $region52
      $region51: #{preact_block_forward.4} parent=39 // pred_region
        _
      $region52: #{preact_block_forward.4} parent=39 // pred_fallthru
        _
    $region40: #{preact_block_forward.4} parent=5 // pred_fallthru
      _
    %p1853 = scmp.le.s32.totalorder 2, %s14
    // Predicated region
    $region53: #{preact_block_forward.4} parent=5 // pred_check
      %p1854 = pneg %p1853
    $region54: #{preact_block_forward.4} parent=5 // pred_check_branch
      %1856 = sbr.rel (%p1854) target = $region56
    $region55: #{preact_block_forward.4} parent=5 // pred_region
      %s1857 = ssub.s32 %s14, 2
      // Predicated region
      $region57: #{preact_block_forward.4} parent=55 // pred_check
        %p1858 = pneg %p153
      $region58: #{preact_block_forward.4} parent=55 // pred_check_branch
        %1860 = sbr.rel (%p1858) target = $region60
      $region59: #{preact_block_forward.4} parent=55 // pred_region
        %p1861 = scmp.lt.s32.totalorder %s20, 1
        %s1862 = scalar_select %p1861, %s20, 1
        %s1863 = smul.addr %s1862, 8
        %s1864 = smul.addr %s1863, 4
        %s1865 = scalar_lea.vmem %s5, %s1864
      $region60: #{preact_block_forward.4} parent=55 // pred_fallthru
        _
      // Predicated region
      $region61: #{preact_block_forward.4} parent=55 // pred_check
        %p1866 = pneg %p179
      $region62: #{preact_block_forward.4} parent=55 // pred_check_branch
        %1868 = sbr.rel (%p1866) target = $region64
      $region63: #{preact_block_forward.4} parent=55 // pred_region
        %p1869 = scmp.lt.s32.totalorder %s20, 1
        %s1870 = scalar_select %p1869, %s20, 1
        %s1871 = smul.addr %s1870, 8
        %s1872 = smul.addr %s1871, 4
        %s1873 = scalar_lea.vmem %s6, %s1872
      $region64: #{preact_block_forward.4} parent=55 // pred_fallthru
        _
      // Predicated region
      $region65: #{preact_block_forward.4} parent=55 // pred_check
        %p1874 = pneg %p205
      $region66: #{preact_block_forward.4} parent=55 // pred_check_branch
        %1876 = sbr.rel (%p1874) target = $region68
      $region67: #{preact_block_forward.4} parent=55 // pred_region
        %p1877 = scmp.lt.s32.totalorder %s20, 1
        %s1878 = scalar_select %p1877, %s20, 1
        %s1879 = smul.addr %s1878, 2
        %s1880 = scalar_lea.vmem %s7, %s1879
      $region68: #{preact_block_forward.4} parent=55 // pred_fallthru
        _
    $region56: #{preact_block_forward.4} parent=5 // pred_fallthru
      _
  $region6: #{preact_block_forward.4} parent=0 // loop_footer
    %s18 = sadd.s32 1, %s14
  $region7: #{preact_block_forward.4} parent=0 // loop_footer_branch
    %13 = sbr.rel target = $region3
  $region8: #{preact_block_forward.4} parent=0 // loop_exit
    _

// kernel: preact_block_forward.5
$region0: #{preact_block_forward.5}
  #allocation0 [shape = 'u32[]', space=smem, size = 0x4, offset = 0x4, fixed_abs, tag = 'smem constant byte address 0x4 - core index']
  #allocation1 [shape = 'u32[144,128]{1,0:T(1,128)}', space=vmem, size = 0x12000, scoped, tag = 'internal scratch']
  #allocation2 [shape = 'bf16[10,10,8]{2,1,0:T(8,128)(2,1)}', space=vmem, size = 0xa000, scoped, tag = 'scratch operand']
  %s0 = inlined_call_operand.vmem [shape: bf16[2,8,8,8], index: 0, kind: input, shape index: {}]
  %s1 = inlined_call_operand.vmem [shape: f32[1,8], index: 1, kind: input, shape index: {}]
  %s2 = inlined_call_operand.vmem [shape: f32[1,8], index: 2, kind: input, shape index: {}]
  %s3 = inlined_call_operand.vmem [shape: bf16[3,24,8], index: 3, kind: input, shape index: {}]
  %s4 = inlined_call_operand.vmem [shape: bf16[2,8,8,8], index: 4, kind: input, shape index: {}]
  %s5 = inlined_call_operand.vmem [shape: f32[2,8,8,8], index: 5, kind: output, shape index: {}]
  %s6 = sld [smem:[#allocation0]]
  $region53: #{preact_block_forward.5} parent=0
    _
  %s8 = ssub.s32 1, %s6
  %s9 = scalar_select 0, %s8, %s6
  loop: start=0, step=1, limit=4
  $region2: #{preact_block_forward.5} parent=0 // loop_pre_header
    _
  $region3: #{preact_block_forward.5} parent=0 // loop_header
    %s11 = sphi 0, %s15
    %p12 = scmp.ge.s32.totalorder %s11, 4
    %s21 = sphi 0, %s23
    %s24 = sphi 0, %s21
    %s25 = sphi 0, %s24
    %s41 = sphi 0, %s25
    %s45 = sphi 0, %s45
    %s47 = sphi 0, %s45
    %s48 = sphi 0, %s47
    %s62 = sphi 0, %s48
    %s66 = sphi 0, %s66
    %s68 = sphi 0, %s66
    %s69 = sphi 0, %s68
    %s83 = sphi 0, %s69
    %s87 = sphi 0, %s87
    %s89 = sphi 0, %s87
    %s90 = sphi 0, %s89
    %s104 = sphi 0, %s90
    %s110 = sphi 0, %s112
    %s113 = sphi 0, %s110
    %s114 = sphi 0, %s113
    %s130 = sphi 0, %s114
    %s136 = sphi 0, %s138
    %s139 = sphi 0, %s136
    %s140 = sphi 0, %s139
    %s156 = sphi 0, %s140
  $region4: #{preact_block_forward.5} parent=0 // loop_header_branch
    %14 = sbr.rel (%p12) target = $region8
  $region5: #{preact_block_forward.5} parent=0 // loop_body
    %s16 = ssub.s32 %s11, 1
    %s17 = ssub.s32 %s11, 2
    %s18 = sadd.s32 %s11, 1
    %s19 = ssub.s32 %s11, %s18
    %p20 = scmp.eq.s32.totalorder %s19, 0
    %s22 = sadd.s32 %s21, 1
    %s23 = scalar_select %p20, %s21, %s22
    %p26 = pneg %p20
    %p27 = scmp.eq.s32.totalorder %s11, 1
    %p28 = por %p26, %p27
    %p29 = scmp.ne.s32.totalorder %s21, %s24
    %p30 = scmp.eq.s32.totalorder %s11, 0
    %p31 = por %p29, %p30
    %p32 = scmp.ne.s32.totalorder %s21, %s24
    %p33 = scmp.eq.s32.totalorder %s16, 1
    %p34 = por %p32, %p33
    %p35 = scmp.ne.s32.totalorder %s24, %s25
    %p36 = scmp.eq.s32.totalorder %s16, 0
    %p37 = por %p35, %p36
    %p38 = scmp.ne.s32.totalorder %s24, %s25
    %p39 = scmp.eq.s32.totalorder %s17, 1
    %p40 = por %p38, %p39
    %p42 = scmp.ne.s32.totalorder %s25, %s41
    %p43 = scmp.eq.s32.totalorder %s17, 0
    %p44 = por %p42, %p43
    %s46 = sadd.s32 %s45, 1
    %p49 = scmp.eq.s32.totalorder %s11, 1
    %p50 = scmp.ne.s32.totalorder %s45, %s47
    %p51 = scmp.eq.s32.totalorder %s11, 0
    %p52 = por %p50, %p51
    %p53 = scmp.ne.s32.totalorder %s45, %s47
    %p54 = scmp.eq.s32.totalorder %s16, 1
    %p55 = por %p53, %p54
    %p56 = scmp.ne.s32.totalorder %s47, %s48
    %p57 = scmp.eq.s32.totalorder %s16, 0
    %p58 = por %p56, %p57
    %p59 = scmp.ne.s32.totalorder %s47, %s48
    %p60 = scmp.eq.s32.totalorder %s17, 1
    %p61 = por %p59, %p60
    %p63 = scmp.ne.s32.totalorder %s48, %s62
    %p64 = scmp.eq.s32.totalorder %s17, 0
    %p65 = por %p63, %p64
    %s67 = sadd.s32 %s66, 1
    %p70 = scmp.eq.s32.totalorder %s11, 1
    %p71 = scmp.ne.s32.totalorder %s66, %s68
    %p72 = scmp.eq.s32.totalorder %s11, 0
    %p73 = por %p71, %p72
    %p74 = scmp.ne.s32.totalorder %s66, %s68
    %p75 = scmp.eq.s32.totalorder %s16, 1
    %p76 = por %p74, %p75
    %p77 = scmp.ne.s32.totalorder %s68, %s69
    %p78 = scmp.eq.s32.totalorder %s16, 0
    %p79 = por %p77, %p78
    %p80 = scmp.ne.s32.totalorder %s68, %s69
    %p81 = scmp.eq.s32.totalorder %s17, 1
    %p82 = por %p80, %p81
    %p84 = scmp.ne.s32.totalorder %s69, %s83
    %p85 = scmp.eq.s32.totalorder %s17, 0
    %p86 = por %p84, %p85
    %s88 = sadd.s32 %s87, 1
    %p91 = scmp.eq.s32.totalorder %s11, 1
    %p92 = scmp.ne.s32.totalorder %s87, %s89
    %p93 = scmp.eq.s32.totalorder %s11, 0
    %p94 = por %p92, %p93
    %p95 = scmp.ne.s32.totalorder %s87, %s89
    %p96 = scmp.eq.s32.totalorder %s16, 1
    %p97 = por %p95, %p96
    %p98 = scmp.ne.s32.totalorder %s89, %s90
    %p99 = scmp.eq.s32.totalorder %s16, 0
    %p100 = por %p98, %p99
    %p101 = scmp.ne.s32.totalorder %s89, %s90
    %p102 = scmp.eq.s32.totalorder %s17, 1
    %p103 = por %p101, %p102
    %p105 = scmp.ne.s32.totalorder %s90, %s104
    %p106 = scmp.eq.s32.totalorder %s17, 0
    %p107 = por %p105, %p106
    %s108 = ssub.s32 %s11, %s18
    %p109 = scmp.eq.s32.totalorder %s108, 0
    %s111 = sadd.s32 %s110, 1
    %s112 = scalar_select %p109, %s110, %s111
    %p115 = pneg %p109
    %p116 = scmp.eq.s32.totalorder %s11, 1
    %p117 = por %p115, %p116
    %p118 = scmp.ne.s32.totalorder %s110, %s113
    %p119 = scmp.eq.s32.totalorder %s11, 0
    %p120 = por %p118, %p119
    %p121 = scmp.ne.s32.totalorder %s110, %s113
    %p122 = scmp.eq.s32.totalorder %s16, 1
    %p123 = por %p121, %p122
    %p124 = scmp.ne.s32.totalorder %s113, %s114
    %p125 = scmp.eq.s32.totalorder %s16, 0
    %p126 = por %p124, %p125
    %p127 = scmp.ne.s32.totalorder %s113, %s114
    %p128 = scmp.eq.s32.totalorder %s17, 1
    %p129 = por %p127, %p128
    %p131 = scmp.ne.s32.totalorder %s114, %s130
    %p132 = scmp.eq.s32.totalorder %s17, 0
    %p133 = por %p131, %p132
    %s134 = ssub.s32 %s11, %s18
    %p135 = scmp.eq.s32.totalorder %s134, 0
    %s137 = sadd.s32 %s136, 1
    %s138 = scalar_select %p135, %s136, %s137
    %p141 = pneg %p135
    %p142 = scmp.eq.s32.totalorder %s11, 1
    %p143 = por %p141, %p142
    %p144 = scmp.ne.s32.totalorder %s136, %s139
    %p145 = scmp.eq.s32.totalorder %s11, 0
    %p146 = por %p144, %p145
    %p147 = scmp.ne.s32.totalorder %s136, %s139
    %p148 = scmp.eq.s32.totalorder %s16, 1
    %p149 = por %p147, %p148
    %p150 = scmp.ne.s32.totalorder %s139, %s140
    %p151 = scmp.eq.s32.totalorder %s16, 0
    %p152 = por %p150, %p151
    %p153 = scmp.ne.s32.totalorder %s139, %s140
    %p154 = scmp.eq.s32.totalorder %s17, 1
    %p155 = por %p153, %p154
    %p157 = scmp.ne.s32.totalorder %s140, %s156
    %p158 = scmp.eq.s32.totalorder %s17, 0
    %p159 = por %p157, %p158
    %p160 = scmp.le.s32.totalorder 1, %s11
    %p161 = scmp.lt.s32.totalorder %s11, 3
    %p162 = pnand %p160, %p161
    %p163 = pneg %p162
    // Predicated region
    $region9: #{preact_block_forward.5} parent=5 // pred_check
      _
    $region10: #{preact_block_forward.5} parent=5 // pred_check_branch
      %165 = sbr.rel (%p162) target = $region12
    $region11: #{preact_block_forward.5} parent=5 // pred_region
      %s166 = ssub.s32 %s11, 1
      // Predicated region
      $region13: #{preact_block_forward.5} parent=11 // pred_check
        %p167 = pneg %p58
      $region14: #{preact_block_forward.5} parent=11 // pred_check_branch
        %169 = sbr.rel (%p167) target = $region16
      $region15: #{preact_block_forward.5} parent=11 // pred_region
        _
      $region16: #{preact_block_forward.5} parent=11 // pred_fallthru
        _
      // Predicated region
      $region17: #{preact_block_forward.5} parent=11 // pred_check
        %p170 = pneg %p79
      $region18: #{preact_block_forward.5} parent=11 // pred_check_branch
        %172 = sbr.rel (%p170) target = $region20
      $region19: #{preact_block_forward.5} parent=11 // pred_region
        _
      $region20: #{preact_block_forward.5} parent=11 // pred_fallthru
        _
      // Predicated region
      $region21: #{preact_block_forward.5} parent=11 // pred_check
        %p173 = pneg %p100
      $region22: #{preact_block_forward.5} parent=11 // pred_check_branch
        %175 = sbr.rel (%p173) target = $region24
      $region23: #{preact_block_forward.5} parent=11 // pred_region
        _
      $region24: #{preact_block_forward.5} parent=11 // pred_fallthru
        _
    $region12: #{preact_block_forward.5} parent=5 // pred_fallthru
      _
    %p176 = scmp.lt.s32.totalorder %s11, 2
    // Predicated region
    $region25: #{preact_block_forward.5} parent=5 // pred_check
      %p177 = pneg %p176
    $region26: #{preact_block_forward.5} parent=5 // pred_check_branch
      %179 = sbr.rel (%p177) target = $region28
    $region27: #{preact_block_forward.5} parent=5 // pred_region
      // Predicated region
      $region29: #{preact_block_forward.5} parent=27 // pred_check
        %p180 = pneg %p31
      $region30: #{preact_block_forward.5} parent=27 // pred_check_branch
        %182 = sbr.rel (%p180) target = $region32
      $region31: #{preact_block_forward.5} parent=27 // pred_region
        %p183 = scmp.lt.s32.totalorder %s11, 1
        %s184 = scalar_select %p183, %s11, 1
        %s185 = smul.addr %s184, 8
        %s186 = smul.addr %s185, 4
        %s187 = scalar_lea.vmem %s0, %s186
      $region32: #{preact_block_forward.5} parent=27 // pred_fallthru
        _
      // Predicated region
      $region33: #{preact_block_forward.5} parent=27 // pred_check
        %p188 = pneg %p120
      $region34: #{preact_block_forward.5} parent=27 // pred_check_branch
        %190 = sbr.rel (%p188) target = $region36
      $region35: #{preact_block_forward.5} parent=27 // pred_region
        %p191 = scmp.lt.s32.totalorder %s11, 1
        %s192 = scalar_select %p191, %s11, 1
        %s193 = smul.addr %s192, 8
        %s194 = smul.addr %s193, 4
        %s195 = scalar_lea.vmem %s4, %s194
      $region36: #{preact_block_forward.5} parent=27 // pred_fallthru
        _
    $region28: #{preact_block_forward.5} parent=5 // pred_fallthru
      _
    %p196 = scmp.le.s32.totalorder 1, %s11
    %p197 = scmp.lt.s32.totalorder %s11, 3
    %p198 = pnand %p196, %p197
    %p199 = pneg %p198
    // Predicated region
    $region37: #{preact_block_forward.5} parent=5 // pred_check
      _
    $region38: #{preact_block_forward.5} parent=5 // pred_check_branch
      %201 = sbr.rel (%p198) target = $region40
    $region39: #{preact_block_forward.5} parent=5 // pred_region
      %s202 = ssub.s32 %s11, 1
      %p203 = scmp.lt.s32.totalorder %s16, 1
      %s204 = scalar_select %p203, %s16, 1
      %s205 = smul.addr %s204, 8
      %s206 = smul.addr %s205, 4
      %s207 = scalar_lea.vmem %s0, %s206
      %p208 = pneg %p37
      %p209 = pneg %p34
      %p210 = pneg %p58
      %p211 = pneg %p55
      %p212 = pneg %p79
      %p213 = pneg %p76
      %p214 = pneg %p100
      %p215 = pneg %p97
      %p216 = scmp.lt.s32.totalorder %s16, 1
      %s217 = scalar_select %p216, %s16, 1
      %s218 = smul.addr %s217, 8
      %s219 = smul.addr %s218, 4
      %s220 = scalar_lea.vmem %s4, %s219
      %p221 = pneg %p126
      %p222 = pneg %p123
      %p223 = pneg %p152
      %p224 = pneg %p149
      %p225 = scmp.lt.s32.totalorder %s16, 1
      %s226 = scalar_select %p225, %s16, 1
      %s227 = smul.addr %s226, 8
      %s228 = smul.addr %s227, 8
      %s229 = scalar_lea.vmem %s5, %s228
      %p230 = scmp.lt.s32.totalorder %s16, 1
      %s231 = scalar_select %p230, %s16, 1
      %s232 = smul.addr %s231, 8
      %s233 = smul.addr %s232, 4
      %s234 = scalar_lea.vmem %s0, %s233
      %p235 = scmp.lt.s32.totalorder %s16, 1
      %s236 = scalar_select %p235, %s16, 1
      %s237 = smul.addr %s236, 8
      %s238 = smul.addr %s237, 4
      %s239 = scalar_lea.vmem %s4, %s238
      %p240 = scmp.lt.s32.totalorder %s16, 1
      %s241 = scalar_select %p240, %s16, 1
      %s242 = smul.addr %s241, 8
      %s243 = smul.addr %s242, 8
      %s244 = scalar_lea.vmem %s5, %s243
      %v246 = vld [vmem:[%s1] sm:$0x1]
      %v247 = vld [vmem:[%s2] sm:$0x1]
      %v248 = vld [vmem:[%s234] sm:$0xf]
      %v249 = vld [vmem:[%s234 + $0x4] sm:$0xf]
      %v250 = vld [vmem:[%s234 + $0x8] sm:$0xf]
      %v251 = vld [vmem:[%s234 + $0xc] sm:$0xf]
      %v252 = vld [vmem:[%s234 + $0x10] sm:$0xf]
      %v253 = vld [vmem:[%s234 + $0x14] sm:$0xf]
      %v254 = vld [vmem:[%s234 + $0x18] sm:$0xf]
      %v255 = vld [vmem:[%s234 + $0x1c] sm:$0xf]
      %v256 = vunpack.c.l.bf16 %v248
      %v257 = vunpack.c.l.bf16 %v249
      %v258 = vunpack.c.l.bf16 %v250
      %v259 = vunpack.c.l.bf16 %v251
      %v260 = vunpack.c.l.bf16 %v252
      %v261 = vunpack.c.l.bf16 %v253
      %v262 = vunpack.c.l.bf16 %v254
      %v263 = vunpack.c.l.bf16 %v255
      %v265 = vlaneseq
      %v266 = vshrl.u32 %v265, 7
      %v267 = vsub.s32 0, %v266
      %v268 = vrot.slane %v246, %v267
      %v270 = vmul.f32 %v256, %v268
      %v271 = vmul.f32 %v257, %v268
      %v272 = vmul.f32 %v258, %v268
      %v273 = vmul.f32 %v259, %v268
      %v274 = vmul.f32 %v260, %v268
      %v275 = vmul.f32 %v261, %v268
      %v276 = vmul.f32 %v262, %v268
      %v277 = vmul.f32 %v263, %v268
      %v279 = vlaneseq
      %v280 = vshrl.u32 %v279, 7
      %v281 = vsub.s32 0, %v280
      %v282 = vrot.slane %v247, %v281
      %v284 = vadd.f32 %v270, %v282
      %v285 = vadd.f32 %v271, %v282
      %v286 = vadd.f32 %v272, %v282
      %v287 = vadd.f32 %v273, %v282
      %v288 = vadd.f32 %v274, %v282
      %v289 = vadd.f32 %v275, %v282
      %v290 = vadd.f32 %v276, %v282
      %v291 = vadd.f32 %v277, %v282
      %v292 = vmax.f32 %v284, 0.0
      %v293 = vmax.f32 %v285, 0.0
      %v294 = vmax.f32 %v286, 0.0
      %v295 = vmax.f32 %v287, 0.0
      %v296 = vmax.f32 %v288, 0.0
      %v297 = vmax.f32 %v289, 0.0
      %v298 = vmax.f32 %v290, 0.0
      %v299 = vmax.f32 %v291, 0.0
      %v300 = vpack.c.bf16 %v292, %v292
      %v301 = vpack.c.bf16 %v293, %v293
      %v302 = vpack.c.bf16 %v294, %v294
      %v303 = vpack.c.bf16 %v295, %v295
      %v304 = vpack.c.bf16 %v296, %v296
      %v305 = vpack.c.bf16 %v297, %v297
      %v306 = vpack.c.bf16 %v298, %v298
      %v307 = vpack.c.bf16 %v299, %v299
      %vm308 = vcmask 60416
      %309 = vst.msk [vmem:[#allocation2] sm:$0xf] %vm308, 0
      %vm310 = vcmask 57344
      %311 = vst.msk [vmem:[#allocation2 + $0x4] sm:$0x1] %vm310, 0
      %s312 = scalar_lea.vmem [#allocation2], 72
      %313 = vst.msk [vmem:[%s312] sm:$0xf] %vm308, 0
      %314 = vst.msk [vmem:[%s312 + $0x4] sm:$0x1] %vm310, 0
      %vm315 = vcmask 57344
      %vm316 = vsmask.f32 256
      %vm317 = vmand %vm315, %vm316
      %v318 = vld [vmem:[#allocation2] sm:$0x1]
      %v319 = vsel %vm317, 0, %v318
      %320 = vst [vmem:[#allocation2] sm:$0x1] %v319
      %v321 = vld [vmem:[#allocation2 + $0x8] sm:$0x1]
      %v322 = vsel %vm317, 0, %v321
      %323 = vst [vmem:[#allocation2 + $0x8] sm:$0x1] %v322
      %v324 = vld [vmem:[#allocation2 + $0x10] sm:$0x1]
      %v325 = vsel %vm317, 0, %v324
      %326 = vst [vmem:[#allocation2 + $0x10] sm:$0x1] %v325
      %v327 = vld [vmem:[#allocation2 + $0x18] sm:$0x1]
      %v328 = vsel %vm317, 0, %v327
      %329 = vst [vmem:[#allocation2 + $0x18] sm:$0x1] %v328
      %v330 = vld [vmem:[#allocation2 + $0x20] sm:$0x1]
      %v331 = vsel %vm317, 0, %v330
      %332 = vst [vmem:[#allocation2 + $0x20] sm:$0x1] %v331
      %v333 = vld [vmem:[#allocation2 + $0x28] sm:$0x1]
      %v334 = vsel %vm317, 0, %v333
      %335 = vst [vmem:[#allocation2 + $0x28] sm:$0x1] %v334
      %v336 = vld [vmem:[#allocation2 + $0x30] sm:$0x1]
      %v337 = vsel %vm317, 0, %v336
      %338 = vst [vmem:[#allocation2 + $0x30] sm:$0x1] %v337
      %v339 = vld [vmem:[#allocation2 + $0x38] sm:$0x1]
      %v340 = vsel %vm317, 0, %v339
      %341 = vst [vmem:[#allocation2 + $0x38] sm:$0x1] %v340
      %v342 = vld [vmem:[#allocation2 + $0x40] sm:$0x1]
      %v343 = vsel %vm317, 0, %v342
      %344 = vst [vmem:[#allocation2 + $0x40] sm:$0x1] %v343
      %v345 = vld [vmem:[#allocation2 + $0x48] sm:$0x1]
      %v346 = vsel %vm317, 0, %v345
      %347 = vst [vmem:[#allocation2 + $0x48] sm:$0x1] %v346
      %vm348 = vsmask.f32 7938
      %vm349 = vmand %vm315, %vm348
      %v350 = vld [vmem:[#allocation2 + $0x4] sm:$0x1]
      %v351 = vsel %vm349, 0, %v350
      %352 = vst [vmem:[#allocation2 + $0x4] sm:$0x1] %v351
      %v353 = vld [vmem:[#allocation2 + $0xc] sm:$0x1]
      %v354 = vsel %vm349, 0, %v353
      %355 = vst [vmem:[#allocation2 + $0xc] sm:$0x1] %v354
      %v356 = vld [vmem:[#allocation2 + $0x14] sm:$0x1]
      %v357 = vsel %vm349, 0, %v356
      %358 = vst [vmem:[#allocation2 + $0x14] sm:$0x1] %v357
      %v359 = vld [vmem:[#allocation2 + $0x1c] sm:$0x1]
      %v360 = vsel %vm349, 0, %v359
      %361 = vst [vmem:[#allocation2 + $0x1c] sm:$0x1] %v360
      %v362 = vld [vmem:[#allocation2 + $0x24] sm:$0x1]
      %v363 = vsel %vm349, 0, %v362
      %364 = vst [vmem:[#allocation2 + $0x24] sm:$0x1] %v363
      %v365 = vld [vmem:[#allocation2 + $0x2c] sm:$0x1]
      %v366 = vsel %vm349, 0, %v365
      %367 = vst [vmem:[#allocation2 + $0x2c] sm:$0x1] %v366
      %v368 = vld [vmem:[#allocation2 + $0x34] sm:$0x1]
      %v369 = vsel %vm349, 0, %v368
      %370 = vst [vmem:[#allocation2 + $0x34] sm:$0x1] %v369
      %v371 = vld [vmem:[#allocation2 + $0x3c] sm:$0x1]
      %v372 = vsel %vm349, 0, %v371
      %373 = vst [vmem:[#allocation2 + $0x3c] sm:$0x1] %v372
      %v374 = vld [vmem:[#allocation2 + $0x44] sm:$0x1]
      %v375 = vsel %vm349, 0, %v374
      %376 = vst [vmem:[#allocation2 + $0x44] sm:$0x1] %v375
      %v377 = vld [vmem:[#allocation2 + $0x4c] sm:$0x1]
      %v378 = vsel %vm349, 0, %v377
      %379 = vst [vmem:[#allocation2 + $0x4c] sm:$0x1] %v378
      %v388 = vunpack.c.l.b16 %v300
      %v389 = vunpack.c.l.b16 %v301
      %v390 = vunpack.c.l.b16 %v302
      %v391 = vunpack.c.l.b16 %v303
      %v392 = vunpack.c.l.b16 %v304
      %v393 = vunpack.c.l.b16 %v305
      %v394 = vunpack.c.l.b16 %v306
      %v395 = vunpack.c.l.b16 %v307
      %v396 = vpack.c.b16 %v388, %v388
      %v397 = vpack.c.b16 %v389, %v389
      %v398 = vpack.c.b16 %v390, %v390
      %v399 = vpack.c.b16 %v391, %v391
      %v400 = vpack.c.b16 %v392, %v392
      %v401 = vpack.c.b16 %v393, %v393
      %v402 = vpack.c.b16 %v394, %v394
      %v403 = vpack.c.b16 %v395, %v395
      %v405 = vshrl.u32 %v396, 16
      %v407 = vrot.slane %v405, 7
      %v408 = vshll.u32 %v396, 16
      %v410 = vor.u32 %v407, %v408
      %v411 = vrot.slane %v407, 4
      %v413 = vshrl.u32 %v397, 16
      %v415 = vrot.slane %v413, 7
      %v416 = vshll.u32 %v397, 16
      %v418 = vor.u32 %v415, %v416
      %v419 = vrot.slane %v415, 4
      %v421 = vshrl.u32 %v398, 16
      %v423 = vrot.slane %v421, 7
      %v424 = vshll.u32 %v398, 16
      %v426 = vor.u32 %v423, %v424
      %v427 = vrot.slane %v423, 4
      %v429 = vshrl.u32 %v399, 16
      %v431 = vrot.slane %v429, 7
      %v432 = vshll.u32 %v399, 16
      %v434 = vor.u32 %v431, %v432
      %v435 = vrot.slane %v431, 4
      %v437 = vshrl.u32 %v400, 16
      %v439 = vrot.slane %v437, 7
      %v440 = vshll.u32 %v400, 16
      %v442 = vor.u32 %v439, %v440
      %v443 = vrot.slane %v439, 4
      %v445 = vshrl.u32 %v401, 16
      %v447 = vrot.slane %v445, 7
      %v448 = vshll.u32 %v401, 16
      %v450 = vor.u32 %v447, %v448
      %v451 = vrot.slane %v447, 4
      %v453 = vshrl.u32 %v402, 16
      %v455 = vrot.slane %v453, 7
      %v456 = vshll.u32 %v402, 16
      %v458 = vor.u32 %v455, %v456
      %v459 = vrot.slane %v455, 4
      %v461 = vshrl.u32 %v403, 16
      %v463 = vrot.slane %v461, 7
      %v464 = vshll.u32 %v403, 16
      %v466 = vor.u32 %v463, %v464
      %v467 = vrot.slane %v463, 4
      %s484 = scalar_lea.vmem [#allocation2], 8
      %vm485 = vcmask 60416
      %vm486 = vmand %vm485, %vm348
      %v487 = vld [vmem:[%s484] sm:$0xf]
      %v488 = vsel %vm486, %v410, %v487
      %489 = vst [vmem:[%s484] sm:$0xf] %v488
      %v490 = vld [vmem:[%s484 + $0x4] sm:$0x1]
      %v491 = vsel %vm317, %v411, %v490
      %492 = vst [vmem:[%s484 + $0x4] sm:$0x1] %v491
      %v493 = vld [vmem:[%s484 + $0x8] sm:$0xf]
      %v494 = vsel %vm486, %v418, %v493
      %495 = vst [vmem:[%s484 + $0x8] sm:$0xf] %v494
      %v496 = vld [vmem:[%s484 + $0xc] sm:$0x1]
      %v497 = vsel %vm317, %v419, %v496
      %498 = vst [vmem:[%s484 + $0xc] sm:$0x1] %v497
      %v499 = vld [vmem:[%s484 + $0x10] sm:$0xf]
      %v500 = vsel %vm486, %v426, %v499
      %501 = vst [vmem:[%s484 + $0x10] sm:$0xf] %v500
      %v502 = vld [vmem:[%s484 + $0x14] sm:$0x1]
      %v503 = vsel %vm317, %v427, %v502
      %504 = vst [vmem:[%s484 + $0x14] sm:$0x1] %v503
      %v505 = vld [vmem:[%s484 + $0x18] sm:$0xf]
      %v506 = vsel %vm486, %v434, %v505
      %507 = vst [vmem:[%s484 + $0x18] sm:$0xf] %v506
      %v508 = vld [vmem:[%s484 + $0x1c] sm:$0x1]
      %v509 = vsel %vm317, %v435, %v508
      %510 = vst [vmem:[%s484 + $0x1c] sm:$0x1] %v509
      %v511 = vld [vmem:[%s484 + $0x20] sm:$0xf]
      %v512 = vsel %vm486, %v442, %v511
      %513 = vst [vmem:[%s484 + $0x20] sm:$0xf] %v512
      %v514 = vld [vmem:[%s484 + $0x24] sm:$0x1]
      %v515 = vsel %vm317, %v443, %v514
      %516 = vst [vmem:[%s484 + $0x24] sm:$0x1] %v515
      %v517 = vld [vmem:[%s484 + $0x28] sm:$0xf]
      %v518 = vsel %vm486, %v450, %v517
      %519 = vst [vmem:[%s484 + $0x28] sm:$0xf] %v518
      %v520 = vld [vmem:[%s484 + $0x2c] sm:$0x1]
      %v521 = vsel %vm317, %v451, %v520
      %522 = vst [vmem:[%s484 + $0x2c] sm:$0x1] %v521
      %v523 = vld [vmem:[%s484 + $0x30] sm:$0xf]
      %v524 = vsel %vm486, %v458, %v523
      %525 = vst [vmem:[%s484 + $0x30] sm:$0xf] %v524
      %v526 = vld [vmem:[%s484 + $0x34] sm:$0x1]
      %v527 = vsel %vm317, %v459, %v526
      %528 = vst [vmem:[%s484 + $0x34] sm:$0x1] %v527
      %v529 = vld [vmem:[%s484 + $0x38] sm:$0xf]
      %v530 = vsel %vm486, %v466, %v529
      %531 = vst [vmem:[%s484 + $0x38] sm:$0xf] %v530
      %v532 = vld [vmem:[%s484 + $0x3c] sm:$0x1]
      %v533 = vsel %vm317, %v467, %v532
      %534 = vst [vmem:[%s484 + $0x3c] sm:$0x1] %v533
      %v535 = vld [vmem:[#allocation2] sm:$0xf]
      %v536 = vld [vmem:[#allocation2 + $0x8] sm:$0xf]
      %v537 = vld [vmem:[#allocation2 + $0x10] sm:$0xf]
      %v538 = vld [vmem:[#allocation2 + $0x18] sm:$0xf]
      %v539 = vld [vmem:[#allocation2 + $0x20] sm:$0xf]
      %v540 = vld [vmem:[#allocation2 + $0x28] sm:$0xf]
      %v541 = vld [vmem:[#allocation2 + $0x30] sm:$0xf]
      %v542 = vld [vmem:[#allocation2 + $0x38] sm:$0xf]
      %v543 = vld [vmem:[#allocation2 + $0x4] sm:$0x1]
      %v544 = vld [vmem:[#allocation2 + $0xc] sm:$0x1]
      %v545 = vld [vmem:[#allocation2 + $0x14] sm:$0x1]
      %v546 = vld [vmem:[#allocation2 + $0x1c] sm:$0x1]
      %v547 = vld [vmem:[#allocation2 + $0x24] sm:$0x1]
      %v548 = vld [vmem:[#allocation2 + $0x2c] sm:$0x1]
      %v549 = vld [vmem:[#allocation2 + $0x34] sm:$0x1]
      %v550 = vld [vmem:[#allocation2 + $0x3c] sm:$0x1]
      %v551 = vld [vmem:[#allocation2] sm:$0xe]
      %v552 = vld [vmem:[#allocation2 + $0x8] sm:$0xe]
      %v553 = vld [vmem:[#allocation2 + $0x10] sm:$0xe]
      %v554 = vld [vmem:[#allocation2 + $0x18] sm:$0xe]
      %v555 = vld [vmem:[#allocation2 + $0x20] sm:$0xe]
      %v556 = vld [vmem:[#allocation2 + $0x28] sm:$0xe]
      %v557 = vld [vmem:[#allocation2 + $0x30] sm:$0xe]
      %v558 = vld [vmem:[#allocation2 + $0x38] sm:$0xe]
      %v575 = vunpack.c.l.b16 %v535
      %v576 = vunpack.c.l.b16 %v543
      %v577 = vunpack.c.l.b16 %v536
      %v578 = vunpack.c.l.b16 %v544
      %v579 = vunpack.c.l.b16 %v537
      %v580 = vunpack.c.l.b16 %v545
      %v581 = vunpack.c.l.b16 %v538
      %v582 = vunpack.c.l.b16 %v546
      %v583 = vunpack.c.l.b16 %v539
      %v584 = vunpack.c.l.b16 %v547
      %v585 = vunpack.c.l.b16 %v540
      %v586 = vunpack.c.l.b16 %v548
      %v587 = vunpack.c.l.b16 %v541
      %v588 = vunpack.c.l.b16 %v549
      %v589 = vunpack.c.l.b16 %v542
      %v590 = vunpack.c.l.b16 %v550
      %v591 = vpack.c.b16 %v576, %v575
      %v592 = vpack.c.b16 %v578, %v577
      %v593 = vpack.c.b16 %v580, %v579
      %v594 = vpack.c.b16 %v582, %v581
      %v595 = vpack.c.b16 %v584, %v583
      %v596 = vpack.c.b16 %v586, %v585
      %v597 = vpack.c.b16 %v588, %v587
      %v598 = vpack.c.b16 %v590, %v589
      %v600 = vshrl.u32 %v591, 16
      %v602 = vshll.u32 %v591, 16
      %v604 = vrot.slane %v602, 1
      %v605 = vor.u32 %v600, %v604
      %v607 = vshrl.u32 %v592, 16
      %v609 = vshll.u32 %v592, 16
      %v611 = vrot.slane %v609, 1
      %v612 = vor.u32 %v607, %v611
      %v614 = vshrl.u32 %v593, 16
      %v616 = vshll.u32 %v593, 16
      %v618 = vrot.slane %v616, 1
      %v619 = vor.u32 %v614, %v618
      %v621 = vshrl.u32 %v594, 16
      %v623 = vshll.u32 %v594, 16
      %v625 = vrot.slane %v623, 1
      %v626 = vor.u32 %v621, %v625
      %v628 = vshrl.u32 %v595, 16
      %v630 = vshll.u32 %v595, 16
      %v632 = vrot.slane %v630, 1
      %v633 = vor.u32 %v628, %v632
      %v635 = vshrl.u32 %v596, 16
      %v637 = vshll.u32 %v596, 16
      %v639 = vrot.slane %v637, 1
      %v640 = vor.u32 %v635, %v639
      %v642 = vshrl.u32 %v597, 16
      %v644 = vshll.u32 %v597, 16
      %v646 = vrot.slane %v644, 1
      %v647 = vor.u32 %v642, %v646
      %v649 = vshrl.u32 %v598, 16
      %v651 = vshll.u32 %v598, 16
      %v653 = vrot.slane %v651, 1
      %v654 = vor.u32 %v649, %v653
      %655 = vrot.lane.b32.xlu0 %v605, 8
      %v656 = vpop.permute.xlu0 %655
      %657 = vrot.lane.b32.xlu0 %v612, 8
      %v658 = vpop.permute.xlu0 %657
      %659 = vrot.lane.b32.xlu0 %v619, 8
      %v660 = vpop.permute.xlu0 %659
      %661 = vrot.lane.b32.xlu0 %v626, 8
      %v662 = vpop.permute.xlu0 %661
      %663 = vrot.lane.b32.xlu0 %v633, 8
      %v664 = vpop.permute.xlu0 %663
      %665 = vrot.lane.b32.xlu0 %v640, 8
      %v666 = vpop.permute.xlu0 %665
      %667 = vrot.lane.b32.xlu0 %v647, 8
      %v668 = vpop.permute.xlu0 %667
      %669 = vrot.lane.b32.xlu0 %v654, 8
      %v670 = vpop.permute.xlu0 %669
      %v679 = vunpack.c.l.b16 %v551
      %v680 = vunpack.c.l.b16 %v552
      %v681 = vunpack.c.l.b16 %v553
      %v682 = vunpack.c.l.b16 %v554
      %v683 = vunpack.c.l.b16 %v555
      %v684 = vunpack.c.l.b16 %v556
      %v685 = vunpack.c.l.b16 %v557
      %v686 = vunpack.c.l.b16 %v558
      %v687 = vpack.c.b16 %v576, %v679
      %v688 = vpack.c.b16 %v578, %v680
      %v689 = vpack.c.b16 %v580, %v681
      %v690 = vpack.c.b16 %v582, %v682
      %v691 = vpack.c.b16 %v584, %v683
      %v692 = vpack.c.b16 %v586, %v684
      %v693 = vpack.c.b16 %v588, %v685
      %v694 = vpack.c.b16 %v590, %v686
      %v695 = vrot.slane %v687, 1
      %v696 = vrot.slane %v688, 1
      %v697 = vrot.slane %v689, 1
      %v698 = vrot.slane %v690, 1
      %v699 = vrot.slane %v691, 1
      %v700 = vrot.slane %v692, 1
      %v701 = vrot.slane %v693, 1
      %v702 = vrot.slane %v694, 1
      %703 = vrot.lane.b32.xlu0 %v695, 16
      %v704 = vpop.permute.xlu0 %703
      %705 = vrot.lane.b32.xlu0 %v696, 16
      %v706 = vpop.permute.xlu0 %705
      %707 = vrot.lane.b32.xlu0 %v697, 16
      %v708 = vpop.permute.xlu0 %707
      %709 = vrot.lane.b32.xlu0 %v698, 16
      %v710 = vpop.permute.xlu0 %709
      %711 = vrot.lane.b32.xlu0 %v699, 16
      %v712 = vpop.permute.xlu0 %711
      %713 = vrot.lane.b32.xlu0 %v700, 16
      %v714 = vpop.permute.xlu0 %713
      %715 = vrot.lane.b32.xlu0 %v701, 16
      %v716 = vpop.permute.xlu0 %715
      %717 = vrot.lane.b32.xlu0 %v702, 16
      %v718 = vpop.permute.xlu0 %717
      %vm719 = vcmask 64512
      %v722 = vsel %vm719, %v535, %v656
      %v725 = vsel %vm719, %v536, %v658
      %v728 = vsel %vm719, %v537, %v660
      %v731 = vsel %vm719, %v538, %v662
      %v734 = vsel %vm719, %v539, %v664
      %v737 = vsel %vm719, %v540, %v666
      %v740 = vsel %vm719, %v541, %v668
      %v743 = vsel %vm719, %v542, %v670
      %vm744 = vcmask 130048
      %v746 = vsel %vm744, %v722, %v704
      %v748 = vsel %vm744, %v725, %v706
      %v750 = vsel %vm744, %v728, %v708
      %v752 = vsel %vm744, %v731, %v710
      %v754 = vsel %vm744, %v734, %v712
      %v756 = vsel %vm744, %v737, %v714
      %v758 = vsel %vm744, %v740, %v716
      %v760 = vsel %vm744, %v743, %v718
      %v761 = vld [vmem:[%s3] sm:$0xf]
      %v762 = vld [vmem:[%s3 + $0x4] sm:$0xf]
      %v763 = vld [vmem:[%s3 + $0x8] sm:$0xf]
      %v764 = vld [vmem:[%s484] sm:$0xf]
      %v765 = vld [vmem:[%s484 + $0x8] sm:$0xf]
      %v766 = vld [vmem:[%s484 + $0x10] sm:$0xf]
      %v767 = vld [vmem:[%s484 + $0x18] sm:$0xf]
      %v768 = vld [vmem:[%s484 + $0x20] sm:$0xf]
      %v769 = vld [vmem:[%s484 + $0x28] sm:$0xf]
      %v770 = vld [vmem:[%s484 + $0x30] sm:$0xf]
      %v771 = vld [vmem:[%s484 + $0x38] sm:$0xf]
      %v772 = vld [vmem:[%s484 + $0x4] sm:$0x1]
      %v773 = vld [vmem:[%s484 + $0xc] sm:$0x1]
      %v774 = vld [vmem:[%s484 + $0x14] sm:$0x1]
      %v775 = vld [vmem:[%s484 + $0x1c] sm:$0x1]
      %v776 = vld [vmem:[%s484 + $0x24] sm:$0x1]
      %v777 = vld [vmem:[%s484 + $0x2c] sm:$0x1]
      %v778 = vld [vmem:[%s484 + $0x34] sm:$0x1]
      %v779 = vld [vmem:[%s484 + $0x3c] sm:$0x1]
      %v780 = vld [vmem:[%s484] sm:$0xe]
      %v781 = vld [vmem:[%s484 + $0x8] sm:$0xe]
      %v782 = vld [vmem:[%s484 + $0x10] sm:$0xe]
      %v783 = vld [vmem:[%s484 + $0x18] sm:$0xe]
      %v784 = vld [vmem:[%s484 + $0x20] sm:$0xe]
      %v785 = vld [vmem:[%s484 + $0x28] sm:$0xe]
      %v786 = vld [vmem:[%s484 + $0x30] sm:$0xe]
      %v787 = vld [vmem:[%s484 + $0x38] sm:$0xe]
      %v804 = vunpack.c.l.b16 %v764
      %v805 = vunpack.c.l.b16 %v772
      %v806 = vunpack.c.l.b16 %v765
      %v807 = vunpack.c.l.b16 %v773
      %v808 = vunpack.c.l.b16 %v766
      %v809 = vunpack.c.l.b16 %v774
      %v810 = vunpack.c.l.b16 %v767
      %v811 = vunpack.c.l.b16 %v775
      %v812 = vunpack.c.l.b16 %v768
      %v813 = vunpack.c.l.b16 %v776
      %v814 = vunpack.c.l.b16 %v769
      %v815 = vunpack.c.l.b16 %v777
      %v816 = vunpack.c.l.b16 %v770
      %v817 = vunpack.c.l.b16 %v778
      %v818 = vunpack.c.l.b16 %v771
      %v819 = vunpack.c.l.b16 %v779
      %v820 = vpack.c.b16 %v805, %v804
      %v821 = vpack.c.b16 %v807, %v806
      %v822 = vpack.c.b16 %v809, %v808
      %v823 = vpack.c.b16 %v811, %v810
      %v824 = vpack.c.b16 %v813, %v812
      %v825 = vpack.c.b16 %v815, %v814
      %v826 = vpack.c.b16 %v817, %v816
      %v827 = vpack.c.b16 %v819, %v818
      %v829 = vshrl.u32 %v820, 16
      %v831 = vshll.u32 %v820, 16
      %v833 = vrot.slane %v831, 1
      %v834 = vor.u32 %v829, %v833
      %v836 = vshrl.u32 %v821, 16
      %v838 = vshll.u32 %v821, 16
      %v840 = vrot.slane %v838, 1
      %v841 = vor.u32 %v836, %v840
      %v843 = vshrl.u32 %v822, 16
      %v845 = vshll.u32 %v822, 16
      %v847 = vrot.slane %v845, 1
      %v848 = vor.u32 %v843, %v847
      %v850 = vshrl.u32 %v823, 16
      %v852 = vshll.u32 %v823, 16
      %v854 = vrot.slane %v852, 1
      %v855 = vor.u32 %v850, %v854
      %v857 = vshrl.u32 %v824, 16
      %v859 = vshll.u32 %v824, 16
      %v861 = vrot.slane %v859, 1
      %v862 = vor.u32 %v857, %v861
      %v864 = vshrl.u32 %v825, 16
      %v866 = vshll.u32 %v825, 16
      %v868 = vrot.slane %v866, 1
      %v869 = vor.u32 %v864, %v868
      %v871 = vshrl.u32 %v826, 16
      %v873 = vshll.u32 %v826, 16
      %v875 = vrot.slane %v873, 1
      %v876 = vor.u32 %v871, %v875
      %v878 = vshrl.u32 %v827, 16
      %v880 = vshll.u32 %v827, 16
      %v882 = vrot.slane %v880, 1
      %v883 = vor.u32 %v878, %v882
      %884 = vrot.lane.b32.xlu0 %v834, 8
      %v885 = vpop.permute.xlu0 %884
      %886 = vrot.lane.b32.xlu0 %v841, 8
      %v887 = vpop.permute.xlu0 %886
      %888 = vrot.lane.b32.xlu0 %v848, 8
      %v889 = vpop.permute.xlu0 %888
      %890 = vrot.lane.b32.xlu0 %v855, 8
      %v891 = vpop.permute.xlu0 %890
      %892 = vrot.lane.b32.xlu0 %v862, 8
      %v893 = vpop.permute.xlu0 %892
      %894 = vrot.lane.b32.xlu0 %v869, 8
      %v895 = vpop.permute.xlu0 %894
      %896 = vrot.lane.b32.xlu0 %v876, 8
      %v897 = vpop.permute.xlu0 %896
      %898 = vrot.lane.b32.xlu0 %v883, 8
      %v899 = vpop.permute.xlu0 %898
      %v908 = vunpack.c.l.b16 %v780
      %v909 = vunpack.c.l.b16 %v781
      %v910 = vunpack.c.l.b16 %v782
      %v911 = vunpack.c.l.b16 %v783
      %v912 = vunpack.c.l.b16 %v784
      %v913 = vunpack.c.l.b16 %v785
      %v914 = vunpack.c.l.b16 %v786
      %v915 = vunpack.c.l.b16 %v787
      %v916 = vpack.c.b16 %v805, %v908
      %v917 = vpack.c.b16 %v807, %v909
      %v918 = vpack.c.b16 %v809, %v910
      %v919 = vpack.c.b16 %v811, %v911
      %v920 = vpack.c.b16 %v813, %v912
      %v921 = vpack.c.b16 %v815, %v913
      %v922 = vpack.c.b16 %v817, %v914
      %v923 = vpack.c.b16 %v819, %v915
      %v924 = vrot.slane %v916, 1
      %v925 = vrot.slane %v917, 1
      %v926 = vrot.slane %v918, 1
      %v927 = vrot.slane %v919, 1
      %v928 = vrot.slane %v920, 1
      %v929 = vrot.slane %v921, 1
      %v930 = vrot.slane %v922, 1
      %v931 = vrot.slane %v923, 1
      %932 = vrot.lane.b32.xlu0 %v924, 16
      %v933 = vpop.permute.xlu0 %932
      %934 = vrot.lane.b32.xlu0 %v925, 16
      %v935 = vpop.permute.xlu0 %934
      %936 = vrot.lane.b32.xlu0 %v926, 16
      %v937 = vpop.permute.xlu0 %936
      %938 = vrot.lane.b32.xlu0 %v927, 16
      %v939 = vpop.permute.xlu0 %938
      %940 = vrot.lane.b32.xlu0 %v928, 16
      %v941 = vpop.permute.xlu0 %940
      %942 = vrot.lane.b32.xlu0 %v929, 16
      %v943 = vpop.permute.xlu0 %942
      %944 = vrot.lane.b32.xlu0 %v930, 16
      %v945 = vpop.permute.xlu0 %944
      %946 = vrot.lane.b32.xlu0 %v931, 16
      %v947 = vpop.permute.xlu0 %946
      %v950 = vsel %vm719, %v764, %v885
      %v953 = vsel %vm719, %v765, %v887
      %v956 = vsel %vm719, %v766, %v889
      %v959 = vsel %vm719, %v767, %v891
      %v962 = vsel %vm719, %v768, %v893
      %v965 = vsel %vm719, %v769, %v895
      %v968 = vsel %vm719, %v770, %v897
      %v971 = vsel %vm719, %v771, %v899
      %v973 = vsel %vm744, %v950, %v933
      %v975 = vsel %vm744, %v953, %v935
      %v977 = vsel %vm744, %v956, %v937
      %v979 = vsel %vm744, %v959, %v939
      %v981 = vsel %vm744, %v962, %v941
      %v983 = vsel %vm744, %v965, %v943
      %v985 = vsel %vm744, %v968, %v945
      %v987 = vsel %vm744, %v971, %v947
      %s988 = scalar_lea.vmem %s3, 12
      %v989 = vld [vmem:[%s988] sm:$0xf]
      %v990 = vld [vmem:[%s988 + $0x4] sm:$0xf]
      %v991 = vld [vmem:[%s988 + $0x8] sm:$0xf]
      %v1000 = vunpack.c.l.b16 %v973
      %v1001 = vunpack.c.l.b16 %v975
      %v1002 = vunpack.c.l.b16 %v977
      %v1003 = vunpack.c.l.b16 %v979
      %v1004 = vunpack.c.l.b16 %v981
      %v1005 = vunpack.c.l.b16 %v983
      %v1006 = vunpack.c.l.b16 %v985
      %v1007 = vunpack.c.l.b16 %v987
      %v1008 = vpack.c.b16 %v1001, %v1000
      %v1009 = vpack.c.b16 %v1003, %v1002
      %v1010 = vpack.c.b16 %v1005, %v1004
      %v1011 = vpack.c.b16 %v1007, %v1006
      %v1015 = vunpack.c.l.b16 %v989
      %v1016 = vunpack.c.l.b16 %v990
      %v1017 = vunpack.c.l.b16 %v991
      %v1018 = vpack.c.b16 %v1016, %v1015
      %v1019 = vpack.c.b16 %v1017, %v1017
      %vm1021 = vcmask 195584
      %v1023 = vsel %vm1021, %v1008, 0
      %v1026 = vsel %vm1021, %v1009, 0
      %v1029 = vsel %vm1021, %v1010, 0
      %v1032 = vsel %vm1021, %v1011, 0
      %vm1034 = vcmask 1043456
      %v1036 = vsel %vm1034, %v1019, 0
      %1038 = vmatprep.subr.bf16.mxu0 0
      %1039 = vmatpush1.bf16.msra.mxu0 %v1018
      %1040 = vmatprep.subr.bf16.mxu0 0
      %1041 = vmatpush1.bf16.msra.mxu0 %v1036
      %1042 = vmatprep.subr.bf16.mxu0 0
      %1043 = vmatpush1.bf16.msra.mxu0 0
      %1044 = vmatprep.subr.bf16.mxu0 0
      %1045 = vmatpush1.bf16.msra.mxu0 0
      %1046 = vmatprep.subr.bf16.mxu0 0
      %1047 = vmatpush1.bf16.msra.mxu0 0
      %1048 = vmatprep.subr.bf16.mxu0 0
      %1049 = vmatpush1.bf16.msra.mxu0 0
      %1050 = vmatprep.subr.bf16.mxu0 0
      %1051 = vmatpush1.bf16.msra.mxu0 0
      %1052 = vmatprep.subr.bf16.mxu0 0
      %1053 = vmatpush1.bf16.msra.mxu0 0
      %1054 = vmatprep.subr.bf16.mxu0 0
      %1055 = vmatpush1.bf16.msra.mxu0 0
      %1056 = vmatprep.subr.bf16.mxu0 0
      %1057 = vmatpush1.bf16.msra.mxu0 0
      %1058 = vmatprep.subr.bf16.mxu0 0
      %1059 = vmatpush1.bf16.msra.mxu0 0
      %1060 = vmatprep.subr.bf16.mxu0 0
      %1061 = vmatpush1.bf16.msra.mxu0 0
      %1062 = vmatprep.subr.bf16.mxu0 0
      %1063 = vmatpush1.bf16.msra.mxu0 0
      %1064 = vmatprep.subr.bf16.mxu0 0
      %1065 = vmatpush1.bf16.msra.mxu0 0
      %1066 = vmatprep.subr.bf16.mxu0 0
      %1067 = vmatpush1.bf16.msra.mxu0 0
      %1068 = vmatprep.subr.bf16.mxu0 0
      %1069 = vmatpush1.bf16.msra.mxu0 0
      %1070 = vmatprep.mubr.bf16.mxu0 0
      %1071 = vmatmul.mubr.bf16.gmra.mrb[0].mxu0 %v1023
      %v1072 = vpop.f32.mrb[0].mxu0
      %v1073 = vadd.f32 0.0, %v1072
      %v1074 = vpop.f32.mrb[0].mxu0
      %v1075 = vpop.f32.mrb[0].mxu0
      %v1076 = vadd.f32 0.0, %v1075
      %v1077 = vpop.f32.mrb[0].mxu0
      %1078 = vmatprep.mubr.bf16.mxu0 0
      %1079 = vmatmul.mubr.bf16.gmra.mrb[0].mxu0 %v1026
      %v1080 = vpop.f32.mrb[0].mxu0
      %v1081 = vadd.f32 0.0, %v1080
      %v1082 = vpop.f32.mrb[0].mxu0
      %v1083 = vpop.f32.mrb[0].mxu0
      %v1084 = vadd.f32 0.0, %v1083
      %v1085 = vpop.f32.mrb[0].mxu0
      %1086 = vmatprep.mubr.bf16.mxu0 0
      %1087 = vmatmul.mubr.bf16.gmra.mrb[0].mxu0 %v1029
      %v1088 = vpop.f32.mrb[0].mxu0
      %v1089 = vadd.f32 0.0, %v1088
      %v1090 = vpop.f32.mrb[0].mxu0
      %v1091 = vpop.f32.mrb[0].mxu0
      %v1092 = vadd.f32 0.0, %v1091
      %v1093 = vpop.f32.mrb[0].mxu0
      %1094 = vmatprep.mubr.bf16.mxu0 0
      %1095 = vmatmul.mubr.bf16.gmra.mrb[0].mxu0 %v1032
      %v1096 = vpop.f32.mrb[0].mxu0
      %v1097 = vadd.f32 0.0, %v1096
      %v1098 = vpop.f32.mrb[0].mxu0
      %v1099 = vpop.f32.mrb[0].mxu0
      %v1100 = vadd.f32 0.0, %v1099
      %v1101 = vpop.f32.mrb[0].mxu0
      %1102 = vdwg.mxu0
      %v1111 = vunpack.c.l.b16 %v746
      %v1112 = vunpack.c.l.b16 %v748
      %v1113 = vunpack.c.l.b16 %v750
      %v1114 = vunpack.c.l.b16 %v752
      %v1115 = vunpack.c.l.b16 %v754
      %v1116 = vunpack.c.l.b16 %v756
      %v1117 = vunpack.c.l.b16 %v758
      %v1118 = vunpack.c.l.b16 %v760
      %v1119 = vpack.c.b16 %v1112, %v1111
      %v1120 = vpack.c.b16 %v1114, %v1113
      %v1121 = vpack.c.b16 %v1116, %v1115
      %v1122 = vpack.c.b16 %v1118, %v1117
      %v1126 = vunpack.c.l.b16 %v761
      %v1127 = vunpack.c.l.b16 %v762
      %v1128 = vunpack.c.l.b16 %v763
      %v1129 = vpack.c.b16 %v1127, %v1126
      %v1130 = vpack.c.b16 %v1128, %v1128
      %v1133 = vsel %vm1021, %v1119, 0
      %v1136 = vsel %vm1021, %v1120, 0
      %v1139 = vsel %vm1021, %v1121, 0
      %v1142 = vsel %vm1021, %v1122, 0
      %v1145 = vsel %vm1034, %v1130, 0
      %1147 = vmatprep.subr.bf16.mxu0 0
      %1148 = vmatpush1.bf16.msra.mxu0 %v1129
      %1149 = vmatprep.subr.bf16.mxu0 0
      %1150 = vmatpush1.bf16.msra.mxu0 %v1145
      %1151 = vmatprep.subr.bf16.mxu0 0
      %1152 = vmatpush1.bf16.msra.mxu0 0
      %1153 = vmatprep.subr.bf16.mxu0 0
      %1154 = vmatpush1.bf16.msra.mxu0 0
      %1155 = vmatprep.subr.bf16.mxu0 0
      %1156 = vmatpush1.bf16.msra.mxu0 0
      %1157 = vmatprep.subr.bf16.mxu0 0
      %1158 = vmatpush1.bf16.msra.mxu0 0
      %1159 = vmatprep.subr.bf16.mxu0 0
      %1160 = vmatpush1.bf16.msra.mxu0 0
      %1161 = vmatprep.subr.bf16.mxu0 0
      %1162 = vmatpush1.bf16.msra.mxu0 0
      %1163 = vmatprep.subr.bf16.mxu0 0
      %1164 = vmatpush1.bf16.msra.mxu0 0
      %1165 = vmatprep.subr.bf16.mxu0 0
      %1166 = vmatpush1.bf16.msra.mxu0 0
      %1167 = vmatprep.subr.bf16.mxu0 0
      %1168 = vmatpush1.bf16.msra.mxu0 0
      %1169 = vmatprep.subr.bf16.mxu0 0
      %1170 = vmatpush1.bf16.msra.mxu0 0
      %1171 = vmatprep.subr.bf16.mxu0 0
      %1172 = vmatpush1.bf16.msra.mxu0 0
      %1173 = vmatprep.subr.bf16.mxu0 0
      %1174 = vmatpush1.bf16.msra.mxu0 0
      %1175 = vmatprep.subr.bf16.mxu0 0
      %1176 = vmatpush1.bf16.msra.mxu0 0
      %1177 = vmatprep.subr.bf16.mxu0 0
      %1178 = vmatpush1.bf16.msra.mxu0 0
      %1179 = vmatprep.mubr.bf16.mxu0 0
      %1180 = vmatmul.mubr.bf16.gmra.mrb[0].mxu0 %v1133
      %v1181 = vpop.f32.mrb[0].mxu0
      %v1182 = vadd.f32 %v1073, %v1181
      %v1183 = vpop.f32.mrb[0].mxu0
      %v1184 = vpop.f32.mrb[0].mxu0
      %v1185 = vadd.f32 %v1076, %v1184
      %v1186 = vpop.f32.mrb[0].mxu0
      %1187 = vmatprep.mubr.bf16.mxu0 0
      %1188 = vmatmul.mubr.bf16.gmra.mrb[0].mxu0 %v1136
      %v1189 = vpop.f32.mrb[0].mxu0
      %v1190 = vadd.f32 %v1081, %v1189
      %v1191 = vpop.f32.mrb[0].mxu0
      %v1192 = vpop.f32.mrb[0].mxu0
      %v1193 = vadd.f32 %v1084, %v1192
      %v1194 = vpop.f32.mrb[0].mxu0
      %1195 = vmatprep.mubr.bf16.mxu0 0
      %1196 = vmatmul.mubr.bf16.gmra.mrb[0].mxu0 %v1139
      %v1197 = vpop.f32.mrb[0].mxu0
      %v1198 = vadd.f32 %v1089, %v1197
      %v1199 = vpop.f32.mrb[0].mxu0
      %v1200 = vpop.f32.mrb[0].mxu0
      %v1201 = vadd.f32 %v1092, %v1200
      %v1202 = vpop.f32.mrb[0].mxu0
      %1203 = vmatprep.mubr.bf16.mxu0 0
      %1204 = vmatmul.mubr.bf16.gmra.mrb[0].mxu0 %v1142
      %v1205 = vpop.f32.mrb[0].mxu0
      %v1206 = vadd.f32 %v1097, %v1205
      %v1207 = vpop.f32.mrb[0].mxu0
      %v1208 = vpop.f32.mrb[0].mxu0
      %v1209 = vadd.f32 %v1100, %v1208
      %v1210 = vpop.f32.mrb[0].mxu0
      %1211 = vdwg.mxu0
      %s1212 = scalar_lea.vmem [#allocation2], 16
      %v1213 = vld [vmem:[%s1212] sm:$0xf]
      %v1214 = vld [vmem:[%s1212 + $0x8] sm:$0xf]
      %v1215 = vld [vmem:[%s1212 + $0x10] sm:$0xf]
      %v1216 = vld [vmem:[%s1212 + $0x18] sm:$0xf]
      %v1217 = vld [vmem:[%s1212 + $0x20] sm:$0xf]
      %v1218 = vld [vmem:[%s1212 + $0x28] sm:$0xf]
      %v1219 = vld [vmem:[%s1212 + $0x30] sm:$0xf]
      %v1220 = vld [vmem:[%s1212 + $0x38] sm:$0xf]
      %v1221 = vld [vmem:[%s1212 + $0x4] sm:$0x1]
      %v1222 = vld [vmem:[%s1212 + $0xc] sm:$0x1]
      %v1223 = vld [vmem:[%s1212 + $0x14] sm:$0x1]
      %v1224 = vld [vmem:[%s1212 + $0x1c] sm:$0x1]
      %v1225 = vld [vmem:[%s1212 + $0x24] sm:$0x1]
      %v1226 = vld [vmem:[%s1212 + $0x2c] sm:$0x1]
      %v1227 = vld [vmem:[%s1212 + $0x34] sm:$0x1]
      %v1228 = vld [vmem:[%s1212 + $0x3c] sm:$0x1]
      %v1229 = vld [vmem:[%s1212] sm:$0xe]
      %v1230 = vld [vmem:[%s1212 + $0x8] sm:$0xe]
      %v1231 = vld [vmem:[%s1212 + $0x10] sm:$0xe]
      %v1232 = vld [vmem:[%s1212 + $0x18] sm:$0xe]
      %v1233 = vld [vmem:[%s1212 + $0x20] sm:$0xe]
      %v1234 = vld [vmem:[%s1212 + $0x28] sm:$0xe]
      %v1235 = vld [vmem:[%s1212 + $0x30] sm:$0xe]
      %v1236 = vld [vmem:[%s1212 + $0x38] sm:$0xe]
      %v1253 = vunpack.c.l.b16 %v1213
      %v1254 = vunpack.c.l.b16 %v1221
      %v1255 = vunpack.c.l.b16 %v1214
      %v1256 = vunpack.c.l.b16 %v1222
      %v1257 = vunpack.c.l.b16 %v1215
      %v1258 = vunpack.c.l.b16 %v1223
      %v1259 = vunpack.c.l.b16 %v1216
      %v1260 = vunpack.c.l.b16 %v1224
      %v1261 = vunpack.c.l.b16 %v1217
      %v1262 = vunpack.c.l.b16 %v1225
      %v1263 = vunpack.c.l.b16 %v1218
      %v1264 = vunpack.c.l.b16 %v1226
      %v1265 = vunpack.c.l.b16 %v1219
      %v1266 = vunpack.c.l.b16 %v1227
      %v1267 = vunpack.c.l.b16 %v1220
      %v1268 = vunpack.c.l.b16 %v1228
      %v1269 = vpack.c.b16 %v1254, %v1253
      %v1270 = vpack.c.b16 %v1256, %v1255
      %v1271 = vpack.c.b16 %v1258, %v1257
      %v1272 = vpack.c.b16 %v1260, %v1259
      %v1273 = vpack.c.b16 %v1262, %v1261
      %v1274 = vpack.c.b16 %v1264, %v1263
      %v1275 = vpack.c.b16 %v1266, %v1265
      %v1276 = vpack.c.b16 %v1268, %v1267
      %v1278 = vshrl.u32 %v1269, 16
      %v1280 = vshll.u32 %v1269, 16
      %v1282 = vrot.slane %v1280, 1
      %v1283 = vor.u32 %v1278, %v1282
      %v1285 = vshrl.u32 %v1270, 16
      %v1287 = vshll.u32 %v1270, 16
      %v1289 = vrot.slane %v1287, 1
      %v1290 = vor.u32 %v1285, %v1289
      %v1292 = vshrl.u32 %v1271, 16
      %v1294 = vshll.u32 %v1271, 16
      %v1296 = vrot.slane %v1294, 1
      %v1297 = vor.u32 %v1292, %v1296
      %v1299 = vshrl.u32 %v1272, 16
      %v1301 = vshll.u32 %v1272, 16
      %v1303 = vrot.slane %v1301, 1
      %v1304 = vor.u32 %v1299, %v1303
      %v1306 = vshrl.u32 %v1273, 16
      %v1308 = vshll.u32 %v1273, 16
      %v1310 = vrot.slane %v1308, 1
      %v1311 = vor.u32 %v1306, %v1310
      %v1313 = vshrl.u32 %v1274, 16
      %v1315 = vshll.u32 %v1274, 16
      %v1317 = vrot.slane %v1315, 1
      %v1318 = vor.u32 %v1313, %v1317
      %v1320 = vshrl.u32 %v1275, 16
      %v1322 = vshll.u32 %v1275, 16
      %v1324 = vrot.slane %v1322, 1
      %v1325 = vor.u32 %v1320, %v1324
      %v1327 = vshrl.u32 %v1276, 16
      %v1329 = vshll.u32 %v1276, 16
      %v1331 = vrot.slane %v1329, 1
      %v1332 = vor.u32 %v1327, %v1331
      %1333 = vrot.lane.b32.xlu0 %v1283, 8
      %v1334 = vpop.permute.xlu0 %1333
      %1335 = vrot.lane.b32.xlu0 %v1290, 8
      %v1336 = vpop.permute.xlu0 %1335
      %1337 = vrot.lane.b32.xlu0 %v1297, 8
      %v1338 = vpop.permute.xlu0 %1337
      %1339 = vrot.lane.b32.xlu0 %v1304, 8
      %v1340 = vpop.permute.xlu0 %1339
      %1341 = vrot.lane.b32.xlu0 %v1311, 8
      %v1342 = vpop.permute.xlu0 %1341
      %1343 = vrot.lane.b32.xlu0 %v1318, 8
      %v1344 = vpop.permute.xlu0 %1343
      %1345 = vrot.lane.b32.xlu0 %v1325, 8
      %v1346 = vpop.permute.xlu0 %1345
      %1347 = vrot.lane.b32.xlu0 %v1332, 8
      %v1348 = vpop.permute.xlu0 %1347
      %v1357 = vunpack.c.l.b16 %v1229
      %v1358 = vunpack.c.l.b16 %v1230
      %v1359 = vunpack.c.l.b16 %v1231
      %v1360 = vunpack.c.l.b16 %v1232
      %v1361 = vunpack.c.l.b16 %v1233
      %v1362 = vunpack.c.l.b16 %v1234
      %v1363 = vunpack.c.l.b16 %v1235
      %v1364 = vunpack.c.l.b16 %v1236
      %v1365 = vpack.c.b16 %v1254, %v1357
      %v1366 = vpack.c.b16 %v1256, %v1358
      %v1367 = vpack.c.b16 %v1258, %v1359
      %v1368 = vpack.c.b16 %v1260, %v1360
      %v1369 = vpack.c.b16 %v1262, %v1361
      %v1370 = vpack.c.b16 %v1264, %v1362
      %v1371 = vpack.c.b16 %v1266, %v1363
      %v1372 = vpack.c.b16 %v1268, %v1364
      %v1373 = vrot.slane %v1365, 1
      %v1374 = vrot.slane %v1366, 1
      %v1375 = vrot.slane %v1367, 1
      %v1376 = vrot.slane %v1368, 1
      %v1377 = vrot.slane %v1369, 1
      %v1378 = vrot.slane %v1370, 1
      %v1379 = vrot.slane %v1371, 1
      %v1380 = vrot.slane %v1372, 1
      %1381 = vrot.lane.b32.xlu0 %v1373, 16
      %v1382 = vpop.permute.xlu0 %1381
      %1383 = vrot.lane.b32.xlu0 %v1374, 16
      %v1384 = vpop.permute.xlu0 %1383
      %1385 = vrot.lane.b32.xlu0 %v1375, 16
      %v1386 = vpop.permute.xlu0 %1385
      %1387 = vrot.lane.b32.xlu0 %v1376, 16
      %v1388 = vpop.permute.xlu0 %1387
      %1389 = vrot.lane.b32.xlu0 %v1377, 16
      %v1390 = vpop.permute.xlu0 %1389
      %1391 = vrot.lane.b32.xlu0 %v1378, 16
      %v1392 = vpop.permute.xlu0 %1391
      %1393 = vrot.lane.b32.xlu0 %v1379, 16
      %v1394 = vpop.permute.xlu0 %1393
      %1395 = vrot.lane.b32.xlu0 %v1380, 16
      %v1396 = vpop.permute.xlu0 %1395
      %v1399 = vsel %vm719, %v1213, %v1334
      %v1402 = vsel %vm719, %v1214, %v1336
      %v1405 = vsel %vm719, %v1215, %v1338
      %v1408 = vsel %vm719, %v1216, %v1340
      %v1411 = vsel %vm719, %v1217, %v1342
      %v1414 = vsel %vm719, %v1218, %v1344
      %v1417 = vsel %vm719, %v1219, %v1346
      %v1420 = vsel %vm719, %v1220, %v1348
      %v1422 = vsel %vm744, %v1399, %v1382
      %v1424 = vsel %vm744, %v1402, %v1384
      %v1426 = vsel %vm744, %v1405, %v1386
      %v1428 = vsel %vm744, %v1408, %v1388
      %v1430 = vsel %vm744, %v1411, %v1390
      %v1432 = vsel %vm744, %v1414, %v1392
      %v1434 = vsel %vm744, %v1417, %v1394
      %v1436 = vsel %vm744, %v1420, %v1396
      %s1437 = scalar_lea.vmem %s3, 24
      %v1438 = vld [vmem:[%s1437] sm:$0xf]
      %v1439 = vld [vmem:[%s1437 + $0x4] sm:$0xf]
      %v1440 = vld [vmem:[%s1437 + $0x8] sm:$0xf]
      %v1449 = vunpack.c.l.b16 %v1422
      %v1450 = vunpack.c.l.b16 %v1424
      %v1451 = vunpack.c.l.b16 %v1426
      %v1452 = vunpack.c.l.b16 %v1428
      %v1453 = vunpack.c.l.b16 %v1430
      %v1454 = vunpack.c.l.b16 %v1432
      %v1455 = vunpack.c.l.b16 %v1434
      %v1456 = vunpack.c.l.b16 %v1436
      %v1457 = vpack.c.b16 %v1450, %v1449
      %v1458 = vpack.c.b16 %v1452, %v1451
      %v1459 = vpack.c.b16 %v1454, %v1453
      %v1460 = vpack.c.b16 %v1456, %v1455
      %v1464 = vunpack.c.l.b16 %v1438
      %v1465 = vunpack.c.l.b16 %v1439
      %v1466 = vunpack.c.l.b16 %v1440
      %v1467 = vpack.c.b16 %v1465, %v1464
      %v1468 = vpack.c.b16 %v1466, %v1466
      %v1471 = vsel %vm1021, %v1457, 0
      %v1474 = vsel %vm1021, %v1458, 0
      %v1477 = vsel %vm1021, %v1459, 0
      %v1480 = vsel %vm1021, %v1460, 0
      %v1483 = vsel %vm1034, %v1468, 0
      %1485 = vmatprep.subr.bf16.mxu0 0
      %1486 = vmatpush1.bf16.msra.mxu0 %v1467
      %1487 = vmatprep.subr.bf16.mxu0 0
      %1488 = vmatpush1.bf16.msra.mxu0 %v1483
      %1489 = vmatprep.subr.bf16.mxu0 0
      %1490 = vmatpush1.bf16.msra.mxu0 0
      %1491 = vmatprep.subr.bf16.mxu0 0
      %1492 = vmatpush1.bf16.msra.mxu0 0
      %1493 = vmatprep.subr.bf16.mxu0 0
      %1494 = vmatpush1.bf16.msra.mxu0 0
      %1495 = vmatprep.subr.bf16.mxu0 0
      %1496 = vmatpush1.bf16.msra.mxu0 0
      %1497 = vmatprep.subr.bf16.mxu0 0
      %1498 = vmatpush1.bf16.msra.mxu0 0
      %1499 = vmatprep.subr.bf16.mxu0 0
      %1500 = vmatpush1.bf16.msra.mxu0 0
      %1501 = vmatprep.subr.bf16.mxu0 0
      %1502 = vmatpush1.bf16.msra.mxu0 0
      %1503 = vmatprep.subr.bf16.mxu0 0
      %1504 = vmatpush1.bf16.msra.mxu0 0
      %1505 = vmatprep.subr.bf16.mxu0 0
      %1506 = vmatpush1.bf16.msra.mxu0 0
      %1507 = vmatprep.subr.bf16.mxu0 0
      %1508 = vmatpush1.bf16.msra.mxu0 0
      %1509 = vmatprep.subr.bf16.mxu0 0
      %1510 = vmatpush1.bf16.msra.mxu0 0
      %1511 = vmatprep.subr.bf16.mxu0 0
      %1512 = vmatpush1.bf16.msra.mxu0 0
      %1513 = vmatprep.subr.bf16.mxu0 0
      %1514 = vmatpush1.bf16.msra.mxu0 0
      %1515 = vmatprep.subr.bf16.mxu0 0
      %1516 = vmatpush1.bf16.msra.mxu0 0
      %1517 = vmatprep.mubr.bf16.mxu0 0
      %1518 = vmatmul.mubr.bf16.gmra.mrb[0].mxu0 %v1471
      %v1519 = vpop.f32.mrb[0].mxu0
      %v1520 = vadd.f32 0.0, %v1519
      %v1521 = vpop.f32.mrb[0].mxu0
      %v1522 = vpop.f32.mrb[0].mxu0
      %v1523 = vadd.f32 0.0, %v1522
      %v1524 = vpop.f32.mrb[0].mxu0
      %1525 = vmatprep.mubr.bf16.mxu0 0
      %1526 = vmatmul.mubr.bf16.gmra.mrb[0].mxu0 %v1474
      %v1527 = vpop.f32.mrb[0].mxu0
      %v1528 = vadd.f32 0.0, %v1527
      %v1529 = vpop.f32.mrb[0].mxu0
      %v1530 = vpop.f32.mrb[0].mxu0
      %v1531 = vadd.f32 0.0, %v1530
      %v1532 = vpop.f32.mrb[0].mxu0
      %1533 = vmatprep.mubr.bf16.mxu0 0
      %1534 = vmatmul.mubr.bf16.gmra.mrb[0].mxu0 %v1477
      %v1535 = vpop.f32.mrb[0].mxu0
      %v1536 = vadd.f32 0.0, %v1535
      %v1537 = vpop.f32.mrb[0].mxu0
      %v1538 = vpop.f32.mrb[0].mxu0
      %v1539 = vadd.f32 0.0, %v1538
      %v1540 = vpop.f32.mrb[0].mxu0
      %1541 = vmatprep.mubr.bf16.mxu0 0
      %1542 = vmatmul.mubr.bf16.gmra.mrb[0].mxu0 %v1480
      %v1543 = vpop.f32.mrb[0].mxu0
      %v1544 = vadd.f32 0.0, %v1543
      %v1545 = vpop.f32.mrb[0].mxu0
      %v1546 = vpop.f32.mrb[0].mxu0
      %v1547 = vadd.f32 0.0, %v1546
      %v1548 = vpop.f32.mrb[0].mxu0
      %1549 = vdwg.mxu0
      %v1550 = vadd.f32 %v1182, %v1520
      %v1551 = vadd.f32 %v1185, %v1523
      %v1552 = vadd.f32 %v1190, %v1528
      %v1553 = vadd.f32 %v1193, %v1531
      %v1554 = vadd.f32 %v1198, %v1536
      %v1555 = vadd.f32 %v1201, %v1539
      %v1556 = vadd.f32 %v1206, %v1544
      %v1557 = vadd.f32 %v1209, %v1547
      %v1558 = vld [vmem:[%s239] sm:$0xf]
      %v1559 = vld [vmem:[%s239 + $0x4] sm:$0xf]
      %v1560 = vld [vmem:[%s239 + $0x8] sm:$0xf]
      %v1561 = vld [vmem:[%s239 + $0xc] sm:$0xf]
      %v1562 = vld [vmem:[%s239 + $0x10] sm:$0xf]
      %v1563 = vld [vmem:[%s239 + $0x14] sm:$0xf]
      %v1564 = vld [vmem:[%s239 + $0x18] sm:$0xf]
      %v1565 = vld [vmem:[%s239 + $0x1c] sm:$0xf]
      %v1566 = vunpack.c.l.bf16 %v1558
      %v1567 = vunpack.c.l.bf16 %v1559
      %v1568 = vunpack.c.l.bf16 %v1560
      %v1569 = vunpack.c.l.bf16 %v1561
      %v1570 = vunpack.c.l.bf16 %v1562
      %v1571 = vunpack.c.l.bf16 %v1563
      %v1572 = vunpack.c.l.bf16 %v1564
      %v1573 = vunpack.c.l.bf16 %v1565
      %v1574 = vadd.f32 %v1550, %v1566
      %v1575 = vadd.f32 %v1551, %v1567
      %v1576 = vadd.f32 %v1552, %v1568
      %v1577 = vadd.f32 %v1553, %v1569
      %v1578 = vadd.f32 %v1554, %v1570
      %v1579 = vadd.f32 %v1555, %v1571
      %v1580 = vadd.f32 %v1556, %v1572
      %v1581 = vadd.f32 %v1557, %v1573
      %1582 = vst.msk [vmem:[%s244] sm:$0xff] %vm719, %v1574
      %1583 = vst.msk [vmem:[%s244 + $0x8] sm:$0xff] %vm719, %v1575
      %1584 = vst.msk [vmem:[%s244 + $0x10] sm:$0xff] %vm719, %v1576
      %1585 = vst.msk [vmem:[%s244 + $0x18] sm:$0xff] %vm719, %v1577
      %1586 = vst.msk [vmem:[%s244 + $0x20] sm:$0xff] %vm719, %v1578
      %1587 = vst.msk [vmem:[%s244 + $0x28] sm:$0xff] %vm719, %v1579
      %1588 = vst.msk [vmem:[%s244 + $0x30] sm:$0xff] %vm719, %v1580
      %1589 = vst.msk [vmem:[%s244 + $0x38] sm:$0xff] %vm719, %v1581
      %p1590 = scmp.lt.s32.totalorder %s16, 1
      %s1591 = scalar_select %p1590, %s16, 1
      %s1592 = smul.addr %s1591, 8
      %s1593 = smul.addr %s1592, 8
      %s1594 = scalar_lea.vmem %s5, %s1593
      // Predicated region
      $region41: #{preact_block_forward.5} parent=39 // pred_check
        %p1595 = pneg %p149
      $region42: #{preact_block_forward.5} parent=39 // pred_check_branch
        %1597 = sbr.rel (%p1595) target = $region44
      $region43: #{preact_block_forward.5} parent=39 // pred_region
        _
      $region44: #{preact_block_forward.5} parent=39 // pred_fallthru
        _
    $region40: #{preact_block_forward.5} parent=5 // pred_fallthru
      _
    %p1598 = scmp.le.s32.totalorder 2, %s11
    // Predicated region
    $region45: #{preact_block_forward.5} parent=5 // pred_check
      %p1599 = pneg %p1598
    $region46: #{preact_block_forward.5} parent=5 // pred_check_branch
      %1601 = sbr.rel (%p1599) target = $region48
    $region47: #{preact_block_forward.5} parent=5 // pred_region
      %s1602 = ssub.s32 %s11, 2
      // Predicated region
      $region49: #{preact_block_forward.5} parent=47 // pred_check
        %p1603 = pneg %p155
      $region50: #{preact_block_forward.5} parent=47 // pred_check_branch
        %1605 = sbr.rel (%p1603) target = $region52
      $region51: #{preact_block_forward.5} parent=47 // pred_region
        %p1606 = scmp.lt.s32.totalorder %s17, 1
        %s1607 = scalar_select %p1606, %s17, 1
        %s1608 = smul.addr %s1607, 8
        %s1609 = smul.addr %s1608, 8
        %s1610 = scalar_lea.vmem %s5, %s1609
      $region52: #{preact_block_forward.5} parent=47 // pred_fallthru
        _
    $region48: #{preact_block_forward.5} parent=5 // pred_fallthru
      _
  $region6: #{preact_block_forward.5} parent=0 // loop_footer
    %s15 = sadd.s32 1, %s11
  $region7: #{preact_block_forward.5} parent=0 // loop_footer_branch
    %10 = sbr.rel target = $region3
  $region8: #{preact_block_forward.5} parent=0 // loop_exit
    _

</llo_original>
